<compile_context>
chip_gen: v7x
topology: tpu7x:2x2x1
jax: 0.10.0
libtpu: 0.0.40
codegen_flags: <defaults>
</compile_context>

<pallas_src>
import functools

import jax
import jax.numpy as jnp
from jax.experimental import pallas as pl
from jax.experimental.pallas import tpu as pltpu


def _decoder_kernel(
    n_heads, bb, T, S, E, head_batched,
    # tensors (one batch-block per grid step, flattened to 2-D, bf16)
    x_ref, ek_ref, ev_ref,
    # weights (bf16)
    w_qkv_s_ref, wo_s_ref, w_qkv_c_ref, wo_c_ref, w_up_ref, w_dn_ref,
    # packed small vectors (f32)
    b_up_ref, vec_ref,
    # output
    out_ref,
):
    H = n_heads
    D = E // H

    x_bf = x_ref[...]                        # (bb*T, E) bf16 (MXU operand)
    x = x_bf.astype(jnp.float32)             # f32 copy for residual / LN

    vecs = vec_ref[...]                      # (9, E) f32
    bo_s, g_a, b_a = vecs[0:1], vecs[1:2], vecs[2:3]
    bo_c, g_c, b_c = vecs[3:4], vecs[4:5], vecs[5:6]
    b_dn, g_f, b_f = vecs[6:7], vecs[7:8], vecs[8:9]
    b_up = b_up_ref[...]                     # (1, Hd) f32

    def layer_norm(v, gamma, beta):
        mu = jnp.mean(v, axis=-1, keepdims=True)
        c = v - mu
        var = jnp.mean(c * c, axis=-1, keepdims=True)
        return c * jax.lax.rsqrt(var + 1e-5) * gamma + beta

    # Causal additive bias built in-kernel (no HBM mask input / extra DMA).
    row = jax.lax.broadcasted_iota(jnp.int32, (T, T), 0)
    col = jax.lax.broadcasted_iota(jnp.int32, (T, T), 1)
    causal_bias = jnp.where(row >= col, 0.0, -1e30).astype(jnp.float32)

    def softmax_lastdim(s):
        # scores stay f32; approx reciprocal hits the EUP slot (error ~1e-3,
        # well below this kernel's bf16-matmul tolerance).
        s = s - jnp.max(s, axis=-1, keepdims=True)
        p = jnp.exp(s)
        return p * pl.reciprocal(jnp.sum(p, axis=-1, keepdims=True), approx=True)

    def multihead_attend(Q, K, V, Tq, Tk, bias):
        # Q: (bb*Tq, E) f32 (scale already folded into W_q), K/V: (bb*Tk, E) f32.
        if head_batched:
            q4 = Q.reshape(bb, Tq, H, D).astype(jnp.bfloat16)
            k4 = K.reshape(bb, Tk, H, D).astype(jnp.bfloat16)
            v4 = V.reshape(bb, Tk, H, D).astype(jnp.bfloat16)
            s = jnp.einsum('bqhd,bkhd->bhqk', q4, k4,
                           preferred_element_type=jnp.float32)    # (bb,H,Tq,Tk)
            if bias is not None:
                s = s + bias                                      # (Tq,Tk) bcast
            p = softmax_lastdim(s)
            o = jnp.einsum('bhqk,bkhd->bqhd', p.astype(jnp.bfloat16), v4,
                           preferred_element_type=jnp.float32)    # (bb,Tq,H,D)
            return o.reshape(bb * Tq, E)

        # Fallback: per-head loop with single-batch-dim einsums (known-safe).
        Qb = Q.reshape(bb, Tq, E).astype(jnp.bfloat16)
        Kb = K.reshape(bb, Tk, E).astype(jnp.bfloat16)
        Vb = V.reshape(bb, Tk, E).astype(jnp.bfloat16)
        heads = []
        for h in range(H):
            lo, hi = h * D, (h + 1) * D
            s = jnp.einsum('btd,bsd->bts', Qb[:, :, lo:hi], Kb[:, :, lo:hi],
                           preferred_element_type=jnp.float32)
            if bias is not None:
                s = s + bias
            p = softmax_lastdim(s)
            o = jnp.einsum('bts,bsd->btd', p.astype(jnp.bfloat16), Vb[:, :, lo:hi],
                           preferred_element_type=jnp.float32)
            heads.append(o.reshape(bb * Tq, D))
        return jnp.concatenate(heads, axis=-1)

    # ---- 1) causal self-attention + residual + LN  (fused QKV matmul) ----
    qkv = jnp.dot(x_bf, w_qkv_s_ref[...],
                  preferred_element_type=jnp.float32)             # (bb*T, 3E)
    Q, K, V = qkv[:, 0:E], qkv[:, E:2 * E], qkv[:, 2 * E:3 * E]
    attn = multihead_attend(Q, K, V, T, T, causal_bias)
    attn = jnp.dot(attn.astype(jnp.bfloat16), wo_s_ref[...],
                   preferred_element_type=jnp.float32) + bo_s
    h1 = layer_norm(x + attn, g_a, b_a)

    # ---- 2) cross-attention (q from decoder, k/v from encoder) ----
    h1_bf = h1.astype(jnp.bfloat16)
    Qc = jnp.dot(h1_bf, w_qkv_c_ref[0], preferred_element_type=jnp.float32)
    Kc = jnp.dot(ek_ref[...], w_qkv_c_ref[1], preferred_element_type=jnp.float32)
    Vc = jnp.dot(ev_ref[...], w_qkv_c_ref[2], preferred_element_type=jnp.float32)
    cattn = multihead_attend(Qc, Kc, Vc, T, S, None)
    cattn = jnp.dot(cattn.astype(jnp.bfloat16), wo_c_ref[...],
                    preferred_element_type=jnp.float32) + bo_c
    h2 = layer_norm(h1 + cattn, g_c, b_c)

    # ---- 3) FFN + residual + LN ----
    up = jnp.maximum(
        jnp.dot(h2.astype(jnp.bfloat16), w_up_ref[...],
                preferred_element_type=jnp.float32) + b_up, 0.0)
    dn = jnp.dot(up.astype(jnp.bfloat16), w_dn_ref[...],
                 preferred_element_type=jnp.float32) + b_dn
    h3 = layer_norm(h2 + dn, g_f, b_f)

    out_ref[...] = h3.astype(out_ref.dtype)


PARAM_ORDER = ["w_qkv_s", "wo_s", "w_qkv_c", "wo_c", "w_up", "w_dn", "b_up", "vecs"]


def make_params(key, n_heads, embedding_size, ffn_hidden_size=None):
    """Synthetic parameters matching the PyTorch module shapes, pre-packed for
    the kernel: fused self-attn QKV (E,3E), stacked cross-attn (3,E,E), one
    (9,E) array with out-proj biases / LN gammas / LN betas / FFN down bias.
    1/sqrt(head_size) is folded into the Q weights.  MXU weights are bf16."""
    E = embedding_size
    D = E // n_heads
    Hd = ffn_hidden_size or 4 * E
    scale = 1.0 / (D ** 0.5)
    keys = jax.random.split(key, 14)
    std = 0.02

    def lin(k, shape):
        return (std * jax.random.normal(k, shape)).astype(jnp.float32)

    wq_s, wk_s, wv_s = lin(keys[0], (E, E)), lin(keys[1], (E, E)), lin(keys[2], (E, E))
    wo_s = lin(keys[3], (E, E))
    wq_c, wk_c, wv_c = lin(keys[4], (E, E)), lin(keys[5], (E, E)), lin(keys[6], (E, E))
    wo_c = lin(keys[7], (E, E))
    w_up, w_dn = lin(keys[8], (E, Hd)), lin(keys[9], (Hd, E))
    bo_s, bo_c = lin(keys[10], (E,)), lin(keys[11], (E,))
    b_up, b_dn = lin(keys[12], (Hd,)), lin(keys[13], (E,))
    ones = jnp.ones((E,), jnp.float32)
    zeros = jnp.zeros((E,), jnp.float32)

    vecs = jnp.stack([bo_s, ones, zeros,    # self out-proj bias, LN_a gamma/beta
                      bo_c, ones, zeros,    # cross out-proj bias, LN_c gamma/beta
                      b_dn, ones, zeros],   # FFN down bias,      LN_f gamma/beta
                     axis=0)                # (9, E) f32

    return dict(
        w_qkv_s=jnp.concatenate([wq_s * scale, wk_s, wv_s], axis=1).astype(jnp.bfloat16),
        wo_s=wo_s.astype(jnp.bfloat16),
        w_qkv_c=jnp.stack([wq_c * scale, wk_c, wv_c], axis=0).astype(jnp.bfloat16),
        wo_c=wo_c.astype(jnp.bfloat16),
        w_up=w_up.astype(jnp.bfloat16),
        w_dn=w_dn.astype(jnp.bfloat16),
        b_up=b_up.reshape(1, Hd),
        vecs=vecs,
    )


def _pick_batch_block(B, T):
    # Prefer >= 2 grid steps (pipelining + both v7x TensorCores) while keeping
    # the matmul M = bb*T >= 256 (MXU width on v6e/v7x) whenever B*T allows it.
    for bb in range(1, B + 1):
        if B % bb:
            continue
        if (B // bb) >= 2 and bb * T >= 256:
            return bb
    if B >= 2 and B % 2 == 0:
        return B // 2          # at least 2 steps even when M is tiny (toy shapes)
    return B


def _pick_vmem_limit():
    # ~96 MiB on 128-MiB-VMEM parts (v5e/v6e), ~48 MiB on 64-MiB parts (v7x).
    try:
        cap = int(pltpu.get_tpu_info().vmem_capacity_bytes)
    except Exception:
        cap = 64 * 1024 * 1024
    if cap >= 100 * 1024 * 1024:
        return 96 * 1024 * 1024
    return 48 * 1024 * 1024


def transformer_cross_decoder(x, encoder_k, encoder_v, params, n_heads,
                              batch_block=None):
    B, T, E = x.shape
    S = encoder_k.shape[1]
    assert E % n_heads == 0
    bb = batch_block or _pick_batch_block(B, T)
    assert B % bb == 0
    nb = B // bb

    # Flatten batch into the matmul M dim; ship activations as bf16 (halves DMA).
    x2 = x.reshape(B * T, E).astype(jnp.bfloat16)
    ek2 = encoder_k.reshape(B * S, E).astype(jnp.bfloat16)
    ev2 = encoder_v.reshape(B * S, E).astype(jnp.bfloat16)

    param_arrays = [params[name] for name in PARAM_ORDER]
    vmem_limit = _pick_vmem_limit()

    def build_call(head_batched, single_buffer_weights):
        def weight_spec(shape):
            ndim = len(shape)
            index_map = lambda b, _n=ndim: (0,) * _n
            if single_buffer_weights:
                # Weights never change block index -> the default second buffer
                # is pure VMEM waste; single-buffer them.
                return pl.BlockSpec(shape, index_map, pipeline_mode=pl.Buffered(1))
            return pl.BlockSpec(shape, index_map)

        in_specs = (
            [pl.BlockSpec((bb * T, E), lambda b: (b, 0)),
             pl.BlockSpec((bb * S, E), lambda b: (b, 0)),
             pl.BlockSpec((bb * S, E), lambda b: (b, 0))]
            + [weight_spec(p.shape) for p in param_arrays]
        )
        kernel = functools.partial(_decoder_kernel, n_heads, bb, T, S, E, head_batched)
        return pl.pallas_call(
            kernel,
            out_shape=jax.ShapeDtypeStruct((B * T, E), jnp.float32),
            grid_spec=pltpu.PrefetchScalarGridSpec(
                num_scalar_prefetch=0,
                grid=(nb,),
                in_specs=in_specs,
                out_specs=pl.BlockSpec((bb * T, E), lambda b: (b, 0)),
            ),
            compiler_params=pltpu.CompilerParams(
                dimension_semantics=("parallel",),
                vmem_limit_bytes=vmem_limit,
            ),
        )

    # Try the most optimized configuration first; fall back to known-safe
    # lowerings if the installed Mosaic rejects head-batched einsums or
    # single-buffered specs.
    last_err = None
    for head_batched, single_buf in ((True, True), (True, False),
                                     (False, True), (False, False)):
        try:
            out = build_call(head_batched, single_buf)(x2, ek2, ev2, *param_arrays)
            out = jax.block_until_ready(out)
            return out.reshape(B, T, E)
        except Exception as e:  # lowering / compile fallback
            last_err = e
    raise last_err


def _reference(x, encoder_k, encoder_v, params, n_heads):
    """Pure-JAX f32 reference consuming the same packed (bf16-rounded) params."""
    B, T, E = x.shape
    S = encoder_k.shape[1]
    H = n_heads
    D = E // H
    f32 = jnp.float32
    xb = x.astype(jnp.bfloat16).astype(f32)
    ekb = encoder_k.astype(jnp.bfloat16).astype(f32)
    evb = encoder_v.astype(jnp.bfloat16).astype(f32)
    w_qkv_s = params["w_qkv_s"].astype(f32)
    wo_s = params["wo_s"].astype(f32)
    w_qkv_c = params["w_qkv_c"].astype(f32)
    wo_c = params["wo_c"].astype(f32)
    w_up = params["w_up"].astype(f32)
    w_dn = params["w_dn"].astype(f32)
    b_up = params["b_up"].reshape(-1)
    vecs = params["vecs"]
    bo_s, g_a, b_a, bo_c, g_c, b_c, b_dn, g_f, b_f = [vecs[i] for i in range(9)]

    def ln(v, g, b):
        mu = jnp.mean(v, -1, keepdims=True)
        var = jnp.mean((v - mu) ** 2, -1, keepdims=True)
        return (v - mu) * jax.lax.rsqrt(var + 1e-5) * g + b

    def mha(q, k, v, causal):
        Tq, Tk = q.shape[1], k.shape[1]
        qh = q.reshape(B, Tq, H, D)
        kh = k.reshape(B, Tk, H, D)
        vh = v.reshape(B, Tk, H, D)
        s = jnp.einsum("bqhd,bkhd->bhqk", qh, kh)
        if causal:
            mask = jnp.tril(jnp.ones((Tq, Tk)))
            s = jnp.where(mask == 1, s, -1e30)
        p = jax.nn.softmax(s, axis=-1)
        return jnp.einsum("bhqk,bkhd->bqhd", p, vh).reshape(B, Tq, E)

    qkv = xb @ w_qkv_s
    attn = mha(qkv[..., :E], qkv[..., E:2 * E], qkv[..., 2 * E:], True) @ wo_s + bo_s
    h1 = ln(xb + attn, g_a, b_a)
    qc, kc, vc = h1 @ w_qkv_c[0], ekb @ w_qkv_c[1], evb @ w_qkv_c[2]
    cattn = mha(qc, kc, vc, False) @ wo_c + bo_c
    h2 = ln(h1 + cattn, g_c, b_c)
    up = jax.nn.relu(h2 @ w_up + b_up)
    h3 = ln(h2 + (up @ w_dn + b_dn), g_f, b_f)
    return h3


if __name__ == "__main__":
    # Small shapes implied by the module: batch=2, decoder tokens=8,
    # encoder tokens=8, embedding=32, heads=4 (head_size=8), ffn hidden=128.
    B, T, S, E, H = 2, 8, 8, 32, 4

    key = jax.random.PRNGKey(0)
    kx, kk, kv, kp = jax.random.split(key, 4)
    x = jax.random.normal(kx, (B, T, E), jnp.float32)
    encoder_k = jax.random.normal(kk, (B, S, E), jnp.float32)
    encoder_v = jax.random.normal(kv, (B, S, E), jnp.float32)

    params = make_params(kp, n_heads=H, embedding_size=E)

    out = transformer_cross_decoder(x, encoder_k, encoder_v, params, n_heads=H)
    out = jax.block_until_ready(out)
    assert out.shape == (B, T, E), out.shape
    assert bool(jnp.all(jnp.isfinite(out)))

    # Loose-tolerance sanity check vs. pure-JAX reference (bf16 MXU + approx
    # softmax reciprocal -> not bit-exact; structural bugs would be O(1) off).
    ref = _reference(x, encoder_k, encoder_v, params, n_heads=H)
    assert float(jnp.max(jnp.abs(out - ref))) < 0.2

    print("KERNEL_OK")
</pallas_src>

<mosaic_0001>
module attributes {stable_mosaic.version = 11 : i64} {
  func.func @_decoder_kernel(%arg0: i32, %arg1: memref<8x32xbf16, #tpu.memory_space<vmem>>, %arg2: memref<8x32xbf16, #tpu.memory_space<vmem>>, %arg3: memref<8x32xbf16, #tpu.memory_space<vmem>>, %arg4: memref<32x96xbf16, #tpu.memory_space<vmem>>, %arg5: memref<32x32xbf16, #tpu.memory_space<vmem>>, %arg6: memref<3x32x32xbf16, #tpu.memory_space<vmem>>, %arg7: memref<32x32xbf16, #tpu.memory_space<vmem>>, %arg8: memref<32x128xbf16, #tpu.memory_space<vmem>>, %arg9: memref<128x32xbf16, #tpu.memory_space<vmem>>, %arg10: memref<1x128xf32, #tpu.memory_space<vmem>>, %arg11: memref<9x32xf32, #tpu.memory_space<vmem>>, %arg12: memref<8x32xf32, #tpu.memory_space<vmem>>) attributes {dimension_semantics = [#tpu.dimension_semantics<parallel>], iteration_bounds = array<i64: 2>, scalar_prefetch = 0 : i64, scratch_operands = 0 : i64, tpu.core_type = #tpu.core_type<tc>, window_params = [{transform_indices = @transform_0, window_bounds = array<i64: 8, 32>}, {transform_indices = @transform_1, window_bounds = array<i64: 8, 32>}, {transform_indices = @transform_2, window_bounds = array<i64: 8, 32>}, {pipeline_mode = #tpu.pipeline_mode<synchronous>, transform_indices = @transform_3, window_bounds = array<i64: 32, 96>}, {pipeline_mode = #tpu.pipeline_mode<synchronous>, transform_indices = @transform_4, window_bounds = array<i64: 32, 32>}, {pipeline_mode = #tpu.pipeline_mode<synchronous>, transform_indices = @transform_5, window_bounds = array<i64: 3, 32, 32>}, {pipeline_mode = #tpu.pipeline_mode<synchronous>, transform_indices = @transform_6, window_bounds = array<i64: 32, 32>}, {pipeline_mode = #tpu.pipeline_mode<synchronous>, transform_indices = @transform_7, window_bounds = array<i64: 32, 128>}, {pipeline_mode = #tpu.pipeline_mode<synchronous>, transform_indices = @transform_8, window_bounds = array<i64: 128, 32>}, {pipeline_mode = #tpu.pipeline_mode<synchronous>, transform_indices = @transform_9, window_bounds = array<i64: 1, 128>}, {pipeline_mode = #tpu.pipeline_mode<synchronous>, transform_indices = @transform_10, window_bounds = array<i64: 9, 32>}, {transform_indices = @transform_11, window_bounds = array<i64: 8, 32>}]} {
    %c0 = arith.constant 0 : index
    %c0_0 = arith.constant 0 : index
    %0 = vector.load %arg1[%c0, %c0_0] : memref<8x32xbf16, #tpu.memory_space<vmem>>, vector<8x32xbf16>
    %1 = arith.extf %0 : vector<8x32xbf16> to vector<8x32xf32>
    %c0_1 = arith.constant 0 : index
    %c0_2 = arith.constant 0 : index
    %2 = vector.load %arg11[%c0_1, %c0_2] : memref<9x32xf32, #tpu.memory_space<vmem>>, vector<9x32xf32>
    %3 = vector.extract_strided_slice %2 {offsets = [0, 0], sizes = [1, 32], strides = [1, 1]} : vector<9x32xf32> to vector<1x32xf32>
    %4 = vector.extract_strided_slice %2 {offsets = [1, 0], sizes = [1, 32], strides = [1, 1]} : vector<9x32xf32> to vector<1x32xf32>
    %5 = vector.extract_strided_slice %2 {offsets = [2, 0], sizes = [1, 32], strides = [1, 1]} : vector<9x32xf32> to vector<1x32xf32>
    %6 = vector.extract_strided_slice %2 {offsets = [3, 0], sizes = [1, 32], strides = [1, 1]} : vector<9x32xf32> to vector<1x32xf32>
    %7 = vector.extract_strided_slice %2 {offsets = [4, 0], sizes = [1, 32], strides = [1, 1]} : vector<9x32xf32> to vector<1x32xf32>
    %8 = vector.extract_strided_slice %2 {offsets = [5, 0], sizes = [1, 32], strides = [1, 1]} : vector<9x32xf32> to vector<1x32xf32>
    %9 = vector.extract_strided_slice %2 {offsets = [6, 0], sizes = [1, 32], strides = [1, 1]} : vector<9x32xf32> to vector<1x32xf32>
    %10 = vector.extract_strided_slice %2 {offsets = [7, 0], sizes = [1, 32], strides = [1, 1]} : vector<9x32xf32> to vector<1x32xf32>
    %11 = vector.extract_strided_slice %2 {offsets = [8, 0], sizes = [1, 32], strides = [1, 1]} : vector<9x32xf32> to vector<1x32xf32>
    %c0_3 = arith.constant 0 : index
    %c0_4 = arith.constant 0 : index
    %12 = vector.load %arg10[%c0_3, %c0_4] : memref<1x128xf32, #tpu.memory_space<vmem>>, vector<1x128xf32>
    %13 = tpu.iota {dimensions = array<i32: 0>} : vector<8x8xi32>
    %14 = tpu.iota {dimensions = array<i32: 1>} : vector<8x8xi32>
    %15 = arith.cmpi sge, %13, %14 : vector<8x8xi32>
    %cst = arith.constant 0.000000e+00 : f32
    %cst_5 = arith.constant -1.000000e+30 : f32
    %16 = vector.broadcast %cst : f32 to vector<8x8xf32>
    %17 = vector.broadcast %cst_5 : f32 to vector<8x8xf32>
    %18 = arith.select %15, %16, %17 : vector<8x8xi1>, vector<8x8xf32>
    %c0_6 = arith.constant 0 : index
    %c0_7 = arith.constant 0 : index
    %19 = vector.load %arg4[%c0_6, %c0_7] : memref<32x96xbf16, #tpu.memory_space<vmem>>, vector<32x96xbf16>
    %cst_8 = arith.constant dense<0.000000e+00> : vector<8x96xf32>
    %20 = tpu.matmul %0, %19, %cst_8 {dimension_numbers = #tpu.dot_dimension_numbers<[1], [0], [0], [1], [0, 0, 1, 1], [], []>} : vector<8x32xbf16>, vector<32x96xbf16>, vector<8x96xf32> -> vector<8x96xf32>
    %21 = vector.extract_strided_slice %20 {offsets = [0, 0], sizes = [8, 32], strides = [1, 1]} : vector<8x96xf32> to vector<8x32xf32>
    %22 = vector.extract_strided_slice %20 {offsets = [0, 32], sizes = [8, 32], strides = [1, 1]} : vector<8x96xf32> to vector<8x32xf32>
    %23 = vector.extract_strided_slice %20 {offsets = [0, 64], sizes = [8, 32], strides = [1, 1]} : vector<8x96xf32> to vector<8x32xf32>
    %24 = vector.shape_cast %21 : vector<8x32xf32> to vector<1x8x32xf32>
    %25 = arith.truncf %24 : vector<1x8x32xf32> to vector<1x8x32xbf16>
    %26 = vector.shape_cast %22 : vector<8x32xf32> to vector<1x8x32xf32>
    %27 = arith.truncf %26 : vector<1x8x32xf32> to vector<1x8x32xbf16>
    %28 = vector.shape_cast %23 : vector<8x32xf32> to vector<1x8x32xf32>
    %29 = arith.truncf %28 : vector<1x8x32xf32> to vector<1x8x32xbf16>
    %30 = vector.extract_strided_slice %25 {offsets = [0, 0, 0], sizes = [1, 8, 8], strides = [1, 1, 1]} : vector<1x8x32xbf16> to vector<1x8x8xbf16>
    %31 = vector.extract_strided_slice %27 {offsets = [0, 0, 0], sizes = [1, 8, 8], strides = [1, 1, 1]} : vector<1x8x32xbf16> to vector<1x8x8xbf16>
    "tpu.trace_start"() <{level = 10 : i32, message = "btd,bsd->bts"}> : () -> ()
    %cst_9 = arith.constant dense<0.000000e+00> : vector<1x8x8xf32>
    %32 = tpu.matmul %30, %31, %cst_9 {dimension_numbers = #tpu.dot_dimension_numbers<[2], [2], [1], [1], [0, 0, 0, 1, 1, 1], [0], [0]>} : vector<1x8x8xbf16>, vector<1x8x8xbf16>, vector<1x8x8xf32> -> vector<1x8x8xf32>
    "tpu.trace_stop"() : () -> ()
    %33 = vector.shape_cast %18 : vector<8x8xf32> to vector<1x8x8xf32>
    %34 = arith.addf %32, %33 : vector<1x8x8xf32>
    %cst_10 = arith.constant dense<0xFF800000> : vector<1x8xf32>
    %35 = vector.multi_reduction <maximumf>, %34, %cst_10 [2] : vector<1x8x8xf32> to vector<1x8xf32>
    %36 = vector.shape_cast %35 : vector<1x8xf32> to vector<1x8x1xf32>
    %37 = vector.broadcast %36 : vector<1x8x1xf32> to vector<1x8x8xf32>
    %38 = arith.subf %34, %37 : vector<1x8x8xf32>
    %39 = math.exp %38 : vector<1x8x8xf32>
    %cst_11 = arith.constant dense<0.000000e+00> : vector<1x8xf32>
    %40 = vector.multi_reduction <add>, %39, %cst_11 [2] : vector<1x8x8xf32> to vector<1x8xf32>
    %41 = vector.shape_cast %40 : vector<1x8xf32> to vector<1x8x1xf32>
    %42 = tpu.reciprocal %41 {approx = true} : vector<1x8x1xf32> -> vector<1x8x1xf32>
    %43 = vector.broadcast %42 : vector<1x8x1xf32> to vector<1x8x8xf32>
    %44 = arith.mulf %39, %43 : vector<1x8x8xf32>
    %45 = arith.truncf %44 : vector<1x8x8xf32> to vector<1x8x8xbf16>
    %46 = vector.extract_strided_slice %29 {offsets = [0, 0, 0], sizes = [1, 8, 8], strides = [1, 1, 1]} : vector<1x8x32xbf16> to vector<1x8x8xbf16>
    "tpu.trace_start"() <{level = 10 : i32, message = "bts,bsd->btd"}> : () -> ()
    %cst_12 = arith.constant dense<0.000000e+00> : vector<1x8x8xf32>
    %47 = tpu.matmul %45, %46, %cst_12 {dimension_numbers = #tpu.dot_dimension_numbers<[2], [1], [1], [2], [0, 0, 0, 1, 1, 2], [0], [0]>} : vector<1x8x8xbf16>, vector<1x8x8xbf16>, vector<1x8x8xf32> -> vector<1x8x8xf32>
    "tpu.trace_stop"() : () -> ()
    %48 = vector.shape_cast %47 : vector<1x8x8xf32> to vector<8x8xf32>
    %49 = vector.extract_strided_slice %25 {offsets = [0, 0, 8], sizes = [1, 8, 8], strides = [1, 1, 1]} : vector<1x8x32xbf16> to vector<1x8x8xbf16>
    %50 = vector.extract_strided_slice %27 {offsets = [0, 0, 8], sizes = [1, 8, 8], strides = [1, 1, 1]} : vector<1x8x32xbf16> to vector<1x8x8xbf16>
    "tpu.trace_start"() <{level = 10 : i32, message = "btd,bsd->bts"}> : () -> ()
    %cst_13 = arith.constant dense<0.000000e+00> : vector<1x8x8xf32>
    %51 = tpu.matmul %49, %50, %cst_13 {dimension_numbers = #tpu.dot_dimension_numbers<[2], [2], [1], [1], [0, 0, 0, 1, 1, 1], [0], [0]>} : vector<1x8x8xbf16>, vector<1x8x8xbf16>, vector<1x8x8xf32> -> vector<1x8x8xf32>
    "tpu.trace_stop"() : () -> ()
    %52 = vector.shape_cast %18 : vector<8x8xf32> to vector<1x8x8xf32>
    %53 = arith.addf %51, %52 : vector<1x8x8xf32>
    %cst_14 = arith.constant dense<0xFF800000> : vector<1x8xf32>
    %54 = vector.multi_reduction <maximumf>, %53, %cst_14 [2] : vector<1x8x8xf32> to vector<1x8xf32>
    %55 = vector.shape_cast %54 : vector<1x8xf32> to vector<1x8x1xf32>
    %56 = vector.broadcast %55 : vector<1x8x1xf32> to vector<1x8x8xf32>
    %57 = arith.subf %53, %56 : vector<1x8x8xf32>
    %58 = math.exp %57 : vector<1x8x8xf32>
    %cst_15 = arith.constant dense<0.000000e+00> : vector<1x8xf32>
    %59 = vector.multi_reduction <add>, %58, %cst_15 [2] : vector<1x8x8xf32> to vector<1x8xf32>
    %60 = vector.shape_cast %59 : vector<1x8xf32> to vector<1x8x1xf32>
    %61 = tpu.reciprocal %60 {approx = true} : vector<1x8x1xf32> -> vector<1x8x1xf32>
    %62 = vector.broadcast %61 : vector<1x8x1xf32> to vector<1x8x8xf32>
    %63 = arith.mulf %58, %62 : vector<1x8x8xf32>
    %64 = arith.truncf %63 : vector<1x8x8xf32> to vector<1x8x8xbf16>
    %65 = vector.extract_strided_slice %29 {offsets = [0, 0, 8], sizes = [1, 8, 8], strides = [1, 1, 1]} : vector<1x8x32xbf16> to vector<1x8x8xbf16>
    "tpu.trace_start"() <{level = 10 : i32, message = "bts,bsd->btd"}> : () -> ()
    %cst_16 = arith.constant dense<0.000000e+00> : vector<1x8x8xf32>
    %66 = tpu.matmul %64, %65, %cst_16 {dimension_numbers = #tpu.dot_dimension_numbers<[2], [1], [1], [2], [0, 0, 0, 1, 1, 2], [0], [0]>} : vector<1x8x8xbf16>, vector<1x8x8xbf16>, vector<1x8x8xf32> -> vector<1x8x8xf32>
    "tpu.trace_stop"() : () -> ()
    %67 = vector.shape_cast %66 : vector<1x8x8xf32> to vector<8x8xf32>
    %68 = vector.extract_strided_slice %25 {offsets = [0, 0, 16], sizes = [1, 8, 8], strides = [1, 1, 1]} : vector<1x8x32xbf16> to vector<1x8x8xbf16>
    %69 = vector.extract_strided_slice %27 {offsets = [0, 0, 16], sizes = [1, 8, 8], strides = [1, 1, 1]} : vector<1x8x32xbf16> to vector<1x8x8xbf16>
    "tpu.trace_start"() <{level = 10 : i32, message = "btd,bsd->bts"}> : () -> ()
    %cst_17 = arith.constant dense<0.000000e+00> : vector<1x8x8xf32>
    %70 = tpu.matmul %68, %69, %cst_17 {dimension_numbers = #tpu.dot_dimension_numbers<[2], [2], [1], [1], [0, 0, 0, 1, 1, 1], [0], [0]>} : vector<1x8x8xbf16>, vector<1x8x8xbf16>, vector<1x8x8xf32> -> vector<1x8x8xf32>
    "tpu.trace_stop"() : () -> ()
    %71 = vector.shape_cast %18 : vector<8x8xf32> to vector<1x8x8xf32>
    %72 = arith.addf %70, %71 : vector<1x8x8xf32>
    %cst_18 = arith.constant dense<0xFF800000> : vector<1x8xf32>
    %73 = vector.multi_reduction <maximumf>, %72, %cst_18 [2] : vector<1x8x8xf32> to vector<1x8xf32>
    %74 = vector.shape_cast %73 : vector<1x8xf32> to vector<1x8x1xf32>
    %75 = vector.broadcast %74 : vector<1x8x1xf32> to vector<1x8x8xf32>
    %76 = arith.subf %72, %75 : vector<1x8x8xf32>
    %77 = math.exp %76 : vector<1x8x8xf32>
    %cst_19 = arith.constant dense<0.000000e+00> : vector<1x8xf32>
    %78 = vector.multi_reduction <add>, %77, %cst_19 [2] : vector<1x8x8xf32> to vector<1x8xf32>
    %79 = vector.shape_cast %78 : vector<1x8xf32> to vector<1x8x1xf32>
    %80 = tpu.reciprocal %79 {approx = true} : vector<1x8x1xf32> -> vector<1x8x1xf32>
    %81 = vector.broadcast %80 : vector<1x8x1xf32> to vector<1x8x8xf32>
    %82 = arith.mulf %77, %81 : vector<1x8x8xf32>
    %83 = arith.truncf %82 : vector<1x8x8xf32> to vector<1x8x8xbf16>
    %84 = vector.extract_strided_slice %29 {offsets = [0, 0, 16], sizes = [1, 8, 8], strides = [1, 1, 1]} : vector<1x8x32xbf16> to vector<1x8x8xbf16>
    "tpu.trace_start"() <{level = 10 : i32, message = "bts,bsd->btd"}> : () -> ()
    %cst_20 = arith.constant dense<0.000000e+00> : vector<1x8x8xf32>
    %85 = tpu.matmul %83, %84, %cst_20 {dimension_numbers = #tpu.dot_dimension_numbers<[2], [1], [1], [2], [0, 0, 0, 1, 1, 2], [0], [0]>} : vector<1x8x8xbf16>, vector<1x8x8xbf16>, vector<1x8x8xf32> -> vector<1x8x8xf32>
    "tpu.trace_stop"() : () -> ()
    %86 = vector.shape_cast %85 : vector<1x8x8xf32> to vector<8x8xf32>
    %87 = vector.extract_strided_slice %25 {offsets = [0, 0, 24], sizes = [1, 8, 8], strides = [1, 1, 1]} : vector<1x8x32xbf16> to vector<1x8x8xbf16>
    %88 = vector.extract_strided_slice %27 {offsets = [0, 0, 24], sizes = [1, 8, 8], strides = [1, 1, 1]} : vector<1x8x32xbf16> to vector<1x8x8xbf16>
    "tpu.trace_start"() <{level = 10 : i32, message = "btd,bsd->bts"}> : () -> ()
    %cst_21 = arith.constant dense<0.000000e+00> : vector<1x8x8xf32>
    %89 = tpu.matmul %87, %88, %cst_21 {dimension_numbers = #tpu.dot_dimension_numbers<[2], [2], [1], [1], [0, 0, 0, 1, 1, 1], [0], [0]>} : vector<1x8x8xbf16>, vector<1x8x8xbf16>, vector<1x8x8xf32> -> vector<1x8x8xf32>
    "tpu.trace_stop"() : () -> ()
    %90 = vector.shape_cast %18 : vector<8x8xf32> to vector<1x8x8xf32>
    %91 = arith.addf %89, %90 : vector<1x8x8xf32>
    %cst_22 = arith.constant dense<0xFF800000> : vector<1x8xf32>
    %92 = vector.multi_reduction <maximumf>, %91, %cst_22 [2] : vector<1x8x8xf32> to vector<1x8xf32>
    %93 = vector.shape_cast %92 : vector<1x8xf32> to vector<1x8x1xf32>
    %94 = vector.broadcast %93 : vector<1x8x1xf32> to vector<1x8x8xf32>
    %95 = arith.subf %91, %94 : vector<1x8x8xf32>
    %96 = math.exp %95 : vector<1x8x8xf32>
    %cst_23 = arith.constant dense<0.000000e+00> : vector<1x8xf32>
    %97 = vector.multi_reduction <add>, %96, %cst_23 [2] : vector<1x8x8xf32> to vector<1x8xf32>
    %98 = vector.shape_cast %97 : vector<1x8xf32> to vector<1x8x1xf32>
    %99 = tpu.reciprocal %98 {approx = true} : vector<1x8x1xf32> -> vector<1x8x1xf32>
    %100 = vector.broadcast %99 : vector<1x8x1xf32> to vector<1x8x8xf32>
    %101 = arith.mulf %96, %100 : vector<1x8x8xf32>
    %102 = arith.truncf %101 : vector<1x8x8xf32> to vector<1x8x8xbf16>
    %103 = vector.extract_strided_slice %29 {offsets = [0, 0, 24], sizes = [1, 8, 8], strides = [1, 1, 1]} : vector<1x8x32xbf16> to vector<1x8x8xbf16>
    "tpu.trace_start"() <{level = 10 : i32, message = "bts,bsd->btd"}> : () -> ()
    %cst_24 = arith.constant dense<0.000000e+00> : vector<1x8x8xf32>
    %104 = tpu.matmul %102, %103, %cst_24 {dimension_numbers = #tpu.dot_dimension_numbers<[2], [1], [1], [2], [0, 0, 0, 1, 1, 2], [0], [0]>} : vector<1x8x8xbf16>, vector<1x8x8xbf16>, vector<1x8x8xf32> -> vector<1x8x8xf32>
    "tpu.trace_stop"() : () -> ()
    %105 = vector.shape_cast %104 : vector<1x8x8xf32> to vector<8x8xf32>
    %106 = tpu.concatenate %48, %67, %86, %105 in 1 : vector<8x8xf32>, vector<8x8xf32>, vector<8x8xf32>, vector<8x8xf32> -> vector<8x32xf32>
    %107 = arith.truncf %106 : vector<8x32xf32> to vector<8x32xbf16>
    %c0_25 = arith.constant 0 : index
    %c0_26 = arith.constant 0 : index
    %108 = vector.load %arg5[%c0_25, %c0_26] : memref<32x32xbf16, #tpu.memory_space<vmem>>, vector<32x32xbf16>
    %cst_27 = arith.constant dense<0.000000e+00> : vector<8x32xf32>
    %109 = tpu.matmul %107, %108, %cst_27 {dimension_numbers = #tpu.dot_dimension_numbers<[1], [0], [0], [1], [0, 0, 1, 1], [], []>} : vector<8x32xbf16>, vector<32x32xbf16>, vector<8x32xf32> -> vector<8x32xf32>
    %110 = vector.broadcast %3 : vector<1x32xf32> to vector<8x32xf32>
    %111 = arith.addf %109, %110 : vector<8x32xf32>
    %112 = arith.addf %1, %111 : vector<8x32xf32>
    %cst_28 = arith.constant dense<0.000000e+00> : vector<8xf32>
    %113 = vector.multi_reduction <add>, %112, %cst_28 [1] : vector<8x32xf32> to vector<8xf32>
    %114 = vector.shape_cast %113 : vector<8xf32> to vector<8x1xf32>
    %cst_29 = arith.constant 3.200000e+01 : f32
    %115 = vector.broadcast %cst_29 : f32 to vector<8x1xf32>
    %116 = arith.divf %114, %115 : vector<8x1xf32>
    %117 = vector.broadcast %116 : vector<8x1xf32> to vector<8x32xf32>
    %118 = arith.subf %112, %117 : vector<8x32xf32>
    %119 = arith.mulf %118, %118 : vector<8x32xf32>
    %cst_30 = arith.constant dense<0.000000e+00> : vector<8xf32>
    %120 = vector.multi_reduction <add>, %119, %cst_30 [1] : vector<8x32xf32> to vector<8xf32>
    %121 = vector.shape_cast %120 : vector<8xf32> to vector<8x1xf32>
    %cst_31 = arith.constant 3.200000e+01 : f32
    %122 = vector.broadcast %cst_31 : f32 to vector<8x1xf32>
    %123 = arith.divf %121, %122 : vector<8x1xf32>
    %cst_32 = arith.constant 9.99999974E-6 : f32
    %124 = vector.broadcast %cst_32 : f32 to vector<8x1xf32>
    %125 = arith.addf %123, %124 : vector<8x1xf32>
    %126 = math.rsqrt %125 : vector<8x1xf32>
    %127 = vector.broadcast %126 : vector<8x1xf32> to vector<8x32xf32>
    %128 = arith.mulf %118, %127 : vector<8x32xf32>
    %129 = vector.broadcast %4 : vector<1x32xf32> to vector<8x32xf32>
    %130 = arith.mulf %128, %129 : vector<8x32xf32>
    %131 = vector.broadcast %5 : vector<1x32xf32> to vector<8x32xf32>
    %132 = arith.addf %130, %131 : vector<8x32xf32>
    %133 = arith.truncf %132 : vector<8x32xf32> to vector<8x32xbf16>
    %c0_33 = arith.constant 0 : index
    %c0_34 = arith.constant 0 : index
    %c0_35 = arith.constant 0 : index
    %134 = vector.load %arg6[%c0_33, %c0_34, %c0_35] : memref<3x32x32xbf16, #tpu.memory_space<vmem>>, vector<1x32x32xbf16>
    %135 = vector.shape_cast %134 : vector<1x32x32xbf16> to vector<32x32xbf16>
    %cst_36 = arith.constant dense<0.000000e+00> : vector<8x32xf32>
    %136 = tpu.matmul %133, %135, %cst_36 {dimension_numbers = #tpu.dot_dimension_numbers<[1], [0], [0], [1], [0, 0, 1, 1], [], []>} : vector<8x32xbf16>, vector<32x32xbf16>, vector<8x32xf32> -> vector<8x32xf32>
    %c0_37 = arith.constant 0 : index
    %c0_38 = arith.constant 0 : index
    %137 = vector.load %arg2[%c0_37, %c0_38] : memref<8x32xbf16, #tpu.memory_space<vmem>>, vector<8x32xbf16>
    %c1 = arith.constant 1 : index
    %c0_39 = arith.constant 0 : index
    %c0_40 = arith.constant 0 : index
    %138 = vector.load %arg6[%c1, %c0_39, %c0_40] : memref<3x32x32xbf16, #tpu.memory_space<vmem>>, vector<1x32x32xbf16>
    %139 = vector.shape_cast %138 : vector<1x32x32xbf16> to vector<32x32xbf16>
    %cst_41 = arith.constant dense<0.000000e+00> : vector<8x32xf32>
    %140 = tpu.matmul %137, %139, %cst_41 {dimension_numbers = #tpu.dot_dimension_numbers<[1], [0], [0], [1], [0, 0, 1, 1], [], []>} : vector<8x32xbf16>, vector<32x32xbf16>, vector<8x32xf32> -> vector<8x32xf32>
    %c0_42 = arith.constant 0 : index
    %c0_43 = arith.constant 0 : index
    %141 = vector.load %arg3[%c0_42, %c0_43] : memref<8x32xbf16, #tpu.memory_space<vmem>>, vector<8x32xbf16>
    %c2 = arith.constant 2 : index
    %c0_44 = arith.constant 0 : index
    %c0_45 = arith.constant 0 : index
    %142 = vector.load %arg6[%c2, %c0_44, %c0_45] : memref<3x32x32xbf16, #tpu.memory_space<vmem>>, vector<1x32x32xbf16>
    %143 = vector.shape_cast %142 : vector<1x32x32xbf16> to vector<32x32xbf16>
    %cst_46 = arith.constant dense<0.000000e+00> : vector<8x32xf32>
    %144 = tpu.matmul %141, %143, %cst_46 {dimension_numbers = #tpu.dot_dimension_numbers<[1], [0], [0], [1], [0, 0, 1, 1], [], []>} : vector<8x32xbf16>, vector<32x32xbf16>, vector<8x32xf32> -> vector<8x32xf32>
    %145 = vector.shape_cast %136 : vector<8x32xf32> to vector<1x8x32xf32>
    %146 = arith.truncf %145 : vector<1x8x32xf32> to vector<1x8x32xbf16>
    %147 = vector.shape_cast %140 : vector<8x32xf32> to vector<1x8x32xf32>
    %148 = arith.truncf %147 : vector<1x8x32xf32> to vector<1x8x32xbf16>
    %149 = vector.shape_cast %144 : vector<8x32xf32> to vector<1x8x32xf32>
    %150 = arith.truncf %149 : vector<1x8x32xf32> to vector<1x8x32xbf16>
    %151 = vector.extract_strided_slice %146 {offsets = [0, 0, 0], sizes = [1, 8, 8], strides = [1, 1, 1]} : vector<1x8x32xbf16> to vector<1x8x8xbf16>
    %152 = vector.extract_strided_slice %148 {offsets = [0, 0, 0], sizes = [1, 8, 8], strides = [1, 1, 1]} : vector<1x8x32xbf16> to vector<1x8x8xbf16>
    "tpu.trace_start"() <{level = 10 : i32, message = "btd,bsd->bts"}> : () -> ()
    %cst_47 = arith.constant dense<0.000000e+00> : vector<1x8x8xf32>
    %153 = tpu.matmul %151, %152, %cst_47 {dimension_numbers = #tpu.dot_dimension_numbers<[2], [2], [1], [1], [0, 0, 0, 1, 1, 1], [0], [0]>} : vector<1x8x8xbf16>, vector<1x8x8xbf16>, vector<1x8x8xf32> -> vector<1x8x8xf32>
    "tpu.trace_stop"() : () -> ()
    %cst_48 = arith.constant dense<0xFF800000> : vector<1x8xf32>
    %154 = vector.multi_reduction <maximumf>, %153, %cst_48 [2] : vector<1x8x8xf32> to vector<1x8xf32>
    %155 = vector.shape_cast %154 : vector<1x8xf32> to vector<1x8x1xf32>
    %156 = vector.broadcast %155 : vector<1x8x1xf32> to vector<1x8x8xf32>
    %157 = arith.subf %153, %156 : vector<1x8x8xf32>
    %158 = math.exp %157 : vector<1x8x8xf32>
    %cst_49 = arith.constant dense<0.000000e+00> : vector<1x8xf32>
    %159 = vector.multi_reduction <add>, %158, %cst_49 [2] : vector<1x8x8xf32> to vector<1x8xf32>
    %160 = vector.shape_cast %159 : vector<1x8xf32> to vector<1x8x1xf32>
    %161 = tpu.reciprocal %160 {approx = true} : vector<1x8x1xf32> -> vector<1x8x1xf32>
    %162 = vector.broadcast %161 : vector<1x8x1xf32> to vector<1x8x8xf32>
    %163 = arith.mulf %158, %162 : vector<1x8x8xf32>
    %164 = arith.truncf %163 : vector<1x8x8xf32> to vector<1x8x8xbf16>
    %165 = vector.extract_strided_slice %150 {offsets = [0, 0, 0], sizes = [1, 8, 8], strides = [1, 1, 1]} : vector<1x8x32xbf16> to vector<1x8x8xbf16>
    "tpu.trace_start"() <{level = 10 : i32, message = "bts,bsd->btd"}> : () -> ()
    %cst_50 = arith.constant dense<0.000000e+00> : vector<1x8x8xf32>
    %166 = tpu.matmul %164, %165, %cst_50 {dimension_numbers = #tpu.dot_dimension_numbers<[2], [1], [1], [2], [0, 0, 0, 1, 1, 2], [0], [0]>} : vector<1x8x8xbf16>, vector<1x8x8xbf16>, vector<1x8x8xf32> -> vector<1x8x8xf32>
    "tpu.trace_stop"() : () -> ()
    %167 = vector.shape_cast %166 : vector<1x8x8xf32> to vector<8x8xf32>
    %168 = vector.extract_strided_slice %146 {offsets = [0, 0, 8], sizes = [1, 8, 8], strides = [1, 1, 1]} : vector<1x8x32xbf16> to vector<1x8x8xbf16>
    %169 = vector.extract_strided_slice %148 {offsets = [0, 0, 8], sizes = [1, 8, 8], strides = [1, 1, 1]} : vector<1x8x32xbf16> to vector<1x8x8xbf16>
    "tpu.trace_start"() <{level = 10 : i32, message = "btd,bsd->bts"}> : () -> ()
    %cst_51 = arith.constant dense<0.000000e+00> : vector<1x8x8xf32>
    %170 = tpu.matmul %168, %169, %cst_51 {dimension_numbers = #tpu.dot_dimension_numbers<[2], [2], [1], [1], [0, 0, 0, 1, 1, 1], [0], [0]>} : vector<1x8x8xbf16>, vector<1x8x8xbf16>, vector<1x8x8xf32> -> vector<1x8x8xf32>
    "tpu.trace_stop"() : () -> ()
    %cst_52 = arith.constant dense<0xFF800000> : vector<1x8xf32>
    %171 = vector.multi_reduction <maximumf>, %170, %cst_52 [2] : vector<1x8x8xf32> to vector<1x8xf32>
    %172 = vector.shape_cast %171 : vector<1x8xf32> to vector<1x8x1xf32>
    %173 = vector.broadcast %172 : vector<1x8x1xf32> to vector<1x8x8xf32>
    %174 = arith.subf %170, %173 : vector<1x8x8xf32>
    %175 = math.exp %174 : vector<1x8x8xf32>
    %cst_53 = arith.constant dense<0.000000e+00> : vector<1x8xf32>
    %176 = vector.multi_reduction <add>, %175, %cst_53 [2] : vector<1x8x8xf32> to vector<1x8xf32>
    %177 = vector.shape_cast %176 : vector<1x8xf32> to vector<1x8x1xf32>
    %178 = tpu.reciprocal %177 {approx = true} : vector<1x8x1xf32> -> vector<1x8x1xf32>
    %179 = vector.broadcast %178 : vector<1x8x1xf32> to vector<1x8x8xf32>
    %180 = arith.mulf %175, %179 : vector<1x8x8xf32>
    %181 = arith.truncf %180 : vector<1x8x8xf32> to vector<1x8x8xbf16>
    %182 = vector.extract_strided_slice %150 {offsets = [0, 0, 8], sizes = [1, 8, 8], strides = [1, 1, 1]} : vector<1x8x32xbf16> to vector<1x8x8xbf16>
    "tpu.trace_start"() <{level = 10 : i32, message = "bts,bsd->btd"}> : () -> ()
    %cst_54 = arith.constant dense<0.000000e+00> : vector<1x8x8xf32>
    %183 = tpu.matmul %181, %182, %cst_54 {dimension_numbers = #tpu.dot_dimension_numbers<[2], [1], [1], [2], [0, 0, 0, 1, 1, 2], [0], [0]>} : vector<1x8x8xbf16>, vector<1x8x8xbf16>, vector<1x8x8xf32> -> vector<1x8x8xf32>
    "tpu.trace_stop"() : () -> ()
    %184 = vector.shape_cast %183 : vector<1x8x8xf32> to vector<8x8xf32>
    %185 = vector.extract_strided_slice %146 {offsets = [0, 0, 16], sizes = [1, 8, 8], strides = [1, 1, 1]} : vector<1x8x32xbf16> to vector<1x8x8xbf16>
    %186 = vector.extract_strided_slice %148 {offsets = [0, 0, 16], sizes = [1, 8, 8], strides = [1, 1, 1]} : vector<1x8x32xbf16> to vector<1x8x8xbf16>
    "tpu.trace_start"() <{level = 10 : i32, message = "btd,bsd->bts"}> : () -> ()
    %cst_55 = arith.constant dense<0.000000e+00> : vector<1x8x8xf32>
    %187 = tpu.matmul %185, %186, %cst_55 {dimension_numbers = #tpu.dot_dimension_numbers<[2], [2], [1], [1], [0, 0, 0, 1, 1, 1], [0], [0]>} : vector<1x8x8xbf16>, vector<1x8x8xbf16>, vector<1x8x8xf32> -> vector<1x8x8xf32>
    "tpu.trace_stop"() : () -> ()
    %cst_56 = arith.constant dense<0xFF800000> : vector<1x8xf32>
    %188 = vector.multi_reduction <maximumf>, %187, %cst_56 [2] : vector<1x8x8xf32> to vector<1x8xf32>
    %189 = vector.shape_cast %188 : vector<1x8xf32> to vector<1x8x1xf32>
    %190 = vector.broadcast %189 : vector<1x8x1xf32> to vector<1x8x8xf32>
    %191 = arith.subf %187, %190 : vector<1x8x8xf32>
    %192 = math.exp %191 : vector<1x8x8xf32>
    %cst_57 = arith.constant dense<0.000000e+00> : vector<1x8xf32>
    %193 = vector.multi_reduction <add>, %192, %cst_57 [2] : vector<1x8x8xf32> to vector<1x8xf32>
    %194 = vector.shape_cast %193 : vector<1x8xf32> to vector<1x8x1xf32>
    %195 = tpu.reciprocal %194 {approx = true} : vector<1x8x1xf32> -> vector<1x8x1xf32>
    %196 = vector.broadcast %195 : vector<1x8x1xf32> to vector<1x8x8xf32>
    %197 = arith.mulf %192, %196 : vector<1x8x8xf32>
    %198 = arith.truncf %197 : vector<1x8x8xf32> to vector<1x8x8xbf16>
    %199 = vector.extract_strided_slice %150 {offsets = [0, 0, 16], sizes = [1, 8, 8], strides = [1, 1, 1]} : vector<1x8x32xbf16> to vector<1x8x8xbf16>
    "tpu.trace_start"() <{level = 10 : i32, message = "bts,bsd->btd"}> : () -> ()
    %cst_58 = arith.constant dense<0.000000e+00> : vector<1x8x8xf32>
    %200 = tpu.matmul %198, %199, %cst_58 {dimension_numbers = #tpu.dot_dimension_numbers<[2], [1], [1], [2], [0, 0, 0, 1, 1, 2], [0], [0]>} : vector<1x8x8xbf16>, vector<1x8x8xbf16>, vector<1x8x8xf32> -> vector<1x8x8xf32>
    "tpu.trace_stop"() : () -> ()
    %201 = vector.shape_cast %200 : vector<1x8x8xf32> to vector<8x8xf32>
    %202 = vector.extract_strided_slice %146 {offsets = [0, 0, 24], sizes = [1, 8, 8], strides = [1, 1, 1]} : vector<1x8x32xbf16> to vector<1x8x8xbf16>
    %203 = vector.extract_strided_slice %148 {offsets = [0, 0, 24], sizes = [1, 8, 8], strides = [1, 1, 1]} : vector<1x8x32xbf16> to vector<1x8x8xbf16>
    "tpu.trace_start"() <{level = 10 : i32, message = "btd,bsd->bts"}> : () -> ()
    %cst_59 = arith.constant dense<0.000000e+00> : vector<1x8x8xf32>
    %204 = tpu.matmul %202, %203, %cst_59 {dimension_numbers = #tpu.dot_dimension_numbers<[2], [2], [1], [1], [0, 0, 0, 1, 1, 1], [0], [0]>} : vector<1x8x8xbf16>, vector<1x8x8xbf16>, vector<1x8x8xf32> -> vector<1x8x8xf32>
    "tpu.trace_stop"() : () -> ()
    %cst_60 = arith.constant dense<0xFF800000> : vector<1x8xf32>
    %205 = vector.multi_reduction <maximumf>, %204, %cst_60 [2] : vector<1x8x8xf32> to vector<1x8xf32>
    %206 = vector.shape_cast %205 : vector<1x8xf32> to vector<1x8x1xf32>
    %207 = vector.broadcast %206 : vector<1x8x1xf32> to vector<1x8x8xf32>
    %208 = arith.subf %204, %207 : vector<1x8x8xf32>
    %209 = math.exp %208 : vector<1x8x8xf32>
    %cst_61 = arith.constant dense<0.000000e+00> : vector<1x8xf32>
    %210 = vector.multi_reduction <add>, %209, %cst_61 [2] : vector<1x8x8xf32> to vector<1x8xf32>
    %211 = vector.shape_cast %210 : vector<1x8xf32> to vector<1x8x1xf32>
    %212 = tpu.reciprocal %211 {approx = true} : vector<1x8x1xf32> -> vector<1x8x1xf32>
    %213 = vector.broadcast %212 : vector<1x8x1xf32> to vector<1x8x8xf32>
    %214 = arith.mulf %209, %213 : vector<1x8x8xf32>
    %215 = arith.truncf %214 : vector<1x8x8xf32> to vector<1x8x8xbf16>
    %216 = vector.extract_strided_slice %150 {offsets = [0, 0, 24], sizes = [1, 8, 8], strides = [1, 1, 1]} : vector<1x8x32xbf16> to vector<1x8x8xbf16>
    "tpu.trace_start"() <{level = 10 : i32, message = "bts,bsd->btd"}> : () -> ()
    %cst_62 = arith.constant dense<0.000000e+00> : vector<1x8x8xf32>
    %217 = tpu.matmul %215, %216, %cst_62 {dimension_numbers = #tpu.dot_dimension_numbers<[2], [1], [1], [2], [0, 0, 0, 1, 1, 2], [0], [0]>} : vector<1x8x8xbf16>, vector<1x8x8xbf16>, vector<1x8x8xf32> -> vector<1x8x8xf32>
    "tpu.trace_stop"() : () -> ()
    %218 = vector.shape_cast %217 : vector<1x8x8xf32> to vector<8x8xf32>
    %219 = tpu.concatenate %167, %184, %201, %218 in 1 : vector<8x8xf32>, vector<8x8xf32>, vector<8x8xf32>, vector<8x8xf32> -> vector<8x32xf32>
    %220 = arith.truncf %219 : vector<8x32xf32> to vector<8x32xbf16>
    %c0_63 = arith.constant 0 : index
    %c0_64 = arith.constant 0 : index
    %221 = vector.load %arg7[%c0_63, %c0_64] : memref<32x32xbf16, #tpu.memory_space<vmem>>, vector<32x32xbf16>
    %cst_65 = arith.constant dense<0.000000e+00> : vector<8x32xf32>
    %222 = tpu.matmul %220, %221, %cst_65 {dimension_numbers = #tpu.dot_dimension_numbers<[1], [0], [0], [1], [0, 0, 1, 1], [], []>} : vector<8x32xbf16>, vector<32x32xbf16>, vector<8x32xf32> -> vector<8x32xf32>
    %223 = vector.broadcast %6 : vector<1x32xf32> to vector<8x32xf32>
    %224 = arith.addf %222, %223 : vector<8x32xf32>
    %225 = arith.addf %132, %224 : vector<8x32xf32>
    %cst_66 = arith.constant dense<0.000000e+00> : vector<8xf32>
    %226 = vector.multi_reduction <add>, %225, %cst_66 [1] : vector<8x32xf32> to vector<8xf32>
    %227 = vector.shape_cast %226 : vector<8xf32> to vector<8x1xf32>
    %cst_67 = arith.constant 3.200000e+01 : f32
    %228 = vector.broadcast %cst_67 : f32 to vector<8x1xf32>
    %229 = arith.divf %227, %228 : vector<8x1xf32>
    %230 = vector.broadcast %229 : vector<8x1xf32> to vector<8x32xf32>
    %231 = arith.subf %225, %230 : vector<8x32xf32>
    %232 = arith.mulf %231, %231 : vector<8x32xf32>
    %cst_68 = arith.constant dense<0.000000e+00> : vector<8xf32>
    %233 = vector.multi_reduction <add>, %232, %cst_68 [1] : vector<8x32xf32> to vector<8xf32>
    %234 = vector.shape_cast %233 : vector<8xf32> to vector<8x1xf32>
    %cst_69 = arith.constant 3.200000e+01 : f32
    %235 = vector.broadcast %cst_69 : f32 to vector<8x1xf32>
    %236 = arith.divf %234, %235 : vector<8x1xf32>
    %cst_70 = arith.constant 9.99999974E-6 : f32
    %237 = vector.broadcast %cst_70 : f32 to vector<8x1xf32>
    %238 = arith.addf %236, %237 : vector<8x1xf32>
    %239 = math.rsqrt %238 : vector<8x1xf32>
    %240 = vector.broadcast %239 : vector<8x1xf32> to vector<8x32xf32>
    %241 = arith.mulf %231, %240 : vector<8x32xf32>
    %242 = vector.broadcast %7 : vector<1x32xf32> to vector<8x32xf32>
    %243 = arith.mulf %241, %242 : vector<8x32xf32>
    %244 = vector.broadcast %8 : vector<1x32xf32> to vector<8x32xf32>
    %245 = arith.addf %243, %244 : vector<8x32xf32>
    %246 = arith.truncf %245 : vector<8x32xf32> to vector<8x32xbf16>
    %c0_71 = arith.constant 0 : index
    %c0_72 = arith.constant 0 : index
    %247 = vector.load %arg8[%c0_71, %c0_72] : memref<32x128xbf16, #tpu.memory_space<vmem>>, vector<32x128xbf16>
    %cst_73 = arith.constant dense<0.000000e+00> : vector<8x128xf32>
    %248 = tpu.matmul %246, %247, %cst_73 {dimension_numbers = #tpu.dot_dimension_numbers<[1], [0], [0], [1], [0, 0, 1, 1], [], []>} : vector<8x32xbf16>, vector<32x128xbf16>, vector<8x128xf32> -> vector<8x128xf32>
    %249 = vector.broadcast %12 : vector<1x128xf32> to vector<8x128xf32>
    %250 = arith.addf %248, %249 : vector<8x128xf32>
    %cst_74 = arith.constant 0.000000e+00 : f32
    %251 = vector.broadcast %cst_74 : f32 to vector<8x128xf32>
    %252 = arith.maximumf %250, %251 : vector<8x128xf32>
    %253 = arith.truncf %252 : vector<8x128xf32> to vector<8x128xbf16>
    %c0_75 = arith.constant 0 : index
    %c0_76 = arith.constant 0 : index
    %254 = vector.load %arg9[%c0_75, %c0_76] : memref<128x32xbf16, #tpu.memory_space<vmem>>, vector<128x32xbf16>
    %cst_77 = arith.constant dense<0.000000e+00> : vector<8x32xf32>
    %255 = tpu.matmul %253, %254, %cst_77 {dimension_numbers = #tpu.dot_dimension_numbers<[1], [0], [0], [1], [0, 0, 1, 1], [], []>} : vector<8x128xbf16>, vector<128x32xbf16>, vector<8x32xf32> -> vector<8x32xf32>
    %256 = vector.broadcast %9 : vector<1x32xf32> to vector<8x32xf32>
    %257 = arith.addf %255, %256 : vector<8x32xf32>
    %258 = arith.addf %245, %257 : vector<8x32xf32>
    %cst_78 = arith.constant dense<0.000000e+00> : vector<8xf32>
    %259 = vector.multi_reduction <add>, %258, %cst_78 [1] : vector<8x32xf32> to vector<8xf32>
    %260 = vector.shape_cast %259 : vector<8xf32> to vector<8x1xf32>
    %cst_79 = arith.constant 3.200000e+01 : f32
    %261 = vector.broadcast %cst_79 : f32 to vector<8x1xf32>
    %262 = arith.divf %260, %261 : vector<8x1xf32>
    %263 = vector.broadcast %262 : vector<8x1xf32> to vector<8x32xf32>
    %264 = arith.subf %258, %263 : vector<8x32xf32>
    %265 = arith.mulf %264, %264 : vector<8x32xf32>
    %cst_80 = arith.constant dense<0.000000e+00> : vector<8xf32>
    %266 = vector.multi_reduction <add>, %265, %cst_80 [1] : vector<8x32xf32> to vector<8xf32>
    %267 = vector.shape_cast %266 : vector<8xf32> to vector<8x1xf32>
    %cst_81 = arith.constant 3.200000e+01 : f32
    %268 = vector.broadcast %cst_81 : f32 to vector<8x1xf32>
    %269 = arith.divf %267, %268 : vector<8x1xf32>
    %cst_82 = arith.constant 9.99999974E-6 : f32
    %270 = vector.broadcast %cst_82 : f32 to vector<8x1xf32>
    %271 = arith.addf %269, %270 : vector<8x1xf32>
    %272 = math.rsqrt %271 : vector<8x1xf32>
    %273 = vector.broadcast %272 : vector<8x1xf32> to vector<8x32xf32>
    %274 = arith.mulf %264, %273 : vector<8x32xf32>
    %275 = vector.broadcast %10 : vector<1x32xf32> to vector<8x32xf32>
    %276 = arith.mulf %274, %275 : vector<8x32xf32>
    %277 = vector.broadcast %11 : vector<1x32xf32> to vector<8x32xf32>
    %278 = arith.addf %276, %277 : vector<8x32xf32>
    %c0_83 = arith.constant 0 : index
    %c0_84 = arith.constant 0 : index
    %279 = vector.load %arg12[%c0_83, %c0_84] : memref<8x32xf32, #tpu.memory_space<vmem>>, vector<8x32xf32>
    tpu.vector_store %arg12[%c0_83, %c0_84], %278 {strides = array<i32>} : memref<8x32xf32, #tpu.memory_space<vmem>>, vector<8x32xf32>,
    return
  }
  func.func @transform_0(%arg0: i32) -> (i32, i32) {
    %c0_i32 = arith.constant 0 : i32
    %c0_i32_0 = arith.constant 0 : i32
    return %arg0, %c0_i32 : i32, i32
  }
  func.func @transform_1(%arg0: i32) -> (i32, i32) {
    %c0_i32 = arith.constant 0 : i32
    %c0_i32_0 = arith.constant 0 : i32
    return %arg0, %c0_i32 : i32, i32
  }
  func.func @transform_2(%arg0: i32) -> (i32, i32) {
    %c0_i32 = arith.constant 0 : i32
    %c0_i32_0 = arith.constant 0 : i32
    return %arg0, %c0_i32 : i32, i32
  }
  func.func @transform_3(%arg0: i32) -> (i32, i32) {
    %c0_i32 = arith.constant 0 : i32
    %c0_i32_0 = arith.constant 0 : i32
    %c0_i32_1 = arith.constant 0 : i32
    return %c0_i32, %c0_i32_0 : i32, i32
  }
  func.func @transform_4(%arg0: i32) -> (i32, i32) {
    %c0_i32 = arith.constant 0 : i32
    %c0_i32_0 = arith.constant 0 : i32
    %c0_i32_1 = arith.constant 0 : i32
    return %c0_i32, %c0_i32_0 : i32, i32
  }
  func.func @transform_5(%arg0: i32) -> (i32, i32, i32) {
    %c0_i32 = arith.constant 0 : i32
    %c0_i32_0 = arith.constant 0 : i32
    %c0_i32_1 = arith.constant 0 : i32
    %c0_i32_2 = arith.constant 0 : i32
    return %c0_i32, %c0_i32_0, %c0_i32_1 : i32, i32, i32
  }
  func.func @transform_6(%arg0: i32) -> (i32, i32) {
    %c0_i32 = arith.constant 0 : i32
    %c0_i32_0 = arith.constant 0 : i32
    %c0_i32_1 = arith.constant 0 : i32
    return %c0_i32, %c0_i32_0 : i32, i32
  }
  func.func @transform_7(%arg0: i32) -> (i32, i32) {
    %c0_i32 = arith.constant 0 : i32
    %c0_i32_0 = arith.constant 0 : i32
    %c0_i32_1 = arith.constant 0 : i32
    return %c0_i32, %c0_i32_0 : i32, i32
  }
  func.func @transform_8(%arg0: i32) -> (i32, i32) {
    %c0_i32 = arith.constant 0 : i32
    %c0_i32_0 = arith.constant 0 : i32
    %c0_i32_1 = arith.constant 0 : i32
    return %c0_i32, %c0_i32_0 : i32, i32
  }
  func.func @transform_9(%arg0: i32) -> (i32, i32) {
    %c0_i32 = arith.constant 0 : i32
    %c0_i32_0 = arith.constant 0 : i32
    %c0_i32_1 = arith.constant 0 : i32
    return %c0_i32, %c0_i32_0 : i32, i32
  }
  func.func @transform_10(%arg0: i32) -> (i32, i32) {
    %c0_i32 = arith.constant 0 : i32
    %c0_i32_0 = arith.constant 0 : i32
    %c0_i32_1 = arith.constant 0 : i32
    return %c0_i32, %c0_i32_0 : i32, i32
  }
  func.func @transform_11(%arg0: i32) -> (i32, i32) {
    %c0_i32 = arith.constant 0 : i32
    %c0_i32_0 = arith.constant 0 : i32
    return %arg0, %c0_i32 : i32, i32
  }
}

module attributes {stable_mosaic.version = 11 : i64} {
  func.func @_decoder_kernel(%arg0: i32, %arg1: memref<8x32xbf16, #tpu.memory_space<vmem>>, %arg2: memref<8x32xbf16, #tpu.memory_space<vmem>>, %arg3: memref<8x32xbf16, #tpu.memory_space<vmem>>, %arg4: memref<32x96xbf16, #tpu.memory_space<vmem>>, %arg5: memref<32x32xbf16, #tpu.memory_space<vmem>>, %arg6: memref<3x32x32xbf16, #tpu.memory_space<vmem>>, %arg7: memref<32x32xbf16, #tpu.memory_space<vmem>>, %arg8: memref<32x128xbf16, #tpu.memory_space<vmem>>, %arg9: memref<128x32xbf16, #tpu.memory_space<vmem>>, %arg10: memref<1x128xf32, #tpu.memory_space<vmem>>, %arg11: memref<9x32xf32, #tpu.memory_space<vmem>>, %arg12: memref<8x32xf32, #tpu.memory_space<vmem>>) attributes {dimension_semantics = [#tpu.dimension_semantics<parallel>], iteration_bounds = array<i64: 2>, scalar_prefetch = 0 : i64, scratch_operands = 0 : i64, tpu.core_type = #tpu.core_type<tc>, window_params = [{transform_indices = @transform_0, window_bounds = array<i64: 8, 32>}, {transform_indices = @transform_1, window_bounds = array<i64: 8, 32>}, {transform_indices = @transform_2, window_bounds = array<i64: 8, 32>}, {pipeline_mode = #tpu.pipeline_mode<synchronous>, transform_indices = @transform_3, window_bounds = array<i64: 32, 96>}, {pipeline_mode = #tpu.pipeline_mode<synchronous>, transform_indices = @transform_4, window_bounds = array<i64: 32, 32>}, {pipeline_mode = #tpu.pipeline_mode<synchronous>, transform_indices = @transform_5, window_bounds = array<i64: 3, 32, 32>}, {pipeline_mode = #tpu.pipeline_mode<synchronous>, transform_indices = @transform_6, window_bounds = array<i64: 32, 32>}, {pipeline_mode = #tpu.pipeline_mode<synchronous>, transform_indices = @transform_7, window_bounds = array<i64: 32, 128>}, {pipeline_mode = #tpu.pipeline_mode<synchronous>, transform_indices = @transform_8, window_bounds = array<i64: 128, 32>}, {pipeline_mode = #tpu.pipeline_mode<synchronous>, transform_indices = @transform_9, window_bounds = array<i64: 1, 128>}, {pipeline_mode = #tpu.pipeline_mode<synchronous>, transform_indices = @transform_10, window_bounds = array<i64: 9, 32>}, {transform_indices = @transform_11, window_bounds = array<i64: 8, 32>}]} {
    %c0 = arith.constant 0 : index
    %c0_0 = arith.constant 0 : index
    %0 = vector.load %arg1[%c0, %c0_0] : memref<8x32xbf16, #tpu.memory_space<vmem>>, vector<8x32xbf16>
    %1 = arith.extf %0 : vector<8x32xbf16> to vector<8x32xf32>
    %c0_1 = arith.constant 0 : index
    %c0_2 = arith.constant 0 : index
    %2 = vector.load %arg11[%c0_1, %c0_2] : memref<9x32xf32, #tpu.memory_space<vmem>>, vector<9x32xf32>
    %3 = vector.extract_strided_slice %2 {offsets = [0, 0], sizes = [1, 32], strides = [1, 1]} : vector<9x32xf32> to vector<1x32xf32>
    %4 = vector.extract_strided_slice %2 {offsets = [1, 0], sizes = [1, 32], strides = [1, 1]} : vector<9x32xf32> to vector<1x32xf32>
    %5 = vector.extract_strided_slice %2 {offsets = [2, 0], sizes = [1, 32], strides = [1, 1]} : vector<9x32xf32> to vector<1x32xf32>
    %6 = vector.extract_strided_slice %2 {offsets = [3, 0], sizes = [1, 32], strides = [1, 1]} : vector<9x32xf32> to vector<1x32xf32>
    %7 = vector.extract_strided_slice %2 {offsets = [4, 0], sizes = [1, 32], strides = [1, 1]} : vector<9x32xf32> to vector<1x32xf32>
    %8 = vector.extract_strided_slice %2 {offsets = [5, 0], sizes = [1, 32], strides = [1, 1]} : vector<9x32xf32> to vector<1x32xf32>
    %9 = vector.extract_strided_slice %2 {offsets = [6, 0], sizes = [1, 32], strides = [1, 1]} : vector<9x32xf32> to vector<1x32xf32>
    %10 = vector.extract_strided_slice %2 {offsets = [7, 0], sizes = [1, 32], strides = [1, 1]} : vector<9x32xf32> to vector<1x32xf32>
    %11 = vector.extract_strided_slice %2 {offsets = [8, 0], sizes = [1, 32], strides = [1, 1]} : vector<9x32xf32> to vector<1x32xf32>
    %c0_3 = arith.constant 0 : index
    %c0_4 = arith.constant 0 : index
    %12 = vector.load %arg10[%c0_3, %c0_4] : memref<1x128xf32, #tpu.memory_space<vmem>>, vector<1x128xf32>
    %13 = tpu.iota {dimensions = array<i32: 0>} : vector<8x8xi32>
    %14 = tpu.iota {dimensions = array<i32: 1>} : vector<8x8xi32>
    %15 = arith.cmpi sge, %13, %14 : vector<8x8xi32>
    %cst = arith.constant 0.000000e+00 : f32
    %cst_5 = arith.constant -1.000000e+30 : f32
    %16 = vector.broadcast %cst : f32 to vector<8x8xf32>
    %17 = vector.broadcast %cst_5 : f32 to vector<8x8xf32>
    %18 = arith.select %15, %16, %17 : vector<8x8xi1>, vector<8x8xf32>
    %c0_6 = arith.constant 0 : index
    %c0_7 = arith.constant 0 : index
    %19 = vector.load %arg4[%c0_6, %c0_7] : memref<32x96xbf16, #tpu.memory_space<vmem>>, vector<32x96xbf16>
    %cst_8 = arith.constant dense<0.000000e+00> : vector<8x96xf32>
    %20 = tpu.matmul %0, %19, %cst_8 {dimension_numbers = #tpu.dot_dimension_numbers<[1], [0], [0], [1], [0, 0, 1, 1], [], []>} : vector<8x32xbf16>, vector<32x96xbf16>, vector<8x96xf32> -> vector<8x96xf32>
    %21 = vector.extract_strided_slice %20 {offsets = [0, 0], sizes = [8, 32], strides = [1, 1]} : vector<8x96xf32> to vector<8x32xf32>
    %22 = vector.extract_strided_slice %20 {offsets = [0, 32], sizes = [8, 32], strides = [1, 1]} : vector<8x96xf32> to vector<8x32xf32>
    %23 = vector.extract_strided_slice %20 {offsets = [0, 64], sizes = [8, 32], strides = [1, 1]} : vector<8x96xf32> to vector<8x32xf32>
    %24 = vector.shape_cast %21 : vector<8x32xf32> to vector<1x8x32xf32>
    %25 = arith.truncf %24 : vector<1x8x32xf32> to vector<1x8x32xbf16>
    %26 = vector.shape_cast %22 : vector<8x32xf32> to vector<1x8x32xf32>
    %27 = arith.truncf %26 : vector<1x8x32xf32> to vector<1x8x32xbf16>
    %28 = vector.shape_cast %23 : vector<8x32xf32> to vector<1x8x32xf32>
    %29 = arith.truncf %28 : vector<1x8x32xf32> to vector<1x8x32xbf16>
    %30 = vector.extract_strided_slice %25 {offsets = [0, 0, 0], sizes = [1, 8, 8], strides = [1, 1, 1]} : vector<1x8x32xbf16> to vector<1x8x8xbf16>
    %31 = vector.extract_strided_slice %27 {offsets = [0, 0, 0], sizes = [1, 8, 8], strides = [1, 1, 1]} : vector<1x8x32xbf16> to vector<1x8x8xbf16>
    "tpu.trace_start"() <{level = 10 : i32, message = "btd,bsd->bts"}> : () -> ()
    %cst_9 = arith.constant dense<0.000000e+00> : vector<1x8x8xf32>
    %32 = tpu.matmul %30, %31, %cst_9 {dimension_numbers = #tpu.dot_dimension_numbers<[2], [2], [1], [1], [0, 0, 0, 1, 1, 1], [0], [0]>} : vector<1x8x8xbf16>, vector<1x8x8xbf16>, vector<1x8x8xf32> -> vector<1x8x8xf32>
    "tpu.trace_stop"() : () -> ()
    %33 = vector.shape_cast %18 : vector<8x8xf32> to vector<1x8x8xf32>
    %34 = arith.addf %32, %33 : vector<1x8x8xf32>
    %cst_10 = arith.constant dense<0xFF800000> : vector<1x8xf32>
    %35 = vector.multi_reduction <maximumf>, %34, %cst_10 [2] : vector<1x8x8xf32> to vector<1x8xf32>
    %36 = vector.shape_cast %35 : vector<1x8xf32> to vector<1x8x1xf32>
    %37 = vector.broadcast %36 : vector<1x8x1xf32> to vector<1x8x8xf32>
    %38 = arith.subf %34, %37 : vector<1x8x8xf32>
    %39 = math.exp %38 : vector<1x8x8xf32>
    %cst_11 = arith.constant dense<0.000000e+00> : vector<1x8xf32>
    %40 = vector.multi_reduction <add>, %39, %cst_11 [2] : vector<1x8x8xf32> to vector<1x8xf32>
    %41 = vector.shape_cast %40 : vector<1x8xf32> to vector<1x8x1xf32>
    %42 = tpu.reciprocal %41 {approx = true} : vector<1x8x1xf32> -> vector<1x8x1xf32>
    %43 = vector.broadcast %42 : vector<1x8x1xf32> to vector<1x8x8xf32>
    %44 = arith.mulf %39, %43 : vector<1x8x8xf32>
    %45 = arith.truncf %44 : vector<1x8x8xf32> to vector<1x8x8xbf16>
    %46 = vector.extract_strided_slice %29 {offsets = [0, 0, 0], sizes = [1, 8, 8], strides = [1, 1, 1]} : vector<1x8x32xbf16> to vector<1x8x8xbf16>
    "tpu.trace_start"() <{level = 10 : i32, message = "bts,bsd->btd"}> : () -> ()
    %cst_12 = arith.constant dense<0.000000e+00> : vector<1x8x8xf32>
    %47 = tpu.matmul %45, %46, %cst_12 {dimension_numbers = #tpu.dot_dimension_numbers<[2], [1], [1], [2], [0, 0, 0, 1, 1, 2], [0], [0]>} : vector<1x8x8xbf16>, vector<1x8x8xbf16>, vector<1x8x8xf32> -> vector<1x8x8xf32>
    "tpu.trace_stop"() : () -> ()
    %48 = vector.shape_cast %47 : vector<1x8x8xf32> to vector<8x8xf32>
    %49 = vector.extract_strided_slice %25 {offsets = [0, 0, 8], sizes = [1, 8, 8], strides = [1, 1, 1]} : vector<1x8x32xbf16> to vector<1x8x8xbf16>
    %50 = vector.extract_strided_slice %27 {offsets = [0, 0, 8], sizes = [1, 8, 8], strides = [1, 1, 1]} : vector<1x8x32xbf16> to vector<1x8x8xbf16>
    "tpu.trace_start"() <{level = 10 : i32, message = "btd,bsd->bts"}> : () -> ()
    %cst_13 = arith.constant dense<0.000000e+00> : vector<1x8x8xf32>
    %51 = tpu.matmul %49, %50, %cst_13 {dimension_numbers = #tpu.dot_dimension_numbers<[2], [2], [1], [1], [0, 0, 0, 1, 1, 1], [0], [0]>} : vector<1x8x8xbf16>, vector<1x8x8xbf16>, vector<1x8x8xf32> -> vector<1x8x8xf32>
    "tpu.trace_stop"() : () -> ()
    %52 = vector.shape_cast %18 : vector<8x8xf32> to vector<1x8x8xf32>
    %53 = arith.addf %51, %52 : vector<1x8x8xf32>
    %cst_14 = arith.constant dense<0xFF800000> : vector<1x8xf32>
    %54 = vector.multi_reduction <maximumf>, %53, %cst_14 [2] : vector<1x8x8xf32> to vector<1x8xf32>
    %55 = vector.shape_cast %54 : vector<1x8xf32> to vector<1x8x1xf32>
    %56 = vector.broadcast %55 : vector<1x8x1xf32> to vector<1x8x8xf32>
    %57 = arith.subf %53, %56 : vector<1x8x8xf32>
    %58 = math.exp %57 : vector<1x8x8xf32>
    %cst_15 = arith.constant dense<0.000000e+00> : vector<1x8xf32>
    %59 = vector.multi_reduction <add>, %58, %cst_15 [2] : vector<1x8x8xf32> to vector<1x8xf32>
    %60 = vector.shape_cast %59 : vector<1x8xf32> to vector<1x8x1xf32>
    %61 = tpu.reciprocal %60 {approx = true} : vector<1x8x1xf32> -> vector<1x8x1xf32>
    %62 = vector.broadcast %61 : vector<1x8x1xf32> to vector<1x8x8xf32>
    %63 = arith.mulf %58, %62 : vector<1x8x8xf32>
    %64 = arith.truncf %63 : vector<1x8x8xf32> to vector<1x8x8xbf16>
    %65 = vector.extract_strided_slice %29 {offsets = [0, 0, 8], sizes = [1, 8, 8], strides = [1, 1, 1]} : vector<1x8x32xbf16> to vector<1x8x8xbf16>
    "tpu.trace_start"() <{level = 10 : i32, message = "bts,bsd->btd"}> : () -> ()
    %cst_16 = arith.constant dense<0.000000e+00> : vector<1x8x8xf32>
    %66 = tpu.matmul %64, %65, %cst_16 {dimension_numbers = #tpu.dot_dimension_numbers<[2], [1], [1], [2], [0, 0, 0, 1, 1, 2], [0], [0]>} : vector<1x8x8xbf16>, vector<1x8x8xbf16>, vector<1x8x8xf32> -> vector<1x8x8xf32>
    "tpu.trace_stop"() : () -> ()
    %67 = vector.shape_cast %66 : vector<1x8x8xf32> to vector<8x8xf32>
    %68 = vector.extract_strided_slice %25 {offsets = [0, 0, 16], sizes = [1, 8, 8], strides = [1, 1, 1]} : vector<1x8x32xbf16> to vector<1x8x8xbf16>
    %69 = vector.extract_strided_slice %27 {offsets = [0, 0, 16], sizes = [1, 8, 8], strides = [1, 1, 1]} : vector<1x8x32xbf16> to vector<1x8x8xbf16>
    "tpu.trace_start"() <{level = 10 : i32, message = "btd,bsd->bts"}> : () -> ()
    %cst_17 = arith.constant dense<0.000000e+00> : vector<1x8x8xf32>
    %70 = tpu.matmul %68, %69, %cst_17 {dimension_numbers = #tpu.dot_dimension_numbers<[2], [2], [1], [1], [0, 0, 0, 1, 1, 1], [0], [0]>} : vector<1x8x8xbf16>, vector<1x8x8xbf16>, vector<1x8x8xf32> -> vector<1x8x8xf32>
    "tpu.trace_stop"() : () -> ()
    %71 = vector.shape_cast %18 : vector<8x8xf32> to vector<1x8x8xf32>
    %72 = arith.addf %70, %71 : vector<1x8x8xf32>
    %cst_18 = arith.constant dense<0xFF800000> : vector<1x8xf32>
    %73 = vector.multi_reduction <maximumf>, %72, %cst_18 [2] : vector<1x8x8xf32> to vector<1x8xf32>
    %74 = vector.shape_cast %73 : vector<1x8xf32> to vector<1x8x1xf32>
    %75 = vector.broadcast %74 : vector<1x8x1xf32> to vector<1x8x8xf32>
    %76 = arith.subf %72, %75 : vector<1x8x8xf32>
    %77 = math.exp %76 : vector<1x8x8xf32>
    %cst_19 = arith.constant dense<0.000000e+00> : vector<1x8xf32>
    %78 = vector.multi_reduction <add>, %77, %cst_19 [2] : vector<1x8x8xf32> to vector<1x8xf32>
    %79 = vector.shape_cast %78 : vector<1x8xf32> to vector<1x8x1xf32>
    %80 = tpu.reciprocal %79 {approx = true} : vector<1x8x1xf32> -> vector<1x8x1xf32>
    %81 = vector.broadcast %80 : vector<1x8x1xf32> to vector<1x8x8xf32>
    %82 = arith.mulf %77, %81 : vector<1x8x8xf32>
    %83 = arith.truncf %82 : vector<1x8x8xf32> to vector<1x8x8xbf16>
    %84 = vector.extract_strided_slice %29 {offsets = [0, 0, 16], sizes = [1, 8, 8], strides = [1, 1, 1]} : vector<1x8x32xbf16> to vector<1x8x8xbf16>
    "tpu.trace_start"() <{level = 10 : i32, message = "bts,bsd->btd"}> : () -> ()
    %cst_20 = arith.constant dense<0.000000e+00> : vector<1x8x8xf32>
    %85 = tpu.matmul %83, %84, %cst_20 {dimension_numbers = #tpu.dot_dimension_numbers<[2], [1], [1], [2], [0, 0, 0, 1, 1, 2], [0], [0]>} : vector<1x8x8xbf16>, vector<1x8x8xbf16>, vector<1x8x8xf32> -> vector<1x8x8xf32>
    "tpu.trace_stop"() : () -> ()
    %86 = vector.shape_cast %85 : vector<1x8x8xf32> to vector<8x8xf32>
    %87 = vector.extract_strided_slice %25 {offsets = [0, 0, 24], sizes = [1, 8, 8], strides = [1, 1, 1]} : vector<1x8x32xbf16> to vector<1x8x8xbf16>
    %88 = vector.extract_strided_slice %27 {offsets = [0, 0, 24], sizes = [1, 8, 8], strides = [1, 1, 1]} : vector<1x8x32xbf16> to vector<1x8x8xbf16>
    "tpu.trace_start"() <{level = 10 : i32, message = "btd,bsd->bts"}> : () -> ()
    %cst_21 = arith.constant dense<0.000000e+00> : vector<1x8x8xf32>
    %89 = tpu.matmul %87, %88, %cst_21 {dimension_numbers = #tpu.dot_dimension_numbers<[2], [2], [1], [1], [0, 0, 0, 1, 1, 1], [0], [0]>} : vector<1x8x8xbf16>, vector<1x8x8xbf16>, vector<1x8x8xf32> -> vector<1x8x8xf32>
    "tpu.trace_stop"() : () -> ()
    %90 = vector.shape_cast %18 : vector<8x8xf32> to vector<1x8x8xf32>
    %91 = arith.addf %89, %90 : vector<1x8x8xf32>
    %cst_22 = arith.constant dense<0xFF800000> : vector<1x8xf32>
    %92 = vector.multi_reduction <maximumf>, %91, %cst_22 [2] : vector<1x8x8xf32> to vector<1x8xf32>
    %93 = vector.shape_cast %92 : vector<1x8xf32> to vector<1x8x1xf32>
    %94 = vector.broadcast %93 : vector<1x8x1xf32> to vector<1x8x8xf32>
    %95 = arith.subf %91, %94 : vector<1x8x8xf32>
    %96 = math.exp %95 : vector<1x8x8xf32>
    %cst_23 = arith.constant dense<0.000000e+00> : vector<1x8xf32>
    %97 = vector.multi_reduction <add>, %96, %cst_23 [2] : vector<1x8x8xf32> to vector<1x8xf32>
    %98 = vector.shape_cast %97 : vector<1x8xf32> to vector<1x8x1xf32>
    %99 = tpu.reciprocal %98 {approx = true} : vector<1x8x1xf32> -> vector<1x8x1xf32>
    %100 = vector.broadcast %99 : vector<1x8x1xf32> to vector<1x8x8xf32>
    %101 = arith.mulf %96, %100 : vector<1x8x8xf32>
    %102 = arith.truncf %101 : vector<1x8x8xf32> to vector<1x8x8xbf16>
    %103 = vector.extract_strided_slice %29 {offsets = [0, 0, 24], sizes = [1, 8, 8], strides = [1, 1, 1]} : vector<1x8x32xbf16> to vector<1x8x8xbf16>
    "tpu.trace_start"() <{level = 10 : i32, message = "bts,bsd->btd"}> : () -> ()
    %cst_24 = arith.constant dense<0.000000e+00> : vector<1x8x8xf32>
    %104 = tpu.matmul %102, %103, %cst_24 {dimension_numbers = #tpu.dot_dimension_numbers<[2], [1], [1], [2], [0, 0, 0, 1, 1, 2], [0], [0]>} : vector<1x8x8xbf16>, vector<1x8x8xbf16>, vector<1x8x8xf32> -> vector<1x8x8xf32>
    "tpu.trace_stop"() : () -> ()
    %105 = vector.shape_cast %104 : vector<1x8x8xf32> to vector<8x8xf32>
    %106 = tpu.concatenate %48, %67, %86, %105 in 1 : vector<8x8xf32>, vector<8x8xf32>, vector<8x8xf32>, vector<8x8xf32> -> vector<8x32xf32>
    %107 = arith.truncf %106 : vector<8x32xf32> to vector<8x32xbf16>
    %c0_25 = arith.constant 0 : index
    %c0_26 = arith.constant 0 : index
    %108 = vector.load %arg5[%c0_25, %c0_26] : memref<32x32xbf16, #tpu.memory_space<vmem>>, vector<32x32xbf16>
    %cst_27 = arith.constant dense<0.000000e+00> : vector<8x32xf32>
    %109 = tpu.matmul %107, %108, %cst_27 {dimension_numbers = #tpu.dot_dimension_numbers<[1], [0], [0], [1], [0, 0, 1, 1], [], []>} : vector<8x32xbf16>, vector<32x32xbf16>, vector<8x32xf32> -> vector<8x32xf32>
    %110 = vector.broadcast %3 : vector<1x32xf32> to vector<8x32xf32>
    %111 = arith.addf %109, %110 : vector<8x32xf32>
    %112 = arith.addf %1, %111 : vector<8x32xf32>
    %cst_28 = arith.constant dense<0.000000e+00> : vector<8xf32>
    %113 = vector.multi_reduction <add>, %112, %cst_28 [1] : vector<8x32xf32> to vector<8xf32>
    %114 = vector.shape_cast %113 : vector<8xf32> to vector<8x1xf32>
    %cst_29 = arith.constant 3.200000e+01 : f32
    %115 = vector.broadcast %cst_29 : f32 to vector<8x1xf32>
    %116 = arith.divf %114, %115 : vector<8x1xf32>
    %117 = vector.broadcast %116 : vector<8x1xf32> to vector<8x32xf32>
    %118 = arith.subf %112, %117 : vector<8x32xf32>
    %119 = arith.mulf %118, %118 : vector<8x32xf32>
    %cst_30 = arith.constant dense<0.000000e+00> : vector<8xf32>
    %120 = vector.multi_reduction <add>, %119, %cst_30 [1] : vector<8x32xf32> to vector<8xf32>
    %121 = vector.shape_cast %120 : vector<8xf32> to vector<8x1xf32>
    %cst_31 = arith.constant 3.200000e+01 : f32
    %122 = vector.broadcast %cst_31 : f32 to vector<8x1xf32>
    %123 = arith.divf %121, %122 : vector<8x1xf32>
    %cst_32 = arith.constant 9.99999974E-6 : f32
    %124 = vector.broadcast %cst_32 : f32 to vector<8x1xf32>
    %125 = arith.addf %123, %124 : vector<8x1xf32>
    %126 = math.rsqrt %125 : vector<8x1xf32>
    %127 = vector.broadcast %126 : vector<8x1xf32> to vector<8x32xf32>
    %128 = arith.mulf %118, %127 : vector<8x32xf32>
    %129 = vector.broadcast %4 : vector<1x32xf32> to vector<8x32xf32>
    %130 = arith.mulf %128, %129 : vector<8x32xf32>
    %131 = vector.broadcast %5 : vector<1x32xf32> to vector<8x32xf32>
    %132 = arith.addf %130, %131 : vector<8x32xf32>
    %133 = arith.truncf %132 : vector<8x32xf32> to vector<8x32xbf16>
    %c0_33 = arith.constant 0 : index
    %c0_34 = arith.constant 0 : index
    %c0_35 = arith.constant 0 : index
    %134 = vector.load %arg6[%c0_33, %c0_34, %c0_35] : memref<3x32x32xbf16, #tpu.memory_space<vmem>>, vector<1x32x32xbf16>
    %135 = vector.shape_cast %134 : vector<1x32x32xbf16> to vector<32x32xbf16>
    %cst_36 = arith.constant dense<0.000000e+00> : vector<8x32xf32>
    %136 = tpu.matmul %133, %135, %cst_36 {dimension_numbers = #tpu.dot_dimension_numbers<[1], [0], [0], [1], [0, 0, 1, 1], [], []>} : vector<8x32xbf16>, vector<32x32xbf16>, vector<8x32xf32> -> vector<8x32xf32>
    %c0_37 = arith.constant 0 : index
    %c0_38 = arith.constant 0 : index
    %137 = vector.load %arg2[%c0_37, %c0_38] : memref<8x32xbf16, #tpu.memory_space<vmem>>, vector<8x32xbf16>
    %c1 = arith.constant 1 : index
    %c0_39 = arith.constant 0 : index
    %c0_40 = arith.constant 0 : index
    %138 = vector.load %arg6[%c1, %c0_39, %c0_40] : memref<3x32x32xbf16, #tpu.memory_space<vmem>>, vector<1x32x32xbf16>
    %139 = vector.shape_cast %138 : vector<1x32x32xbf16> to vector<32x32xbf16>
    %cst_41 = arith.constant dense<0.000000e+00> : vector<8x32xf32>
    %140 = tpu.matmul %137, %139, %cst_41 {dimension_numbers = #tpu.dot_dimension_numbers<[1], [0], [0], [1], [0, 0, 1, 1], [], []>} : vector<8x32xbf16>, vector<32x32xbf16>, vector<8x32xf32> -> vector<8x32xf32>
    %c0_42 = arith.constant 0 : index
    %c0_43 = arith.constant 0 : index
    %141 = vector.load %arg3[%c0_42, %c0_43] : memref<8x32xbf16, #tpu.memory_space<vmem>>, vector<8x32xbf16>
    %c2 = arith.constant 2 : index
    %c0_44 = arith.constant 0 : index
    %c0_45 = arith.constant 0 : index
    %142 = vector.load %arg6[%c2, %c0_44, %c0_45] : memref<3x32x32xbf16, #tpu.memory_space<vmem>>, vector<1x32x32xbf16>
    %143 = vector.shape_cast %142 : vector<1x32x32xbf16> to vector<32x32xbf16>
    %cst_46 = arith.constant dense<0.000000e+00> : vector<8x32xf32>
    %144 = tpu.matmul %141, %143, %cst_46 {dimension_numbers = #tpu.dot_dimension_numbers<[1], [0], [0], [1], [0, 0, 1, 1], [], []>} : vector<8x32xbf16>, vector<32x32xbf16>, vector<8x32xf32> -> vector<8x32xf32>
    %145 = vector.shape_cast %136 : vector<8x32xf32> to vector<1x8x32xf32>
    %146 = arith.truncf %145 : vector<1x8x32xf32> to vector<1x8x32xbf16>
    %147 = vector.shape_cast %140 : vector<8x32xf32> to vector<1x8x32xf32>
    %148 = arith.truncf %147 : vector<1x8x32xf32> to vector<1x8x32xbf16>
    %149 = vector.shape_cast %144 : vector<8x32xf32> to vector<1x8x32xf32>
    %150 = arith.truncf %149 : vector<1x8x32xf32> to vector<1x8x32xbf16>
    %151 = vector.extract_strided_slice %146 {offsets = [0, 0, 0], sizes = [1, 8, 8], strides = [1, 1, 1]} : vector<1x8x32xbf16> to vector<1x8x8xbf16>
    %152 = vector.extract_strided_slice %148 {offsets = [0, 0, 0], sizes = [1, 8, 8], strides = [1, 1, 1]} : vector<1x8x32xbf16> to vector<1x8x8xbf16>
    "tpu.trace_start"() <{level = 10 : i32, message = "btd,bsd->bts"}> : () -> ()
    %cst_47 = arith.constant dense<0.000000e+00> : vector<1x8x8xf32>
    %153 = tpu.matmul %151, %152, %cst_47 {dimension_numbers = #tpu.dot_dimension_numbers<[2], [2], [1], [1], [0, 0, 0, 1, 1, 1], [0], [0]>} : vector<1x8x8xbf16>, vector<1x8x8xbf16>, vector<1x8x8xf32> -> vector<1x8x8xf32>
    "tpu.trace_stop"() : () -> ()
    %cst_48 = arith.constant dense<0xFF800000> : vector<1x8xf32>
    %154 = vector.multi_reduction <maximumf>, %153, %cst_48 [2] : vector<1x8x8xf32> to vector<1x8xf32>
    %155 = vector.shape_cast %154 : vector<1x8xf32> to vector<1x8x1xf32>
    %156 = vector.broadcast %155 : vector<1x8x1xf32> to vector<1x8x8xf32>
    %157 = arith.subf %153, %156 : vector<1x8x8xf32>
    %158 = math.exp %157 : vector<1x8x8xf32>
    %cst_49 = arith.constant dense<0.000000e+00> : vector<1x8xf32>
    %159 = vector.multi_reduction <add>, %158, %cst_49 [2] : vector<1x8x8xf32> to vector<1x8xf32>
    %160 = vector.shape_cast %159 : vector<1x8xf32> to vector<1x8x1xf32>
    %161 = tpu.reciprocal %160 {approx = true} : vector<1x8x1xf32> -> vector<1x8x1xf32>
    %162 = vector.broadcast %161 : vector<1x8x1xf32> to vector<1x8x8xf32>
    %163 = arith.mulf %158, %162 : vector<1x8x8xf32>
    %164 = arith.truncf %163 : vector<1x8x8xf32> to vector<1x8x8xbf16>
    %165 = vector.extract_strided_slice %150 {offsets = [0, 0, 0], sizes = [1, 8, 8], strides = [1, 1, 1]} : vector<1x8x32xbf16> to vector<1x8x8xbf16>
    "tpu.trace_start"() <{level = 10 : i32, message = "bts,bsd->btd"}> : () -> ()
    %cst_50 = arith.constant dense<0.000000e+00> : vector<1x8x8xf32>
    %166 = tpu.matmul %164, %165, %cst_50 {dimension_numbers = #tpu.dot_dimension_numbers<[2], [1], [1], [2], [0, 0, 0, 1, 1, 2], [0], [0]>} : vector<1x8x8xbf16>, vector<1x8x8xbf16>, vector<1x8x8xf32> -> vector<1x8x8xf32>
    "tpu.trace_stop"() : () -> ()
    %167 = vector.shape_cast %166 : vector<1x8x8xf32> to vector<8x8xf32>
    %168 = vector.extract_strided_slice %146 {offsets = [0, 0, 8], sizes = [1, 8, 8], strides = [1, 1, 1]} : vector<1x8x32xbf16> to vector<1x8x8xbf16>
    %169 = vector.extract_strided_slice %148 {offsets = [0, 0, 8], sizes = [1, 8, 8], strides = [1, 1, 1]} : vector<1x8x32xbf16> to vector<1x8x8xbf16>
    "tpu.trace_start"() <{level = 10 : i32, message = "btd,bsd->bts"}> : () -> ()
    %cst_51 = arith.constant dense<0.000000e+00> : vector<1x8x8xf32>
    %170 = tpu.matmul %168, %169, %cst_51 {dimension_numbers = #tpu.dot_dimension_numbers<[2], [2], [1], [1], [0, 0, 0, 1, 1, 1], [0], [0]>} : vector<1x8x8xbf16>, vector<1x8x8xbf16>, vector<1x8x8xf32> -> vector<1x8x8xf32>
    "tpu.trace_stop"() : () -> ()
    %cst_52 = arith.constant dense<0xFF800000> : vector<1x8xf32>
    %171 = vector.multi_reduction <maximumf>, %170, %cst_52 [2] : vector<1x8x8xf32> to vector<1x8xf32>
    %172 = vector.shape_cast %171 : vector<1x8xf32> to vector<1x8x1xf32>
    %173 = vector.broadcast %172 : vector<1x8x1xf32> to vector<1x8x8xf32>
    %174 = arith.subf %170, %173 : vector<1x8x8xf32>
    %175 = math.exp %174 : vector<1x8x8xf32>
    %cst_53 = arith.constant dense<0.000000e+00> : vector<1x8xf32>
    %176 = vector.multi_reduction <add>, %175, %cst_53 [2] : vector<1x8x8xf32> to vector<1x8xf32>
    %177 = vector.shape_cast %176 : vector<1x8xf32> to vector<1x8x1xf32>
    %178 = tpu.reciprocal %177 {approx = true} : vector<1x8x1xf32> -> vector<1x8x1xf32>
    %179 = vector.broadcast %178 : vector<1x8x1xf32> to vector<1x8x8xf32>
    %180 = arith.mulf %175, %179 : vector<1x8x8xf32>
    %181 = arith.truncf %180 : vector<1x8x8xf32> to vector<1x8x8xbf16>
    %182 = vector.extract_strided_slice %150 {offsets = [0, 0, 8], sizes = [1, 8, 8], strides = [1, 1, 1]} : vector<1x8x32xbf16> to vector<1x8x8xbf16>
    "tpu.trace_start"() <{level = 10 : i32, message = "bts,bsd->btd"}> : () -> ()
    %cst_54 = arith.constant dense<0.000000e+00> : vector<1x8x8xf32>
    %183 = tpu.matmul %181, %182, %cst_54 {dimension_numbers = #tpu.dot_dimension_numbers<[2], [1], [1], [2], [0, 0, 0, 1, 1, 2], [0], [0]>} : vector<1x8x8xbf16>, vector<1x8x8xbf16>, vector<1x8x8xf32> -> vector<1x8x8xf32>
    "tpu.trace_stop"() : () -> ()
    %184 = vector.shape_cast %183 : vector<1x8x8xf32> to vector<8x8xf32>
    %185 = vector.extract_strided_slice %146 {offsets = [0, 0, 16], sizes = [1, 8, 8], strides = [1, 1, 1]} : vector<1x8x32xbf16> to vector<1x8x8xbf16>
    %186 = vector.extract_strided_slice %148 {offsets = [0, 0, 16], sizes = [1, 8, 8], strides = [1, 1, 1]} : vector<1x8x32xbf16> to vector<1x8x8xbf16>
    "tpu.trace_start"() <{level = 10 : i32, message = "btd,bsd->bts"}> : () -> ()
    %cst_55 = arith.constant dense<0.000000e+00> : vector<1x8x8xf32>
    %187 = tpu.matmul %185, %186, %cst_55 {dimension_numbers = #tpu.dot_dimension_numbers<[2], [2], [1], [1], [0, 0, 0, 1, 1, 1], [0], [0]>} : vector<1x8x8xbf16>, vector<1x8x8xbf16>, vector<1x8x8xf32> -> vector<1x8x8xf32>
    "tpu.trace_stop"() : () -> ()
    %cst_56 = arith.constant dense<0xFF800000> : vector<1x8xf32>
    %188 = vector.multi_reduction <maximumf>, %187, %cst_56 [2] : vector<1x8x8xf32> to vector<1x8xf32>
    %189 = vector.shape_cast %188 : vector<1x8xf32> to vector<1x8x1xf32>
    %190 = vector.broadcast %189 : vector<1x8x1xf32> to vector<1x8x8xf32>
    %191 = arith.subf %187, %190 : vector<1x8x8xf32>
    %192 = math.exp %191 : vector<1x8x8xf32>
    %cst_57 = arith.constant dense<0.000000e+00> : vector<1x8xf32>
    %193 = vector.multi_reduction <add>, %192, %cst_57 [2] : vector<1x8x8xf32> to vector<1x8xf32>
    %194 = vector.shape_cast %193 : vector<1x8xf32> to vector<1x8x1xf32>
    %195 = tpu.reciprocal %194 {approx = true} : vector<1x8x1xf32> -> vector<1x8x1xf32>
    %196 = vector.broadcast %195 : vector<1x8x1xf32> to vector<1x8x8xf32>
    %197 = arith.mulf %192, %196 : vector<1x8x8xf32>
    %198 = arith.truncf %197 : vector<1x8x8xf32> to vector<1x8x8xbf16>
    %199 = vector.extract_strided_slice %150 {offsets = [0, 0, 16], sizes = [1, 8, 8], strides = [1, 1, 1]} : vector<1x8x32xbf16> to vector<1x8x8xbf16>
    "tpu.trace_start"() <{level = 10 : i32, message = "bts,bsd->btd"}> : () -> ()
    %cst_58 = arith.constant dense<0.000000e+00> : vector<1x8x8xf32>
    %200 = tpu.matmul %198, %199, %cst_58 {dimension_numbers = #tpu.dot_dimension_numbers<[2], [1], [1], [2], [0, 0, 0, 1, 1, 2], [0], [0]>} : vector<1x8x8xbf16>, vector<1x8x8xbf16>, vector<1x8x8xf32> -> vector<1x8x8xf32>
    "tpu.trace_stop"() : () -> ()
    %201 = vector.shape_cast %200 : vector<1x8x8xf32> to vector<8x8xf32>
    %202 = vector.extract_strided_slice %146 {offsets = [0, 0, 24], sizes = [1, 8, 8], strides = [1, 1, 1]} : vector<1x8x32xbf16> to vector<1x8x8xbf16>
    %203 = vector.extract_strided_slice %148 {offsets = [0, 0, 24], sizes = [1, 8, 8], strides = [1, 1, 1]} : vector<1x8x32xbf16> to vector<1x8x8xbf16>
    "tpu.trace_start"() <{level = 10 : i32, message = "btd,bsd->bts"}> : () -> ()
    %cst_59 = arith.constant dense<0.000000e+00> : vector<1x8x8xf32>
    %204 = tpu.matmul %202, %203, %cst_59 {dimension_numbers = #tpu.dot_dimension_numbers<[2], [2], [1], [1], [0, 0, 0, 1, 1, 1], [0], [0]>} : vector<1x8x8xbf16>, vector<1x8x8xbf16>, vector<1x8x8xf32> -> vector<1x8x8xf32>
    "tpu.trace_stop"() : () -> ()
    %cst_60 = arith.constant dense<0xFF800000> : vector<1x8xf32>
    %205 = vector.multi_reduction <maximumf>, %204, %cst_60 [2] : vector<1x8x8xf32> to vector<1x8xf32>
    %206 = vector.shape_cast %205 : vector<1x8xf32> to vector<1x8x1xf32>
    %207 = vector.broadcast %206 : vector<1x8x1xf32> to vector<1x8x8xf32>
    %208 = arith.subf %204, %207 : vector<1x8x8xf32>
    %209 = math.exp %208 : vector<1x8x8xf32>
    %cst_61 = arith.constant dense<0.000000e+00> : vector<1x8xf32>
    %210 = vector.multi_reduction <add>, %209, %cst_61 [2] : vector<1x8x8xf32> to vector<1x8xf32>
    %211 = vector.shape_cast %210 : vector<1x8xf32> to vector<1x8x1xf32>
    %212 = tpu.reciprocal %211 {approx = true} : vector<1x8x1xf32> -> vector<1x8x1xf32>
    %213 = vector.broadcast %212 : vector<1x8x1xf32> to vector<1x8x8xf32>
    %214 = arith.mulf %209, %213 : vector<1x8x8xf32>
    %215 = arith.truncf %214 : vector<1x8x8xf32> to vector<1x8x8xbf16>
    %216 = vector.extract_strided_slice %150 {offsets = [0, 0, 24], sizes = [1, 8, 8], strides = [1, 1, 1]} : vector<1x8x32xbf16> to vector<1x8x8xbf16>
    "tpu.trace_start"() <{level = 10 : i32, message = "bts,bsd->btd"}> : () -> ()
    %cst_62 = arith.constant dense<0.000000e+00> : vector<1x8x8xf32>
    %217 = tpu.matmul %215, %216, %cst_62 {dimension_numbers = #tpu.dot_dimension_numbers<[2], [1], [1], [2], [0, 0, 0, 1, 1, 2], [0], [0]>} : vector<1x8x8xbf16>, vector<1x8x8xbf16>, vector<1x8x8xf32> -> vector<1x8x8xf32>
    "tpu.trace_stop"() : () -> ()
    %218 = vector.shape_cast %217 : vector<1x8x8xf32> to vector<8x8xf32>
    %219 = tpu.concatenate %167, %184, %201, %218 in 1 : vector<8x8xf32>, vector<8x8xf32>, vector<8x8xf32>, vector<8x8xf32> -> vector<8x32xf32>
    %220 = arith.truncf %219 : vector<8x32xf32> to vector<8x32xbf16>
    %c0_63 = arith.constant 0 : index
    %c0_64 = arith.constant 0 : index
    %221 = vector.load %arg7[%c0_63, %c0_64] : memref<32x32xbf16, #tpu.memory_space<vmem>>, vector<32x32xbf16>
    %cst_65 = arith.constant dense<0.000000e+00> : vector<8x32xf32>
    %222 = tpu.matmul %220, %221, %cst_65 {dimension_numbers = #tpu.dot_dimension_numbers<[1], [0], [0], [1], [0, 0, 1, 1], [], []>} : vector<8x32xbf16>, vector<32x32xbf16>, vector<8x32xf32> -> vector<8x32xf32>
    %223 = vector.broadcast %6 : vector<1x32xf32> to vector<8x32xf32>
    %224 = arith.addf %222, %223 : vector<8x32xf32>
    %225 = arith.addf %132, %224 : vector<8x32xf32>
    %cst_66 = arith.constant dense<0.000000e+00> : vector<8xf32>
    %226 = vector.multi_reduction <add>, %225, %cst_66 [1] : vector<8x32xf32> to vector<8xf32>
    %227 = vector.shape_cast %226 : vector<8xf32> to vector<8x1xf32>
    %cst_67 = arith.constant 3.200000e+01 : f32
    %228 = vector.broadcast %cst_67 : f32 to vector<8x1xf32>
    %229 = arith.divf %227, %228 : vector<8x1xf32>
    %230 = vector.broadcast %229 : vector<8x1xf32> to vector<8x32xf32>
    %231 = arith.subf %225, %230 : vector<8x32xf32>
    %232 = arith.mulf %231, %231 : vector<8x32xf32>
    %cst_68 = arith.constant dense<0.000000e+00> : vector<8xf32>
    %233 = vector.multi_reduction <add>, %232, %cst_68 [1] : vector<8x32xf32> to vector<8xf32>
    %234 = vector.shape_cast %233 : vector<8xf32> to vector<8x1xf32>
    %cst_69 = arith.constant 3.200000e+01 : f32
    %235 = vector.broadcast %cst_69 : f32 to vector<8x1xf32>
    %236 = arith.divf %234, %235 : vector<8x1xf32>
    %cst_70 = arith.constant 9.99999974E-6 : f32
    %237 = vector.broadcast %cst_70 : f32 to vector<8x1xf32>
    %238 = arith.addf %236, %237 : vector<8x1xf32>
    %239 = math.rsqrt %238 : vector<8x1xf32>
    %240 = vector.broadcast %239 : vector<8x1xf32> to vector<8x32xf32>
    %241 = arith.mulf %231, %240 : vector<8x32xf32>
    %242 = vector.broadcast %7 : vector<1x32xf32> to vector<8x32xf32>
    %243 = arith.mulf %241, %242 : vector<8x32xf32>
    %244 = vector.broadcast %8 : vector<1x32xf32> to vector<8x32xf32>
    %245 = arith.addf %243, %244 : vector<8x32xf32>
    %246 = arith.truncf %245 : vector<8x32xf32> to vector<8x32xbf16>
    %c0_71 = arith.constant 0 : index
    %c0_72 = arith.constant 0 : index
    %247 = vector.load %arg8[%c0_71, %c0_72] : memref<32x128xbf16, #tpu.memory_space<vmem>>, vector<32x128xbf16>
    %cst_73 = arith.constant dense<0.000000e+00> : vector<8x128xf32>
    %248 = tpu.matmul %246, %247, %cst_73 {dimension_numbers = #tpu.dot_dimension_numbers<[1], [0], [0], [1], [0, 0, 1, 1], [], []>} : vector<8x32xbf16>, vector<32x128xbf16>, vector<8x128xf32> -> vector<8x128xf32>
    %249 = vector.broadcast %12 : vector<1x128xf32> to vector<8x128xf32>
    %250 = arith.addf %248, %249 : vector<8x128xf32>
    %cst_74 = arith.constant 0.000000e+00 : f32
    %251 = vector.broadcast %cst_74 : f32 to vector<8x128xf32>
    %252 = arith.maximumf %250, %251 : vector<8x128xf32>
    %253 = arith.truncf %252 : vector<8x128xf32> to vector<8x128xbf16>
    %c0_75 = arith.constant 0 : index
    %c0_76 = arith.constant 0 : index
    %254 = vector.load %arg9[%c0_75, %c0_76] : memref<128x32xbf16, #tpu.memory_space<vmem>>, vector<128x32xbf16>
    %cst_77 = arith.constant dense<0.000000e+00> : vector<8x32xf32>
    %255 = tpu.matmul %253, %254, %cst_77 {dimension_numbers = #tpu.dot_dimension_numbers<[1], [0], [0], [1], [0, 0, 1, 1], [], []>} : vector<8x128xbf16>, vector<128x32xbf16>, vector<8x32xf32> -> vector<8x32xf32>
    %256 = vector.broadcast %9 : vector<1x32xf32> to vector<8x32xf32>
    %257 = arith.addf %255, %256 : vector<8x32xf32>
    %258 = arith.addf %245, %257 : vector<8x32xf32>
    %cst_78 = arith.constant dense<0.000000e+00> : vector<8xf32>
    %259 = vector.multi_reduction <add>, %258, %cst_78 [1] : vector<8x32xf32> to vector<8xf32>
    %260 = vector.shape_cast %259 : vector<8xf32> to vector<8x1xf32>
    %cst_79 = arith.constant 3.200000e+01 : f32
    %261 = vector.broadcast %cst_79 : f32 to vector<8x1xf32>
    %262 = arith.divf %260, %261 : vector<8x1xf32>
    %263 = vector.broadcast %262 : vector<8x1xf32> to vector<8x32xf32>
    %264 = arith.subf %258, %263 : vector<8x32xf32>
    %265 = arith.mulf %264, %264 : vector<8x32xf32>
    %cst_80 = arith.constant dense<0.000000e+00> : vector<8xf32>
    %266 = vector.multi_reduction <add>, %265, %cst_80 [1] : vector<8x32xf32> to vector<8xf32>
    %267 = vector.shape_cast %266 : vector<8xf32> to vector<8x1xf32>
    %cst_81 = arith.constant 3.200000e+01 : f32
    %268 = vector.broadcast %cst_81 : f32 to vector<8x1xf32>
    %269 = arith.divf %267, %268 : vector<8x1xf32>
    %cst_82 = arith.constant 9.99999974E-6 : f32
    %270 = vector.broadcast %cst_82 : f32 to vector<8x1xf32>
    %271 = arith.addf %269, %270 : vector<8x1xf32>
    %272 = math.rsqrt %271 : vector<8x1xf32>
    %273 = vector.broadcast %272 : vector<8x1xf32> to vector<8x32xf32>
    %274 = arith.mulf %264, %273 : vector<8x32xf32>
    %275 = vector.broadcast %10 : vector<1x32xf32> to vector<8x32xf32>
    %276 = arith.mulf %274, %275 : vector<8x32xf32>
    %277 = vector.broadcast %11 : vector<1x32xf32> to vector<8x32xf32>
    %278 = arith.addf %276, %277 : vector<8x32xf32>
    %c0_83 = arith.constant 0 : index
    %c0_84 = arith.constant 0 : index
    %279 = vector.load %arg12[%c0_83, %c0_84] : memref<8x32xf32, #tpu.memory_space<vmem>>, vector<8x32xf32>
    tpu.vector_store %arg12[%c0_83, %c0_84], %278 {strides = array<i32>} : memref<8x32xf32, #tpu.memory_space<vmem>>, vector<8x32xf32>,
    return
  }
  func.func @transform_0(%arg0: i32) -> (i32, i32) {
    %c0_i32 = arith.constant 0 : i32
    %c0_i32_0 = arith.constant 0 : i32
    return %arg0, %c0_i32 : i32, i32
  }
  func.func @transform_1(%arg0: i32) -> (i32, i32) {
    %c0_i32 = arith.constant 0 : i32
    %c0_i32_0 = arith.constant 0 : i32
    return %arg0, %c0_i32 : i32, i32
  }
  func.func @transform_2(%arg0: i32) -> (i32, i32) {
    %c0_i32 = arith.constant 0 : i32
    %c0_i32_0 = arith.constant 0 : i32
    return %arg0, %c0_i32 : i32, i32
  }
  func.func @transform_3(%arg0: i32) -> (i32, i32) {
    %c0_i32 = arith.constant 0 : i32
    %c0_i32_0 = arith.constant 0 : i32
    %c0_i32_1 = arith.constant 0 : i32
    return %c0_i32, %c0_i32_0 : i32, i32
  }
  func.func @transform_4(%arg0: i32) -> (i32, i32) {
    %c0_i32 = arith.constant 0 : i32
    %c0_i32_0 = arith.constant 0 : i32
    %c0_i32_1 = arith.constant 0 : i32
    return %c0_i32, %c0_i32_0 : i32, i32
  }
  func.func @transform_5(%arg0: i32) -> (i32, i32, i32) {
    %c0_i32 = arith.constant 0 : i32
    %c0_i32_0 = arith.constant 0 : i32
    %c0_i32_1 = arith.constant 0 : i32
    %c0_i32_2 = arith.constant 0 : i32
    return %c0_i32, %c0_i32_0, %c0_i32_1 : i32, i32, i32
  }
  func.func @transform_6(%arg0: i32) -> (i32, i32) {
    %c0_i32 = arith.constant 0 : i32
    %c0_i32_0 = arith.constant 0 : i32
    %c0_i32_1 = arith.constant 0 : i32
    return %c0_i32, %c0_i32_0 : i32, i32
  }
  func.func @transform_7(%arg0: i32) -> (i32, i32) {
    %c0_i32 = arith.constant 0 : i32
    %c0_i32_0 = arith.constant 0 : i32
    %c0_i32_1 = arith.constant 0 : i32
    return %c0_i32, %c0_i32_0 : i32, i32
  }
  func.func @transform_8(%arg0: i32) -> (i32, i32) {
    %c0_i32 = arith.constant 0 : i32
    %c0_i32_0 = arith.constant 0 : i32
    %c0_i32_1 = arith.constant 0 : i32
    return %c0_i32, %c0_i32_0 : i32, i32
  }
  func.func @transform_9(%arg0: i32) -> (i32, i32) {
    %c0_i32 = arith.constant 0 : i32
    %c0_i32_0 = arith.constant 0 : i32
    %c0_i32_1 = arith.constant 0 : i32
    return %c0_i32, %c0_i32_0 : i32, i32
  }
  func.func @transform_10(%arg0: i32) -> (i32, i32) {
    %c0_i32 = arith.constant 0 : i32
    %c0_i32_0 = arith.constant 0 : i32
    %c0_i32_1 = arith.constant 0 : i32
    return %c0_i32, %c0_i32_0 : i32, i32
  }
  func.func @transform_11(%arg0: i32) -> (i32, i32) {
    %c0_i32 = arith.constant 0 : i32
    %c0_i32_0 = arith.constant 0 : i32
    return %arg0, %c0_i32 : i32, i32
  }
}

</mosaic_0001>

<llo_original>
// kernel: tpu_custom_call.1
$region0: #{tpu_custom_call.1}
  #allocation0 [shape = 'u32[]', space=smem, size = 0x4, offset = 0x4, fixed_abs, tag = 'smem constant byte address 0x4 - core index']
  #allocation1 [shape = 'u32[144,128]{1,0:T(1,128)}', space=vmem, size = 0x12000, scoped, tag = 'internal scratch']
  %s0 = inlined_call_operand.hbm [shape: bf16[16,32], index: 0, kind: input, shape index: {}]
  %s1 = inlined_call_operand.hbm [shape: bf16[16,32], index: 1, kind: input, shape index: {}]
  %s2 = inlined_call_operand.hbm [shape: bf16[16,32], index: 2, kind: input, shape index: {}]
  %s3 = inlined_call_operand.vmem [shape: bf16[32,96], index: 3, kind: input, shape index: {}]
  %s4 = inlined_call_operand.vmem [shape: bf16[32,32], index: 4, kind: input, shape index: {}]
  %s5 = inlined_call_operand.vmem [shape: bf16[3,32,32], index: 5, kind: input, shape index: {}]
  %s6 = inlined_call_operand.hbm [shape: bf16[32,32], index: 6, kind: input, shape index: {}]
  %s7 = inlined_call_operand.hbm [shape: bf16[32,128], index: 7, kind: input, shape index: {}]
  %s8 = inlined_call_operand.vmem [shape: bf16[128,32], index: 8, kind: input, shape index: {}]
  %s9 = inlined_call_operand.vmem [shape: f32[1,128], index: 9, kind: input, shape index: {}]
  %s10 = inlined_call_operand.vmem [shape: f32[9,32], index: 10, kind: input, shape index: {}]
  %s11 = inlined_call_operand.hbm [shape: f32[16,32], index: 11, kind: output, shape index: {}]
  %s12 = sld [smem:[#allocation0]]
  $region97: #{tpu_custom_call.1} parent=0
    _
  %s14 = ssub.s32 1, %s12
  %s15 = scalar_select 0, %s14, %s12
  $region1: #{tpu_custom_call.1} parent=0
    #allocation2 [shape = 'u8[4096]{0}', space=vmem, size = 0x1000, scoped, tag = 'input window, operand 0']
    #allocation3 [shape = 's32[2]{0}', space=sflag, size = 0x8, scoped, tag = 'scoped memory for tpu_custom_call.1']
    #allocation4 [shape = 's32[2]{0}', space=sflag, size = 0x8, scoped, tag = 'scoped memory for tpu_custom_call.1']
    #allocation5 [shape = 'u8[4096]{0}', space=vmem, size = 0x1000, scoped, tag = 'input window, operand 1']
    #allocation6 [shape = 's32[2]{0}', space=sflag, size = 0x8, scoped, tag = 'scoped memory for tpu_custom_call.1']
    #allocation7 [shape = 'u8[4096]{0}', space=vmem, size = 0x1000, scoped, tag = 'input window, operand 2']
    #allocation8 [shape = 'u8[8192]{0}', space=vmem, size = 0x2000, scoped, tag = 'input window, operand 6, single buffered']
    #allocation9 [shape = 's32[1]{0}', space=sflag, size = 0x4, scoped, tag = 'scoped memory for tpu_custom_call.1']
    #allocation10 [shape = 'u8[8192]{0}', space=vmem, size = 0x2000, scoped, tag = 'input window, operand 7, single buffered']
    #allocation11 [shape = 'u8[8192]{0}', space=vmem, size = 0x2000, scoped, tag = 'output window, operand 0']
    %16 = vsyncpa [#allocation3], 0
    %s17 = scalar_lea.sflag [#allocation3], 1
    %18 = vsyncpa %s17, 0
    %19 = vsyncpa [#allocation6], 0
    %s20 = scalar_lea.sflag [#allocation6], 1
    %21 = vsyncpa %s20, 0
    %22 = vsyncpa [#allocation9], 0
    %23 = vsyncpa [#allocation4], 0
    %s24 = scalar_lea.sflag [#allocation4], 1
    %25 = vsyncpa %s24, 0
    loop: start=0, step=1, limit=4
    $region2: #{tpu_custom_call.1} parent=1 // loop_pre_header
      _
    $region3: #{tpu_custom_call.1} parent=1 // loop_header
      %s27 = sphi 0, %s31
      %p28 = scmp.ge.s32.totalorder %s27, 4
      %s37 = sphi 0, %s39
      %s40 = sphi 0, %s37
      %s41 = sphi 0, %s40
      %s57 = sphi 0, %s41
      %s63 = sphi 0, %s65
      %s66 = sphi 0, %s63
      %s67 = sphi 0, %s66
      %s83 = sphi 0, %s67
      %s89 = sphi 0, %s91
      %s92 = sphi 0, %s89
      %s93 = sphi 0, %s92
      %s109 = sphi 0, %s93
      %s113 = sphi 0, %s113
      %s115 = sphi 0, %s113
      %s116 = sphi 0, %s115
      %s130 = sphi 0, %s116
      %s134 = sphi 0, %s134
      %s136 = sphi 0, %s134
      %s137 = sphi 0, %s136
      %s151 = sphi 0, %s137
      %s155 = sphi 0, %s155
      %s157 = sphi 0, %s155
      %s158 = sphi 0, %s157
      %s172 = sphi 0, %s158
      %s176 = sphi 0, %s176
      %s178 = sphi 0, %s176
      %s179 = sphi 0, %s178
      %s193 = sphi 0, %s179
      %s197 = sphi 0, %s197
      %s199 = sphi 0, %s197
      %s200 = sphi 0, %s199
      %s214 = sphi 0, %s200
      %s218 = sphi 0, %s218
      %s220 = sphi 0, %s218
      %s221 = sphi 0, %s220
      %s235 = sphi 0, %s221
      %s239 = sphi 0, %s239
      %s241 = sphi 0, %s239
      %s242 = sphi 0, %s241
      %s256 = sphi 0, %s242
      %s260 = sphi 0, %s260
      %s262 = sphi 0, %s260
      %s263 = sphi 0, %s262
      %s277 = sphi 0, %s263
      %s283 = sphi 0, %s285
      %s286 = sphi 0, %s283
      %s287 = sphi 0, %s286
      %s303 = sphi 0, %s287
    $region4: #{tpu_custom_call.1} parent=1 // loop_header_branch
      %30 = sbr.rel (%p28) target = $region8
    $region5: #{tpu_custom_call.1} parent=1 // loop_body
      %s32 = ssub.s32 %s27, 1
      %s33 = ssub.s32 %s27, 2
      %s34 = sadd.s32 %s27, 1
      %s35 = ssub.s32 %s27, %s34
      %p36 = scmp.eq.s32.totalorder %s35, 0
      %s38 = sadd.s32 %s37, 1
      %s39 = scalar_select %p36, %s37, %s38
      %p42 = pneg %p36
      %p43 = scmp.eq.s32.totalorder %s27, 1
      %p44 = por %p42, %p43
      %p45 = scmp.ne.s32.totalorder %s37, %s40
      %p46 = scmp.eq.s32.totalorder %s27, 0
      %p47 = por %p45, %p46
      %p48 = scmp.ne.s32.totalorder %s37, %s40
      %p49 = scmp.eq.s32.totalorder %s32, 1
      %p50 = por %p48, %p49
      %p51 = scmp.ne.s32.totalorder %s40, %s41
      %p52 = scmp.eq.s32.totalorder %s32, 0
      %p53 = por %p51, %p52
      %p54 = scmp.ne.s32.totalorder %s40, %s41
      %p55 = scmp.eq.s32.totalorder %s33, 1
      %p56 = por %p54, %p55
      %p58 = scmp.ne.s32.totalorder %s41, %s57
      %p59 = scmp.eq.s32.totalorder %s33, 0
      %p60 = por %p58, %p59
      %s61 = ssub.s32 %s27, %s34
      %p62 = scmp.eq.s32.totalorder %s61, 0
      %s64 = sadd.s32 %s63, 1
      %s65 = scalar_select %p62, %s63, %s64
      %p68 = pneg %p62
      %p69 = scmp.eq.s32.totalorder %s27, 1
      %p70 = por %p68, %p69
      %p71 = scmp.ne.s32.totalorder %s63, %s66
      %p72 = scmp.eq.s32.totalorder %s27, 0
      %p73 = por %p71, %p72
      %p74 = scmp.ne.s32.totalorder %s63, %s66
      %p75 = scmp.eq.s32.totalorder %s32, 1
      %p76 = por %p74, %p75
      %p77 = scmp.ne.s32.totalorder %s66, %s67
      %p78 = scmp.eq.s32.totalorder %s32, 0
      %p79 = por %p77, %p78
      %p80 = scmp.ne.s32.totalorder %s66, %s67
      %p81 = scmp.eq.s32.totalorder %s33, 1
      %p82 = por %p80, %p81
      %p84 = scmp.ne.s32.totalorder %s67, %s83
      %p85 = scmp.eq.s32.totalorder %s33, 0
      %p86 = por %p84, %p85
      %s87 = ssub.s32 %s27, %s34
      %p88 = scmp.eq.s32.totalorder %s87, 0
      %s90 = sadd.s32 %s89, 1
      %s91 = scalar_select %p88, %s89, %s90
      %p94 = pneg %p88
      %p95 = scmp.eq.s32.totalorder %s27, 1
      %p96 = por %p94, %p95
      %p97 = scmp.ne.s32.totalorder %s89, %s92
      %p98 = scmp.eq.s32.totalorder %s27, 0
      %p99 = por %p97, %p98
      %p100 = scmp.ne.s32.totalorder %s89, %s92
      %p101 = scmp.eq.s32.totalorder %s32, 1
      %p102 = por %p100, %p101
      %p103 = scmp.ne.s32.totalorder %s92, %s93
      %p104 = scmp.eq.s32.totalorder %s32, 0
      %p105 = por %p103, %p104
      %p106 = scmp.ne.s32.totalorder %s92, %s93
      %p107 = scmp.eq.s32.totalorder %s33, 1
      %p108 = por %p106, %p107
      %p110 = scmp.ne.s32.totalorder %s93, %s109
      %p111 = scmp.eq.s32.totalorder %s33, 0
      %p112 = por %p110, %p111
      %s114 = sadd.s32 %s113, 1
      %p117 = scmp.eq.s32.totalorder %s27, 1
      %p118 = scmp.ne.s32.totalorder %s113, %s115
      %p119 = scmp.eq.s32.totalorder %s27, 0
      %p120 = por %p118, %p119
      %p121 = scmp.ne.s32.totalorder %s113, %s115
      %p122 = scmp.eq.s32.totalorder %s32, 1
      %p123 = por %p121, %p122
      %p124 = scmp.ne.s32.totalorder %s115, %s116
      %p125 = scmp.eq.s32.totalorder %s32, 0
      %p126 = por %p124, %p125
      %p127 = scmp.ne.s32.totalorder %s115, %s116
      %p128 = scmp.eq.s32.totalorder %s33, 1
      %p129 = por %p127, %p128
      %p131 = scmp.ne.s32.totalorder %s116, %s130
      %p132 = scmp.eq.s32.totalorder %s33, 0
      %p133 = por %p131, %p132
      %s135 = sadd.s32 %s134, 1
      %p138 = scmp.eq.s32.totalorder %s27, 1
      %p139 = scmp.ne.s32.totalorder %s134, %s136
      %p140 = scmp.eq.s32.totalorder %s27, 0
      %p141 = por %p139, %p140
      %p142 = scmp.ne.s32.totalorder %s134, %s136
      %p143 = scmp.eq.s32.totalorder %s32, 1
      %p144 = por %p142, %p143
      %p145 = scmp.ne.s32.totalorder %s136, %s137
      %p146 = scmp.eq.s32.totalorder %s32, 0
      %p147 = por %p145, %p146
      %p148 = scmp.ne.s32.totalorder %s136, %s137
      %p149 = scmp.eq.s32.totalorder %s33, 1
      %p150 = por %p148, %p149
      %p152 = scmp.ne.s32.totalorder %s137, %s151
      %p153 = scmp.eq.s32.totalorder %s33, 0
      %p154 = por %p152, %p153
      %s156 = sadd.s32 %s155, 1
      %p159 = scmp.eq.s32.totalorder %s27, 1
      %p160 = scmp.ne.s32.totalorder %s155, %s157
      %p161 = scmp.eq.s32.totalorder %s27, 0
      %p162 = por %p160, %p161
      %p163 = scmp.ne.s32.totalorder %s155, %s157
      %p164 = scmp.eq.s32.totalorder %s32, 1
      %p165 = por %p163, %p164
      %p166 = scmp.ne.s32.totalorder %s157, %s158
      %p167 = scmp.eq.s32.totalorder %s32, 0
      %p168 = por %p166, %p167
      %p169 = scmp.ne.s32.totalorder %s157, %s158
      %p170 = scmp.eq.s32.totalorder %s33, 1
      %p171 = por %p169, %p170
      %p173 = scmp.ne.s32.totalorder %s158, %s172
      %p174 = scmp.eq.s32.totalorder %s33, 0
      %p175 = por %p173, %p174
      %s177 = sadd.s32 %s176, 1
      %p180 = scmp.eq.s32.totalorder %s27, 1
      %p181 = scmp.ne.s32.totalorder %s176, %s178
      %p182 = scmp.eq.s32.totalorder %s27, 0
      %p183 = por %p181, %p182
      %p184 = scmp.ne.s32.totalorder %s176, %s178
      %p185 = scmp.eq.s32.totalorder %s32, 1
      %p186 = por %p184, %p185
      %p187 = scmp.ne.s32.totalorder %s178, %s179
      %p188 = scmp.eq.s32.totalorder %s32, 0
      %p189 = por %p187, %p188
      %p190 = scmp.ne.s32.totalorder %s178, %s179
      %p191 = scmp.eq.s32.totalorder %s33, 1
      %p192 = por %p190, %p191
      %p194 = scmp.ne.s32.totalorder %s179, %s193
      %p195 = scmp.eq.s32.totalorder %s33, 0
      %p196 = por %p194, %p195
      %s198 = sadd.s32 %s197, 1
      %p201 = scmp.eq.s32.totalorder %s27, 1
      %p202 = scmp.ne.s32.totalorder %s197, %s199
      %p203 = scmp.eq.s32.totalorder %s27, 0
      %p204 = por %p202, %p203
      %p205 = scmp.ne.s32.totalorder %s197, %s199
      %p206 = scmp.eq.s32.totalorder %s32, 1
      %p207 = por %p205, %p206
      %p208 = scmp.ne.s32.totalorder %s199, %s200
      %p209 = scmp.eq.s32.totalorder %s32, 0
      %p210 = por %p208, %p209
      %p211 = scmp.ne.s32.totalorder %s199, %s200
      %p212 = scmp.eq.s32.totalorder %s33, 1
      %p213 = por %p211, %p212
      %p215 = scmp.ne.s32.totalorder %s200, %s214
      %p216 = scmp.eq.s32.totalorder %s33, 0
      %p217 = por %p215, %p216
      %s219 = sadd.s32 %s218, 1
      %p222 = scmp.eq.s32.totalorder %s27, 1
      %p223 = scmp.ne.s32.totalorder %s218, %s220
      %p224 = scmp.eq.s32.totalorder %s27, 0
      %p225 = por %p223, %p224
      %p226 = scmp.ne.s32.totalorder %s218, %s220
      %p227 = scmp.eq.s32.totalorder %s32, 1
      %p228 = por %p226, %p227
      %p229 = scmp.ne.s32.totalorder %s220, %s221
      %p230 = scmp.eq.s32.totalorder %s32, 0
      %p231 = por %p229, %p230
      %p232 = scmp.ne.s32.totalorder %s220, %s221
      %p233 = scmp.eq.s32.totalorder %s33, 1
      %p234 = por %p232, %p233
      %p236 = scmp.ne.s32.totalorder %s221, %s235
      %p237 = scmp.eq.s32.totalorder %s33, 0
      %p238 = por %p236, %p237
      %s240 = sadd.s32 %s239, 1
      %p243 = scmp.eq.s32.totalorder %s27, 1
      %p244 = scmp.ne.s32.totalorder %s239, %s241
      %p245 = scmp.eq.s32.totalorder %s27, 0
      %p246 = por %p244, %p245
      %p247 = scmp.ne.s32.totalorder %s239, %s241
      %p248 = scmp.eq.s32.totalorder %s32, 1
      %p249 = por %p247, %p248
      %p250 = scmp.ne.s32.totalorder %s241, %s242
      %p251 = scmp.eq.s32.totalorder %s32, 0
      %p252 = por %p250, %p251
      %p253 = scmp.ne.s32.totalorder %s241, %s242
      %p254 = scmp.eq.s32.totalorder %s33, 1
      %p255 = por %p253, %p254
      %p257 = scmp.ne.s32.totalorder %s242, %s256
      %p258 = scmp.eq.s32.totalorder %s33, 0
      %p259 = por %p257, %p258
      %s261 = sadd.s32 %s260, 1
      %p264 = scmp.eq.s32.totalorder %s27, 1
      %p265 = scmp.ne.s32.totalorder %s260, %s262
      %p266 = scmp.eq.s32.totalorder %s27, 0
      %p267 = por %p265, %p266
      %p268 = scmp.ne.s32.totalorder %s260, %s262
      %p269 = scmp.eq.s32.totalorder %s32, 1
      %p270 = por %p268, %p269
      %p271 = scmp.ne.s32.totalorder %s262, %s263
      %p272 = scmp.eq.s32.totalorder %s32, 0
      %p273 = por %p271, %p272
      %p274 = scmp.ne.s32.totalorder %s262, %s263
      %p275 = scmp.eq.s32.totalorder %s33, 1
      %p276 = por %p274, %p275
      %p278 = scmp.ne.s32.totalorder %s263, %s277
      %p279 = scmp.eq.s32.totalorder %s33, 0
      %p280 = por %p278, %p279
      %s281 = ssub.s32 %s27, %s34
      %p282 = scmp.eq.s32.totalorder %s281, 0
      %s284 = sadd.s32 %s283, 1
      %s285 = scalar_select %p282, %s283, %s284
      %p288 = pneg %p282
      %p289 = scmp.eq.s32.totalorder %s27, 1
      %p290 = por %p288, %p289
      %p291 = scmp.ne.s32.totalorder %s283, %s286
      %p292 = scmp.eq.s32.totalorder %s27, 0
      %p293 = por %p291, %p292
      %p294 = scmp.ne.s32.totalorder %s283, %s286
      %p295 = scmp.eq.s32.totalorder %s32, 1
      %p296 = por %p294, %p295
      %p297 = scmp.ne.s32.totalorder %s286, %s287
      %p298 = scmp.eq.s32.totalorder %s32, 0
      %p299 = por %p297, %p298
      %p300 = scmp.ne.s32.totalorder %s286, %s287
      %p301 = scmp.eq.s32.totalorder %s33, 1
      %p302 = por %p300, %p301
      %p304 = scmp.ne.s32.totalorder %s287, %s303
      %p305 = scmp.eq.s32.totalorder %s33, 0
      %p306 = por %p304, %p305
      %p307 = scmp.le.s32.totalorder 1, %s27
      %p308 = scmp.lt.s32.totalorder %s27, 3
      %p309 = pnand %p307, %p308
      %p310 = pneg %p309
      // Predicated region
      $region9: #{tpu_custom_call.1} parent=5 // pred_check
        _
      $region10: #{tpu_custom_call.1} parent=5 // pred_check_branch
        %312 = sbr.rel (%p309) target = $region12
      $region11: #{tpu_custom_call.1} parent=5 // pred_region
        %s313 = ssub.s32 %s27, 1
        // Predicated region
        $region13: #{tpu_custom_call.1} parent=11 // pred_check
          %p314 = pneg %p126
        $region14: #{tpu_custom_call.1} parent=11 // pred_check_branch
          %316 = sbr.rel (%p314) target = $region16
        $region15: #{tpu_custom_call.1} parent=11 // pred_region
          _
        $region16: #{tpu_custom_call.1} parent=11 // pred_fallthru
          _
        // Predicated region
        $region17: #{tpu_custom_call.1} parent=11 // pred_check
          %p317 = pneg %p147
        $region18: #{tpu_custom_call.1} parent=11 // pred_check_branch
          %319 = sbr.rel (%p317) target = $region20
        $region19: #{tpu_custom_call.1} parent=11 // pred_region
          _
        $region20: #{tpu_custom_call.1} parent=11 // pred_fallthru
          _
        // Predicated region
        $region21: #{tpu_custom_call.1} parent=11 // pred_check
          %p320 = pneg %p168
        $region22: #{tpu_custom_call.1} parent=11 // pred_check_branch
          %322 = sbr.rel (%p320) target = $region24
        $region23: #{tpu_custom_call.1} parent=11 // pred_region
          _
        $region24: #{tpu_custom_call.1} parent=11 // pred_fallthru
          _
        // Predicated region
        $region25: #{tpu_custom_call.1} parent=11 // pred_check
          %p323 = pneg %p189
        $region26: #{tpu_custom_call.1} parent=11 // pred_check_branch
          %325 = sbr.rel (%p323) target = $region28
        $region27: #{tpu_custom_call.1} parent=11 // pred_region
          %s327 = ssub.s32 256, 256
          %328 = vsyncadd [#allocation9], %s327
          %s329 = sshll.u32 [#allocation8], 4
          %s330 = int_to_ptr.vmem [resolvable:$true] %s329
          %335 = dma.hbm_to_vmem [thread:$0]  %s6, 256, %s330, [#allocation9], 64, 64, 4
        $region28: #{tpu_custom_call.1} parent=11 // pred_fallthru
          _
        // Predicated region
        $region29: #{tpu_custom_call.1} parent=11 // pred_check
          %p336 = pneg %p210
        $region30: #{tpu_custom_call.1} parent=11 // pred_check_branch
          %338 = sbr.rel (%p336) target = $region32
        $region31: #{tpu_custom_call.1} parent=11 // pred_region
          %s340 = ssub.s32 256, 256
          %341 = vsyncadd [#allocation9], %s340
          %s342 = sshll.u32 [#allocation10], 4
          %s343 = int_to_ptr.vmem [resolvable:$true] %s342
          %348 = dma.hbm_to_vmem [thread:$0]  %s7, 256, %s343, [#allocation9], 64, 64, 4
        $region32: #{tpu_custom_call.1} parent=11 // pred_fallthru
          _
        // Predicated region
        $region33: #{tpu_custom_call.1} parent=11 // pred_check
          %p349 = pneg %p231
        $region34: #{tpu_custom_call.1} parent=11 // pred_check_branch
          %351 = sbr.rel (%p349) target = $region36
        $region35: #{tpu_custom_call.1} parent=11 // pred_region
          _
        $region36: #{tpu_custom_call.1} parent=11 // pred_fallthru
          _
        // Predicated region
        $region37: #{tpu_custom_call.1} parent=11 // pred_check
          %p352 = pneg %p252
        $region38: #{tpu_custom_call.1} parent=11 // pred_check_branch
          %354 = sbr.rel (%p352) target = $region40
        $region39: #{tpu_custom_call.1} parent=11 // pred_region
          _
        $region40: #{tpu_custom_call.1} parent=11 // pred_fallthru
          _
        // Predicated region
        $region41: #{tpu_custom_call.1} parent=11 // pred_check
          %p355 = pneg %p273
        $region42: #{tpu_custom_call.1} parent=11 // pred_check_branch
          %357 = sbr.rel (%p355) target = $region44
        $region43: #{tpu_custom_call.1} parent=11 // pred_region
          _
        $region44: #{tpu_custom_call.1} parent=11 // pred_fallthru
          _
      $region12: #{tpu_custom_call.1} parent=5 // pred_fallthru
        _
      %p358 = scmp.lt.s32.totalorder %s27, 2
      // Predicated region
      $region45: #{tpu_custom_call.1} parent=5 // pred_check
        %p359 = pneg %p358
      $region46: #{tpu_custom_call.1} parent=5 // pred_check_branch
        %361 = sbr.rel (%p359) target = $region48
      $region47: #{tpu_custom_call.1} parent=5 // pred_region
        // Predicated region
        $region49: #{tpu_custom_call.1} parent=47 // pred_check
          %p362 = pneg %p47
        $region50: #{tpu_custom_call.1} parent=47 // pred_check_branch
          %364 = sbr.rel (%p362) target = $region52
        $region51: #{tpu_custom_call.1} parent=47 // pred_region
          %s365 = sand.u32 %s37, 1
          %s366 = scalar_lea.sflag [#allocation3], %s365
          %s367 = sand.u32 %s37, 1
          %s368 = smul.addr %s367, 4
          %s369 = scalar_lea.vmem [#allocation2], %s368
          %s371 = ssub.s32 64, 64
          %372 = vsyncadd %s366, %s371
          %s373 = smul.addr %s27, 64
          %s374 = scalar_lea.hbm %s0, %s373
          %s376 = sshll.u32 %s369, 4
          %s377 = int_to_ptr.vmem [resolvable:$true] %s376
          %379 = dma.hbm_to_vmem [thread:$0]  %s374, 64, %s377, %s366
        $region52: #{tpu_custom_call.1} parent=47 // pred_fallthru
          _
        // Predicated region
        $region53: #{tpu_custom_call.1} parent=47 // pred_check
          %p380 = pneg %p73
        $region54: #{tpu_custom_call.1} parent=47 // pred_check_branch
          %382 = sbr.rel (%p380) target = $region56
        $region55: #{tpu_custom_call.1} parent=47 // pred_region
          %s383 = sand.u32 %s27, 1
          %s384 = scalar_lea.sflag [#allocation6], %s383
          %s385 = sand.u32 %s63, 1
          %s386 = smul.addr %s385, 4
          %s387 = scalar_lea.vmem [#allocation5], %s386
          %s389 = ssub.s32 64, 64
          %390 = vsyncadd %s384, %s389
          %s391 = smul.addr %s27, 64
          %s392 = scalar_lea.hbm %s1, %s391
          %s394 = sshll.u32 %s387, 4
          %s395 = int_to_ptr.vmem [resolvable:$true] %s394
          %397 = dma.hbm_to_vmem [thread:$0]  %s392, 64, %s395, %s384
        $region56: #{tpu_custom_call.1} parent=47 // pred_fallthru
          _
        // Predicated region
        $region57: #{tpu_custom_call.1} parent=47 // pred_check
          %p398 = pneg %p99
        $region58: #{tpu_custom_call.1} parent=47 // pred_check_branch
          %400 = sbr.rel (%p398) target = $region60
        $region59: #{tpu_custom_call.1} parent=47 // pred_region
          %s401 = sand.u32 %s27, 1
          %s402 = scalar_lea.sflag [#allocation6], %s401
          %s403 = sand.u32 %s89, 1
          %s404 = smul.addr %s403, 4
          %s405 = scalar_lea.vmem [#allocation7], %s404
          %s407 = ssub.s32 64, 64
          %408 = vsyncadd %s402, %s407
          %s409 = smul.addr %s27, 64
          %s410 = scalar_lea.hbm %s2, %s409
          %s412 = sshll.u32 %s405, 4
          %s413 = int_to_ptr.vmem [resolvable:$true] %s412
          %415 = dma.hbm_to_vmem [thread:$0]  %s410, 64, %s413, %s402
        $region60: #{tpu_custom_call.1} parent=47 // pred_fallthru
          _
      $region48: #{tpu_custom_call.1} parent=5 // pred_fallthru
        _
      %p416 = scmp.le.s32.totalorder 1, %s27
      %p417 = scmp.lt.s32.totalorder %s27, 3
      %p418 = pnand %p416, %p417
      %p419 = pneg %p418
      // Predicated region
      $region61: #{tpu_custom_call.1} parent=5 // pred_check
        _
      $region62: #{tpu_custom_call.1} parent=5 // pred_check_branch
        %421 = sbr.rel (%p418) target = $region64
      $region63: #{tpu_custom_call.1} parent=5 // pred_region
        %s422 = ssub.s32 %s27, 1
        %s423 = sand.u32 %s40, 1
        %s424 = scalar_lea.sflag [#allocation3], %s423
        %s425 = sand.u32 %s40, 1
        %s426 = smul.addr %s425, 4
        %s427 = scalar_lea.vmem [#allocation2], %s426
        // Predicated region
        $region65: #{tpu_custom_call.1} parent=63 // pred_check
          %p428 = pneg %p53
        $region66: #{tpu_custom_call.1} parent=63 // pred_check_branch
          %430 = sbr.rel (%p428) target = $region68
        $region67: #{tpu_custom_call.1} parent=63 // pred_region
          %431 = dma.done %s424, 64
        $region68: #{tpu_custom_call.1} parent=63 // pred_fallthru
          _
        %s432 = sand.u32 %s32, 1
        %s433 = scalar_lea.sflag [#allocation6], %s432
        %s434 = sand.u32 %s66, 1
        %s435 = smul.addr %s434, 4
        %s436 = scalar_lea.vmem [#allocation5], %s435
        // Predicated region
        $region69: #{tpu_custom_call.1} parent=63 // pred_check
          %p437 = pneg %p79
        $region70: #{tpu_custom_call.1} parent=63 // pred_check_branch
          %439 = sbr.rel (%p437) target = $region72
        $region71: #{tpu_custom_call.1} parent=63 // pred_region
          %440 = dma.done %s433, 64
        $region72: #{tpu_custom_call.1} parent=63 // pred_fallthru
          _
        %s441 = sand.u32 %s32, 1
        %s442 = scalar_lea.sflag [#allocation6], %s441
        %s443 = sand.u32 %s92, 1
        %s444 = smul.addr %s443, 4
        %s445 = scalar_lea.vmem [#allocation7], %s444
        // Predicated region
        $region73: #{tpu_custom_call.1} parent=63 // pred_check
          %p446 = pneg %p105
        $region74: #{tpu_custom_call.1} parent=63 // pred_check_branch
          %448 = sbr.rel (%p446) target = $region76
        $region75: #{tpu_custom_call.1} parent=63 // pred_region
          %449 = dma.done %s442, 64
        $region76: #{tpu_custom_call.1} parent=63 // pred_fallthru
          _
        // Predicated region
        $region77: #{tpu_custom_call.1} parent=63 // pred_check
          %p450 = pneg %p189
        $region78: #{tpu_custom_call.1} parent=63 // pred_check_branch
          %452 = sbr.rel (%p450) target = $region80
        $region79: #{tpu_custom_call.1} parent=63 // pred_region
          %453 = dma.done [#allocation9], 256
        $region80: #{tpu_custom_call.1} parent=63 // pred_fallthru
          _
        // Predicated region
        $region81: #{tpu_custom_call.1} parent=63 // pred_check
          %p454 = pneg %p210
        $region82: #{tpu_custom_call.1} parent=63 // pred_check_branch
          %456 = sbr.rel (%p454) target = $region84
        $region83: #{tpu_custom_call.1} parent=63 // pred_region
          %457 = dma.done [#allocation9], 256
        $region84: #{tpu_custom_call.1} parent=63 // pred_fallthru
          _
        %s458 = sand.u32 %s40, 1
        %s459 = scalar_lea.sflag [#allocation3], %s458
        %s460 = sand.u32 %s40, 1
        %s461 = smul.addr %s460, 4
        %s462 = scalar_lea.vmem [#allocation2], %s461
        %p463 = pneg %p53
        %p464 = pneg %p50
        %s465 = sand.u32 %s32, 1
        %s466 = scalar_lea.sflag [#allocation6], %s465
        %s467 = sand.u32 %s66, 1
        %s468 = smul.addr %s467, 4
        %s469 = scalar_lea.vmem [#allocation5], %s468
        %p470 = pneg %p79
        %p471 = pneg %p76
        %s472 = sand.u32 %s32, 1
        %s473 = scalar_lea.sflag [#allocation6], %s472
        %s474 = sand.u32 %s92, 1
        %s475 = smul.addr %s474, 4
        %s476 = scalar_lea.vmem [#allocation7], %s475
        %p477 = pneg %p105
        %p478 = pneg %p102
        %p479 = pneg %p126
        %p480 = pneg %p123
        %p481 = pneg %p147
        %p482 = pneg %p144
        %p483 = pneg %p168
        %p484 = pneg %p165
        %p485 = pneg %p189
        %p486 = pneg %p186
        %p487 = pneg %p210
        %p488 = pneg %p207
        %p489 = pneg %p231
        %p490 = pneg %p228
        %p491 = pneg %p252
        %p492 = pneg %p249
        %p493 = pneg %p273
        %p494 = pneg %p270
        %p495 = pneg %p299
        %p496 = pneg %p296
        %s497 = sand.u32 %s286, 1
        %s498 = scalar_lea.sflag [#allocation4], %s497
        %s499 = sand.u32 %s286, 1
        %s500 = smul.addr %s499, 8
        %s501 = scalar_lea.vmem [#allocation11], %s500
        %v503 = vld [vmem:[%s427] sm:$0xf]
        %v504 = vunpack.c.l.bf16 %v503
        %v505 = vld [vmem:[%s10] sm:$0xff]
        %v506 = vld [vmem:[%s10 + $0x8] sm:$0x1]
        %v507 = vld [vmem:[%s9] sm:$0x1]
        %v508 = vlaneseq
        %v509 = vshrl.u32 %v508, 7
        %v510 = vlaneseq
        %v511 = vand.u32 %v510, 127
        %vm512 = vcmp.ge.s32.totalorder %v509, %v511
        %v513 = vsel %vm512, 0.0, -1e+30
        %v514 = vld [vmem:[%s3] sm:$0xf]
        %v515 = vld [vmem:[%s3 + $0x4] sm:$0xf]
        %v516 = vld [vmem:[%s3 + $0x8] sm:$0xf]
        %v517 = vld [vmem:[%s3 + $0xc] sm:$0xf]
        %v522 = vunpack.c.l.b16 %v514
        %v523 = vunpack.c.l.b16 %v515
        %v524 = vunpack.c.l.b16 %v516
        %v525 = vunpack.c.l.b16 %v517
        %v526 = vpack.c.b16 %v523, %v522
        %v527 = vpack.c.b16 %v525, %v524
        %vm530 = vcmask 261120
        %v532 = vsel %vm530, %v503, 0
        %534 = vmatprep.subr.bf16.mxu0 0
        %535 = vmatpush1.bf16.msra.mxu0 %v526
        %536 = vmatprep.subr.bf16.mxu0 0
        %537 = vmatpush1.bf16.msra.mxu0 %v527
        %538 = vmatprep.subr.bf16.mxu0 0
        %539 = vmatpush1.bf16.msra.mxu0 0
        %540 = vmatprep.subr.bf16.mxu0 0
        %541 = vmatpush1.bf16.msra.mxu0 0
        %542 = vmatprep.subr.bf16.mxu0 0
        %543 = vmatpush1.bf16.msra.mxu0 0
        %544 = vmatprep.subr.bf16.mxu0 0
        %545 = vmatpush1.bf16.msra.mxu0 0
        %546 = vmatprep.subr.bf16.mxu0 0
        %547 = vmatpush1.bf16.msra.mxu0 0
        %548 = vmatprep.subr.bf16.mxu0 0
        %549 = vmatpush1.bf16.msra.mxu0 0
        %550 = vmatprep.subr.bf16.mxu0 0
        %551 = vmatpush1.bf16.msra.mxu0 0
        %552 = vmatprep.subr.bf16.mxu0 0
        %553 = vmatpush1.bf16.msra.mxu0 0
        %554 = vmatprep.subr.bf16.mxu0 0
        %555 = vmatpush1.bf16.msra.mxu0 0
        %556 = vmatprep.subr.bf16.mxu0 0
        %557 = vmatpush1.bf16.msra.mxu0 0
        %558 = vmatprep.subr.bf16.mxu0 0
        %559 = vmatpush1.bf16.msra.mxu0 0
        %560 = vmatprep.subr.bf16.mxu0 0
        %561 = vmatpush1.bf16.msra.mxu0 0
        %562 = vmatprep.subr.bf16.mxu0 0
        %563 = vmatpush1.bf16.msra.mxu0 0
        %564 = vmatprep.subr.bf16.mxu0 0
        %565 = vmatpush1.bf16.msra.mxu0 0
        %566 = vmatprep.mubr.bf16.mxu0 0
        %567 = vmatmul.mubr.bf16.gmra.mrb[0].mxu0 %v532
        %v568 = vpop.f32.mrb[0].mxu0
        %v569 = vadd.f32 0.0, %v568
        %v570 = vpop.f32.mrb[0].mxu0
        %v571 = vpop.f32.mrb[0].mxu0
        %v572 = vpop.f32.mrb[0].mxu0
        %573 = vdwg.mxu0
        %v574 = vpack.c.bf16 %v569, %v569
        %576 = vrot.lane.b32.xlu0 %v574, 96
        %v577 = vpop.permute.xlu0 %576
        %vm578 = vcmask 64512
        %v580 = vsel %vm578, %v574, 0
        %v583 = vsel %vm578, %v577, 0
        %585 = vmatprep.subr.bf16.mxu0 0
        %586 = vmatpush1.bf16.xpose.msra.mxu0 %v583
        %587 = vmatprep.subr.bf16.mxu0 0
        %588 = vmatpush1.bf16.xpose.msra.mxu0 0
        %589 = vmatprep.subr.bf16.mxu0 0
        %590 = vmatpush1.bf16.xpose.msra.mxu0 0
        %591 = vmatprep.subr.bf16.mxu0 0
        %592 = vmatpush1.bf16.xpose.msra.mxu0 0
        %593 = vmatprep.subr.bf16.mxu0 0
        %594 = vmatpush1.bf16.xpose.msra.mxu0 0
        %595 = vmatprep.subr.bf16.mxu0 0
        %596 = vmatpush1.bf16.xpose.msra.mxu0 0
        %597 = vmatprep.subr.bf16.mxu0 0
        %598 = vmatpush1.bf16.xpose.msra.mxu0 0
        %599 = vmatprep.subr.bf16.mxu0 0
        %600 = vmatpush1.bf16.xpose.msra.mxu0 0
        %601 = vmatprep.subr.bf16.mxu0 0
        %602 = vmatpush1.bf16.xpose.msra.mxu0 0
        %603 = vmatprep.subr.bf16.mxu0 0
        %604 = vmatpush1.bf16.xpose.msra.mxu0 0
        %605 = vmatprep.subr.bf16.mxu0 0
        %606 = vmatpush1.bf16.xpose.msra.mxu0 0
        %607 = vmatprep.subr.bf16.mxu0 0
        %608 = vmatpush1.bf16.xpose.msra.mxu0 0
        %609 = vmatprep.subr.bf16.mxu0 0
        %610 = vmatpush1.bf16.xpose.msra.mxu0 0
        %611 = vmatprep.subr.bf16.mxu0 0
        %612 = vmatpush1.bf16.xpose.msra.mxu0 0
        %613 = vmatprep.subr.bf16.mxu0 0
        %614 = vmatpush1.bf16.xpose.msra.mxu0 0
        %615 = vmatprep.subr.bf16.mxu0 0
        %616 = vmatpush1.bf16.xpose.msra.mxu0 0
        %617 = vmatprep.mubr.bf16.mxu0 0
        %618 = vmatmul.mubr.bf16.gmra.mrb[0].mxu0 %v580
        %v619 = vpop.f32.mrb[0].mxu0
        %v620 = vadd.f32 %v513, %v619
        %v621 = vpop.f32.mrb[0].mxu0
        %v622 = vpop.f32.mrb[0].mxu0
        %v623 = vpop.f32.mrb[0].mxu0
        %624 = vdwg.mxu0
        %v625 = vsel %vm578, %v620, -inf
        %626 = vmax.xlane.f32.xlu0 %v625
        %v627 = vpop.xlane.xlu0 %626
        %v628 = vsub.f32 %v620, %v627
        %v629 = vmul.f32 %v628, 1.442695
        %v630 = vpow.pop %v629
        %v631 = vsel %vm578, %v630, 0.0
        %632 = vadd.xlane.f32.xlu0 %v631
        %v633 = vpop.xlane.xlu0 %632
        %v634 = vrcp.pop %v633
        %v635 = vmul.f32 %v630, %v634
        %v636 = vpack.c.bf16 %v635, %v635
        %637 = vrot.lane.b32.xlu0 %v574, 64
        %v638 = vpop.permute.xlu0 %637
        %v640 = vsel %vm578, %v636, 0
        %vm642 = vcmask 1043456
        %v644 = vsel %vm642, %v638, 0
        %646 = vmatprep.subr.bf16.mxu0 0
        %647 = vmatpush1.bf16.msra.mxu0 %v644
        %648 = vmatprep.subr.bf16.mxu0 0
        %649 = vmatpush1.bf16.msra.mxu0 0
        %650 = vmatprep.subr.bf16.mxu0 0
        %651 = vmatpush1.bf16.msra.mxu0 0
        %652 = vmatprep.subr.bf16.mxu0 0
        %653 = vmatpush1.bf16.msra.mxu0 0
        %654 = vmatprep.subr.bf16.mxu0 0
        %655 = vmatpush1.bf16.msra.mxu0 0
        %656 = vmatprep.subr.bf16.mxu0 0
        %657 = vmatpush1.bf16.msra.mxu0 0
        %658 = vmatprep.subr.bf16.mxu0 0
        %659 = vmatpush1.bf16.msra.mxu0 0
        %660 = vmatprep.subr.bf16.mxu0 0
        %661 = vmatpush1.bf16.msra.mxu0 0
        %662 = vmatprep.subr.bf16.mxu0 0
        %663 = vmatpush1.bf16.msra.mxu0 0
        %664 = vmatprep.subr.bf16.mxu0 0
        %665 = vmatpush1.bf16.msra.mxu0 0
        %666 = vmatprep.subr.bf16.mxu0 0
        %667 = vmatpush1.bf16.msra.mxu0 0
        %668 = vmatprep.subr.bf16.mxu0 0
        %669 = vmatpush1.bf16.msra.mxu0 0
        %670 = vmatprep.subr.bf16.mxu0 0
        %671 = vmatpush1.bf16.msra.mxu0 0
        %672 = vmatprep.subr.bf16.mxu0 0
        %673 = vmatpush1.bf16.msra.mxu0 0
        %674 = vmatprep.subr.bf16.mxu0 0
        %675 = vmatpush1.bf16.msra.mxu0 0
        %676 = vmatprep.subr.bf16.mxu0 0
        %677 = vmatpush1.bf16.msra.mxu0 0
        %678 = vmatprep.mubr.bf16.mxu0 0
        %679 = vmatmul.mubr.bf16.gmra.mrb[0].mxu0 %v640
        %v680 = vpop.f32.mrb[0].mxu0
        %v681 = vadd.f32 0.0, %v680
        %v682 = vpop.f32.mrb[0].mxu0
        %v683 = vpop.f32.mrb[0].mxu0
        %v684 = vpop.f32.mrb[0].mxu0
        %685 = vdwg.mxu0
        %686 = vrot.lane.b32.xlu0 %v574, 120
        %v687 = vpop.permute.xlu0 %686
        %688 = vrot.lane.b32.xlu0 %v574, 88
        %v689 = vpop.permute.xlu0 %688
        %v691 = vsel %vm578, %v687, 0
        %v694 = vsel %vm578, %v689, 0
        %696 = vmatprep.subr.bf16.mxu0 0
        %697 = vmatpush1.bf16.xpose.msra.mxu0 %v694
        %698 = vmatprep.subr.bf16.mxu0 0
        %699 = vmatpush1.bf16.xpose.msra.mxu0 0
        %700 = vmatprep.subr.bf16.mxu0 0
        %701 = vmatpush1.bf16.xpose.msra.mxu0 0
        %702 = vmatprep.subr.bf16.mxu0 0
        %703 = vmatpush1.bf16.xpose.msra.mxu0 0
        %704 = vmatprep.subr.bf16.mxu0 0
        %705 = vmatpush1.bf16.xpose.msra.mxu0 0
        %706 = vmatprep.subr.bf16.mxu0 0
        %707 = vmatpush1.bf16.xpose.msra.mxu0 0
        %708 = vmatprep.subr.bf16.mxu0 0
        %709 = vmatpush1.bf16.xpose.msra.mxu0 0
        %710 = vmatprep.subr.bf16.mxu0 0
        %711 = vmatpush1.bf16.xpose.msra.mxu0 0
        %712 = vmatprep.subr.bf16.mxu0 0
        %713 = vmatpush1.bf16.xpose.msra.mxu0 0
        %714 = vmatprep.subr.bf16.mxu0 0
        %715 = vmatpush1.bf16.xpose.msra.mxu0 0
        %716 = vmatprep.subr.bf16.mxu0 0
        %717 = vmatpush1.bf16.xpose.msra.mxu0 0
        %718 = vmatprep.subr.bf16.mxu0 0
        %719 = vmatpush1.bf16.xpose.msra.mxu0 0
        %720 = vmatprep.subr.bf16.mxu0 0
        %721 = vmatpush1.bf16.xpose.msra.mxu0 0
        %722 = vmatprep.subr.bf16.mxu0 0
        %723 = vmatpush1.bf16.xpose.msra.mxu0 0
        %724 = vmatprep.subr.bf16.mxu0 0
        %725 = vmatpush1.bf16.xpose.msra.mxu0 0
        %726 = vmatprep.subr.bf16.mxu0 0
        %727 = vmatpush1.bf16.xpose.msra.mxu0 0
        %728 = vmatprep.mubr.bf16.mxu0 0
        %729 = vmatmul.mubr.bf16.gmra.mrb[0].mxu0 %v691
        %v730 = vpop.f32.mrb[0].mxu0
        %v731 = vadd.f32 %v513, %v730
        %v732 = vpop.f32.mrb[0].mxu0
        %v733 = vpop.f32.mrb[0].mxu0
        %v734 = vpop.f32.mrb[0].mxu0
        %735 = vdwg.mxu0
        %v736 = vsel %vm578, %v731, -inf
        %737 = vmax.xlane.f32.xlu0 %v736
        %v738 = vpop.xlane.xlu0 %737
        %v739 = vsub.f32 %v731, %v738
        %v740 = vmul.f32 %v739, 1.442695
        %v741 = vpow.pop %v740
        %v742 = vsel %vm578, %v741, 0.0
        %743 = vadd.xlane.f32.xlu0 %v742
        %v744 = vpop.xlane.xlu0 %743
        %v745 = vrcp.pop %v744
        %v746 = vmul.f32 %v741, %v745
        %v747 = vpack.c.bf16 %v746, %v746
        %748 = vrot.lane.b32.xlu0 %v574, 56
        %v749 = vpop.permute.xlu0 %748
        %v751 = vsel %vm578, %v747, 0
        %v754 = vsel %vm642, %v749, 0
        %756 = vmatprep.subr.bf16.mxu0 0
        %757 = vmatpush1.bf16.msra.mxu0 %v754
        %758 = vmatprep.subr.bf16.mxu0 0
        %759 = vmatpush1.bf16.msra.mxu0 0
        %760 = vmatprep.subr.bf16.mxu0 0
        %761 = vmatpush1.bf16.msra.mxu0 0
        %762 = vmatprep.subr.bf16.mxu0 0
        %763 = vmatpush1.bf16.msra.mxu0 0
        %764 = vmatprep.subr.bf16.mxu0 0
        %765 = vmatpush1.bf16.msra.mxu0 0
        %766 = vmatprep.subr.bf16.mxu0 0
        %767 = vmatpush1.bf16.msra.mxu0 0
        %768 = vmatprep.subr.bf16.mxu0 0
        %769 = vmatpush1.bf16.msra.mxu0 0
        %770 = vmatprep.subr.bf16.mxu0 0
        %771 = vmatpush1.bf16.msra.mxu0 0
        %772 = vmatprep.subr.bf16.mxu0 0
        %773 = vmatpush1.bf16.msra.mxu0 0
        %774 = vmatprep.subr.bf16.mxu0 0
        %775 = vmatpush1.bf16.msra.mxu0 0
        %776 = vmatprep.subr.bf16.mxu0 0
        %777 = vmatpush1.bf16.msra.mxu0 0
        %778 = vmatprep.subr.bf16.mxu0 0
        %779 = vmatpush1.bf16.msra.mxu0 0
        %780 = vmatprep.subr.bf16.mxu0 0
        %781 = vmatpush1.bf16.msra.mxu0 0
        %782 = vmatprep.subr.bf16.mxu0 0
        %783 = vmatpush1.bf16.msra.mxu0 0
        %784 = vmatprep.subr.bf16.mxu0 0
        %785 = vmatpush1.bf16.msra.mxu0 0
        %786 = vmatprep.subr.bf16.mxu0 0
        %787 = vmatpush1.bf16.msra.mxu0 0
        %788 = vmatprep.mubr.bf16.mxu0 0
        %789 = vmatmul.mubr.bf16.gmra.mrb[0].mxu0 %v751
        %v790 = vpop.f32.mrb[0].mxu0
        %v791 = vadd.f32 0.0, %v790
        %v792 = vpop.f32.mrb[0].mxu0
        %v793 = vpop.f32.mrb[0].mxu0
        %v794 = vpop.f32.mrb[0].mxu0
        %795 = vdwg.mxu0
        %796 = vrot.lane.b32.xlu0 %v574, 112
        %v797 = vpop.permute.xlu0 %796
        %798 = vrot.lane.b32.xlu0 %v574, 80
        %v799 = vpop.permute.xlu0 %798
        %v801 = vsel %vm578, %v797, 0
        %v804 = vsel %vm578, %v799, 0
        %806 = vmatprep.subr.bf16.mxu0 0
        %807 = vmatpush1.bf16.xpose.msra.mxu0 %v804
        %808 = vmatprep.subr.bf16.mxu0 0
        %809 = vmatpush1.bf16.xpose.msra.mxu0 0
        %810 = vmatprep.subr.bf16.mxu0 0
        %811 = vmatpush1.bf16.xpose.msra.mxu0 0
        %812 = vmatprep.subr.bf16.mxu0 0
        %813 = vmatpush1.bf16.xpose.msra.mxu0 0
        %814 = vmatprep.subr.bf16.mxu0 0
        %815 = vmatpush1.bf16.xpose.msra.mxu0 0
        %816 = vmatprep.subr.bf16.mxu0 0
        %817 = vmatpush1.bf16.xpose.msra.mxu0 0
        %818 = vmatprep.subr.bf16.mxu0 0
        %819 = vmatpush1.bf16.xpose.msra.mxu0 0
        %820 = vmatprep.subr.bf16.mxu0 0
        %821 = vmatpush1.bf16.xpose.msra.mxu0 0
        %822 = vmatprep.subr.bf16.mxu0 0
        %823 = vmatpush1.bf16.xpose.msra.mxu0 0
        %824 = vmatprep.subr.bf16.mxu0 0
        %825 = vmatpush1.bf16.xpose.msra.mxu0 0
        %826 = vmatprep.subr.bf16.mxu0 0
        %827 = vmatpush1.bf16.xpose.msra.mxu0 0
        %828 = vmatprep.subr.bf16.mxu0 0
        %829 = vmatpush1.bf16.xpose.msra.mxu0 0
        %830 = vmatprep.subr.bf16.mxu0 0
        %831 = vmatpush1.bf16.xpose.msra.mxu0 0
        %832 = vmatprep.subr.bf16.mxu0 0
        %833 = vmatpush1.bf16.xpose.msra.mxu0 0
        %834 = vmatprep.subr.bf16.mxu0 0
        %835 = vmatpush1.bf16.xpose.msra.mxu0 0
        %836 = vmatprep.subr.bf16.mxu0 0
        %837 = vmatpush1.bf16.xpose.msra.mxu0 0
        %838 = vmatprep.mubr.bf16.mxu0 0
        %839 = vmatmul.mubr.bf16.gmra.mrb[0].mxu0 %v801
        %v840 = vpop.f32.mrb[0].mxu0
        %v841 = vadd.f32 %v513, %v840
        %v842 = vpop.f32.mrb[0].mxu0
        %v843 = vpop.f32.mrb[0].mxu0
        %v844 = vpop.f32.mrb[0].mxu0
        %845 = vdwg.mxu0
        %v846 = vsel %vm578, %v841, -inf
        %847 = vmax.xlane.f32.xlu0 %v846
        %v848 = vpop.xlane.xlu0 %847
        %v849 = vsub.f32 %v841, %v848
        %v850 = vmul.f32 %v849, 1.442695
        %v851 = vpow.pop %v850
        %v852 = vsel %vm578, %v851, 0.0
        %853 = vadd.xlane.f32.xlu0 %v852
        %v854 = vpop.xlane.xlu0 %853
        %v855 = vrcp.pop %v854
        %v856 = vmul.f32 %v851, %v855
        %v857 = vpack.c.bf16 %v856, %v856
        %858 = vrot.lane.b32.xlu0 %v574, 48
        %v859 = vpop.permute.xlu0 %858
        %v861 = vsel %vm578, %v857, 0
        %v864 = vsel %vm642, %v859, 0
        %866 = vmatprep.subr.bf16.mxu0 0
        %867 = vmatpush1.bf16.msra.mxu0 %v864
        %868 = vmatprep.subr.bf16.mxu0 0
        %869 = vmatpush1.bf16.msra.mxu0 0
        %870 = vmatprep.subr.bf16.mxu0 0
        %871 = vmatpush1.bf16.msra.mxu0 0
        %872 = vmatprep.subr.bf16.mxu0 0
        %873 = vmatpush1.bf16.msra.mxu0 0
        %874 = vmatprep.subr.bf16.mxu0 0
        %875 = vmatpush1.bf16.msra.mxu0 0
        %876 = vmatprep.subr.bf16.mxu0 0
        %877 = vmatpush1.bf16.msra.mxu0 0
        %878 = vmatprep.subr.bf16.mxu0 0
        %879 = vmatpush1.bf16.msra.mxu0 0
        %880 = vmatprep.subr.bf16.mxu0 0
        %881 = vmatpush1.bf16.msra.mxu0 0
        %882 = vmatprep.subr.bf16.mxu0 0
        %883 = vmatpush1.bf16.msra.mxu0 0
        %884 = vmatprep.subr.bf16.mxu0 0
        %885 = vmatpush1.bf16.msra.mxu0 0
        %886 = vmatprep.subr.bf16.mxu0 0
        %887 = vmatpush1.bf16.msra.mxu0 0
        %888 = vmatprep.subr.bf16.mxu0 0
        %889 = vmatpush1.bf16.msra.mxu0 0
        %890 = vmatprep.subr.bf16.mxu0 0
        %891 = vmatpush1.bf16.msra.mxu0 0
        %892 = vmatprep.subr.bf16.mxu0 0
        %893 = vmatpush1.bf16.msra.mxu0 0
        %894 = vmatprep.subr.bf16.mxu0 0
        %895 = vmatpush1.bf16.msra.mxu0 0
        %896 = vmatprep.subr.bf16.mxu0 0
        %897 = vmatpush1.bf16.msra.mxu0 0
        %898 = vmatprep.mubr.bf16.mxu0 0
        %899 = vmatmul.mubr.bf16.gmra.mrb[0].mxu0 %v861
        %v900 = vpop.f32.mrb[0].mxu0
        %v901 = vadd.f32 0.0, %v900
        %v902 = vpop.f32.mrb[0].mxu0
        %v903 = vpop.f32.mrb[0].mxu0
        %v904 = vpop.f32.mrb[0].mxu0
        %905 = vdwg.mxu0
        %906 = vrot.lane.b32.xlu0 %v574, 104
        %v907 = vpop.permute.xlu0 %906
        %908 = vrot.lane.b32.xlu0 %v574, 72
        %v909 = vpop.permute.xlu0 %908
        %v911 = vsel %vm578, %v907, 0
        %v914 = vsel %vm578, %v909, 0
        %916 = vmatprep.subr.bf16.mxu0 0
        %917 = vmatpush1.bf16.xpose.msra.mxu0 %v914
        %918 = vmatprep.subr.bf16.mxu0 0
        %919 = vmatpush1.bf16.xpose.msra.mxu0 0
        %920 = vmatprep.subr.bf16.mxu0 0
        %921 = vmatpush1.bf16.xpose.msra.mxu0 0
        %922 = vmatprep.subr.bf16.mxu0 0
        %923 = vmatpush1.bf16.xpose.msra.mxu0 0
        %924 = vmatprep.subr.bf16.mxu0 0
        %925 = vmatpush1.bf16.xpose.msra.mxu0 0
        %926 = vmatprep.subr.bf16.mxu0 0
        %927 = vmatpush1.bf16.xpose.msra.mxu0 0
        %928 = vmatprep.subr.bf16.mxu0 0
        %929 = vmatpush1.bf16.xpose.msra.mxu0 0
        %930 = vmatprep.subr.bf16.mxu0 0
        %931 = vmatpush1.bf16.xpose.msra.mxu0 0
        %932 = vmatprep.subr.bf16.mxu0 0
        %933 = vmatpush1.bf16.xpose.msra.mxu0 0
        %934 = vmatprep.subr.bf16.mxu0 0
        %935 = vmatpush1.bf16.xpose.msra.mxu0 0
        %936 = vmatprep.subr.bf16.mxu0 0
        %937 = vmatpush1.bf16.xpose.msra.mxu0 0
        %938 = vmatprep.subr.bf16.mxu0 0
        %939 = vmatpush1.bf16.xpose.msra.mxu0 0
        %940 = vmatprep.subr.bf16.mxu0 0
        %941 = vmatpush1.bf16.xpose.msra.mxu0 0
        %942 = vmatprep.subr.bf16.mxu0 0
        %943 = vmatpush1.bf16.xpose.msra.mxu0 0
        %944 = vmatprep.subr.bf16.mxu0 0
        %945 = vmatpush1.bf16.xpose.msra.mxu0 0
        %946 = vmatprep.subr.bf16.mxu0 0
        %947 = vmatpush1.bf16.xpose.msra.mxu0 0
        %948 = vmatprep.mubr.bf16.mxu0 0
        %949 = vmatmul.mubr.bf16.gmra.mrb[0].mxu0 %v911
        %v950 = vpop.f32.mrb[0].mxu0
        %v951 = vadd.f32 %v513, %v950
        %v952 = vpop.f32.mrb[0].mxu0
        %v953 = vpop.f32.mrb[0].mxu0
        %v954 = vpop.f32.mrb[0].mxu0
        %955 = vdwg.mxu0
        %v956 = vsel %vm578, %v951, -inf
        %957 = vmax.xlane.f32.xlu0 %v956
        %v958 = vpop.xlane.xlu0 %957
        %v959 = vsub.f32 %v951, %v958
        %v960 = vmul.f32 %v959, 1.442695
        %v961 = vpow.pop %v960
        %v962 = vsel %vm578, %v961, 0.0
        %963 = vadd.xlane.f32.xlu0 %v962
        %v964 = vpop.xlane.xlu0 %963
        %v965 = vrcp.pop %v964
        %v966 = vmul.f32 %v961, %v965
        %v967 = vpack.c.bf16 %v966, %v966
        %968 = vrot.lane.b32.xlu0 %v574, 40
        %v969 = vpop.permute.xlu0 %968
        %v971 = vsel %vm578, %v967, 0
        %v974 = vsel %vm642, %v969, 0
        %976 = vmatprep.subr.bf16.mxu0 0
        %977 = vmatpush1.bf16.msra.mxu0 %v974
        %978 = vmatprep.subr.bf16.mxu0 0
        %979 = vmatpush1.bf16.msra.mxu0 0
        %980 = vmatprep.subr.bf16.mxu0 0
        %981 = vmatpush1.bf16.msra.mxu0 0
        %982 = vmatprep.subr.bf16.mxu0 0
        %983 = vmatpush1.bf16.msra.mxu0 0
        %984 = vmatprep.subr.bf16.mxu0 0
        %985 = vmatpush1.bf16.msra.mxu0 0
        %986 = vmatprep.subr.bf16.mxu0 0
        %987 = vmatpush1.bf16.msra.mxu0 0
        %988 = vmatprep.subr.bf16.mxu0 0
        %989 = vmatpush1.bf16.msra.mxu0 0
        %990 = vmatprep.subr.bf16.mxu0 0
        %991 = vmatpush1.bf16.msra.mxu0 0
        %992 = vmatprep.subr.bf16.mxu0 0
        %993 = vmatpush1.bf16.msra.mxu0 0
        %994 = vmatprep.subr.bf16.mxu0 0
        %995 = vmatpush1.bf16.msra.mxu0 0
        %996 = vmatprep.subr.bf16.mxu0 0
        %997 = vmatpush1.bf16.msra.mxu0 0
        %998 = vmatprep.subr.bf16.mxu0 0
        %999 = vmatpush1.bf16.msra.mxu0 0
        %1000 = vmatprep.subr.bf16.mxu0 0
        %1001 = vmatpush1.bf16.msra.mxu0 0
        %1002 = vmatprep.subr.bf16.mxu0 0
        %1003 = vmatpush1.bf16.msra.mxu0 0
        %1004 = vmatprep.subr.bf16.mxu0 0
        %1005 = vmatpush1.bf16.msra.mxu0 0
        %1006 = vmatprep.subr.bf16.mxu0 0
        %1007 = vmatpush1.bf16.msra.mxu0 0
        %1008 = vmatprep.mubr.bf16.mxu0 0
        %1009 = vmatmul.mubr.bf16.gmra.mrb[0].mxu0 %v971
        %v1010 = vpop.f32.mrb[0].mxu0
        %v1011 = vadd.f32 0.0, %v1010
        %v1012 = vpop.f32.mrb[0].mxu0
        %v1013 = vpop.f32.mrb[0].mxu0
        %v1014 = vpop.f32.mrb[0].mxu0
        %1015 = vdwg.mxu0
        %1017 = vrot.lane.b32.xlu0 %v791, 8
        %v1018 = vpop.permute.xlu0 %1017
        %1021 = vrot.lane.b32.xlu0 %v901, 16
        %v1022 = vpop.permute.xlu0 %1021
        %1025 = vrot.lane.b32.xlu0 %v1011, 24
        %v1026 = vpop.permute.xlu0 %1025
        %v1028 = vsel %vm578, %v681, %v1018
        %vm1029 = vcmask 130048
        %v1030 = vsel %vm1029, %v1028, %v1022
        %vm1031 = vcmask 195584
        %v1032 = vsel %vm1031, %v1030, %v1026
        %v1033 = vpack.c.bf16 %v1032, %v1032
        %v1034 = vld [vmem:[%s4] sm:$0xf]
        %v1035 = vld [vmem:[%s4 + $0x4] sm:$0xf]
        %v1036 = vld [vmem:[%s4 + $0x8] sm:$0xf]
        %v1037 = vld [vmem:[%s4 + $0xc] sm:$0xf]
        %v1038 = vlaneseq
        %v1039 = vshrl.u32 %v1038, 7
        %v1040 = vsub.s32 0, %v1039
        %v1041 = vrot.slane %v505, %v1040
        %v1046 = vunpack.c.l.b16 %v1034
        %v1047 = vunpack.c.l.b16 %v1035
        %v1048 = vunpack.c.l.b16 %v1036
        %v1049 = vunpack.c.l.b16 %v1037
        %v1050 = vpack.c.b16 %v1047, %v1046
        %v1051 = vpack.c.b16 %v1049, %v1048
        %v1055 = vsel %vm530, %v1033, 0
        %1057 = vmatprep.subr.bf16.mxu0 0
        %1058 = vmatpush1.bf16.msra.mxu0 %v1050
        %1059 = vmatprep.subr.bf16.mxu0 0
        %1060 = vmatpush1.bf16.msra.mxu0 %v1051
        %1061 = vmatprep.subr.bf16.mxu0 0
        %1062 = vmatpush1.bf16.msra.mxu0 0
        %1063 = vmatprep.subr.bf16.mxu0 0
        %1064 = vmatpush1.bf16.msra.mxu0 0
        %1065 = vmatprep.subr.bf16.mxu0 0
        %1066 = vmatpush1.bf16.msra.mxu0 0
        %1067 = vmatprep.subr.bf16.mxu0 0
        %1068 = vmatpush1.bf16.msra.mxu0 0
        %1069 = vmatprep.subr.bf16.mxu0 0
        %1070 = vmatpush1.bf16.msra.mxu0 0
        %1071 = vmatprep.subr.bf16.mxu0 0
        %1072 = vmatpush1.bf16.msra.mxu0 0
        %1073 = vmatprep.subr.bf16.mxu0 0
        %1074 = vmatpush1.bf16.msra.mxu0 0
        %1075 = vmatprep.subr.bf16.mxu0 0
        %1076 = vmatpush1.bf16.msra.mxu0 0
        %1077 = vmatprep.subr.bf16.mxu0 0
        %1078 = vmatpush1.bf16.msra.mxu0 0
        %1079 = vmatprep.subr.bf16.mxu0 0
        %1080 = vmatpush1.bf16.msra.mxu0 0
        %1081 = vmatprep.subr.bf16.mxu0 0
        %1082 = vmatpush1.bf16.msra.mxu0 0
        %1083 = vmatprep.subr.bf16.mxu0 0
        %1084 = vmatpush1.bf16.msra.mxu0 0
        %1085 = vmatprep.subr.bf16.mxu0 0
        %1086 = vmatpush1.bf16.msra.mxu0 0
        %1087 = vmatprep.subr.bf16.mxu0 0
        %1088 = vmatpush1.bf16.msra.mxu0 0
        %1089 = vmatprep.mubr.bf16.mxu0 0
        %1090 = vmatmul.mubr.bf16.gmra.mrb[0].mxu0 %v1055
        %v1091 = vpop.f32.mrb[0].mxu0
        %v1092 = vadd.f32 %v1041, %v1091
        %v1093 = vpop.f32.mrb[0].mxu0
        %v1094 = vpop.f32.mrb[0].mxu0
        %v1095 = vpop.f32.mrb[0].mxu0
        %1096 = vdwg.mxu0
        %v1097 = vadd.f32 %v504, %v1092
        %v1098 = vsel %vm530, %v1097, 0.0
        %1099 = vadd.xlane.f32.xlu0 %v1098
        %v1100 = vpop.xlane.xlu0 %1099
        %v1101 = vrcp.pop 32.0
        %v1102 = vmul.f32 %v1100, %v1101
        %v1103 = vsub.f32 %v1097, %v1102
        %v1104 = vmul.f32 %v1103, %v1103
        %v1105 = vsel %vm530, %v1104, 0.0
        %1106 = vadd.xlane.f32.xlu0 %v1105
        %v1107 = vpop.xlane.xlu0 %1106
        %v1108 = vmul.f32 %v1107, %v1101
        %v1109 = vadd.f32 %v1108, 1e-05
        %v1110 = vrsqrt.pop %v1109
        %v1111 = vmul.f32 %v1103, %v1110
        %v1112 = vlaneseq
        %v1113 = vshrl.u32 %v1112, 7
        %v1114 = vsub.s32 1, %v1113
        %v1115 = vrot.slane %v505, %v1114
        %v1116 = vmul.f32 %v1111, %v1115
        %v1117 = vlaneseq
        %v1118 = vshrl.u32 %v1117, 7
        %v1119 = vsub.s32 2, %v1118
        %v1120 = vrot.slane %v505, %v1119
        %v1121 = vadd.f32 %v1116, %v1120
        %v1122 = vpack.c.bf16 %v1121, %v1121
        %v1123 = vld [vmem:[%s5] sm:$0xf]
        %v1124 = vld [vmem:[%s5 + $0x4] sm:$0xf]
        %v1125 = vld [vmem:[%s5 + $0x8] sm:$0xf]
        %v1126 = vld [vmem:[%s5 + $0xc] sm:$0xf]
        %v1131 = vunpack.c.l.b16 %v1123
        %v1132 = vunpack.c.l.b16 %v1124
        %v1133 = vunpack.c.l.b16 %v1125
        %v1134 = vunpack.c.l.b16 %v1126
        %v1135 = vpack.c.b16 %v1132, %v1131
        %v1136 = vpack.c.b16 %v1134, %v1133
        %v1140 = vsel %vm530, %v1122, 0
        %1142 = vmatprep.subr.bf16.mxu0 0
        %1143 = vmatpush1.bf16.msra.mxu0 %v1135
        %1144 = vmatprep.subr.bf16.mxu0 0
        %1145 = vmatpush1.bf16.msra.mxu0 %v1136
        %1146 = vmatprep.subr.bf16.mxu0 0
        %1147 = vmatpush1.bf16.msra.mxu0 0
        %1148 = vmatprep.subr.bf16.mxu0 0
        %1149 = vmatpush1.bf16.msra.mxu0 0
        %1150 = vmatprep.subr.bf16.mxu0 0
        %1151 = vmatpush1.bf16.msra.mxu0 0
        %1152 = vmatprep.subr.bf16.mxu0 0
        %1153 = vmatpush1.bf16.msra.mxu0 0
        %1154 = vmatprep.subr.bf16.mxu0 0
        %1155 = vmatpush1.bf16.msra.mxu0 0
        %1156 = vmatprep.subr.bf16.mxu0 0
        %1157 = vmatpush1.bf16.msra.mxu0 0
        %1158 = vmatprep.subr.bf16.mxu0 0
        %1159 = vmatpush1.bf16.msra.mxu0 0
        %1160 = vmatprep.subr.bf16.mxu0 0
        %1161 = vmatpush1.bf16.msra.mxu0 0
        %1162 = vmatprep.subr.bf16.mxu0 0
        %1163 = vmatpush1.bf16.msra.mxu0 0
        %1164 = vmatprep.subr.bf16.mxu0 0
        %1165 = vmatpush1.bf16.msra.mxu0 0
        %1166 = vmatprep.subr.bf16.mxu0 0
        %1167 = vmatpush1.bf16.msra.mxu0 0
        %1168 = vmatprep.subr.bf16.mxu0 0
        %1169 = vmatpush1.bf16.msra.mxu0 0
        %1170 = vmatprep.subr.bf16.mxu0 0
        %1171 = vmatpush1.bf16.msra.mxu0 0
        %1172 = vmatprep.subr.bf16.mxu0 0
        %1173 = vmatpush1.bf16.msra.mxu0 0
        %1174 = vmatprep.mubr.bf16.mxu0 0
        %1175 = vmatmul.mubr.bf16.gmra.mrb[0].mxu0 %v1140
        %v1176 = vpop.f32.mrb[0].mxu0
        %v1177 = vadd.f32 0.0, %v1176
        %v1178 = vpop.f32.mrb[0].mxu0
        %v1179 = vpop.f32.mrb[0].mxu0
        %v1180 = vpop.f32.mrb[0].mxu0
        %1181 = vdwg.mxu0
        %v1182 = vld [vmem:[%s436] sm:$0xf]
        %s1183 = scalar_lea.vmem %s5, 16
        %v1184 = vld [vmem:[%s1183] sm:$0xf]
        %v1185 = vld [vmem:[%s1183 + $0x4] sm:$0xf]
        %v1186 = vld [vmem:[%s1183 + $0x8] sm:$0xf]
        %v1187 = vld [vmem:[%s1183 + $0xc] sm:$0xf]
        %v1192 = vunpack.c.l.b16 %v1184
        %v1193 = vunpack.c.l.b16 %v1185
        %v1194 = vunpack.c.l.b16 %v1186
        %v1195 = vunpack.c.l.b16 %v1187
        %v1196 = vpack.c.b16 %v1193, %v1192
        %v1197 = vpack.c.b16 %v1195, %v1194
        %v1201 = vsel %vm530, %v1182, 0
        %1203 = vmatprep.subr.bf16.mxu0 0
        %1204 = vmatpush1.bf16.msra.mxu0 %v1196
        %1205 = vmatprep.subr.bf16.mxu0 0
        %1206 = vmatpush1.bf16.msra.mxu0 %v1197
        %1207 = vmatprep.subr.bf16.mxu0 0
        %1208 = vmatpush1.bf16.msra.mxu0 0
        %1209 = vmatprep.subr.bf16.mxu0 0
        %1210 = vmatpush1.bf16.msra.mxu0 0
        %1211 = vmatprep.subr.bf16.mxu0 0
        %1212 = vmatpush1.bf16.msra.mxu0 0
        %1213 = vmatprep.subr.bf16.mxu0 0
        %1214 = vmatpush1.bf16.msra.mxu0 0
        %1215 = vmatprep.subr.bf16.mxu0 0
        %1216 = vmatpush1.bf16.msra.mxu0 0
        %1217 = vmatprep.subr.bf16.mxu0 0
        %1218 = vmatpush1.bf16.msra.mxu0 0
        %1219 = vmatprep.subr.bf16.mxu0 0
        %1220 = vmatpush1.bf16.msra.mxu0 0
        %1221 = vmatprep.subr.bf16.mxu0 0
        %1222 = vmatpush1.bf16.msra.mxu0 0
        %1223 = vmatprep.subr.bf16.mxu0 0
        %1224 = vmatpush1.bf16.msra.mxu0 0
        %1225 = vmatprep.subr.bf16.mxu0 0
        %1226 = vmatpush1.bf16.msra.mxu0 0
        %1227 = vmatprep.subr.bf16.mxu0 0
        %1228 = vmatpush1.bf16.msra.mxu0 0
        %1229 = vmatprep.subr.bf16.mxu0 0
        %1230 = vmatpush1.bf16.msra.mxu0 0
        %1231 = vmatprep.subr.bf16.mxu0 0
        %1232 = vmatpush1.bf16.msra.mxu0 0
        %1233 = vmatprep.subr.bf16.mxu0 0
        %1234 = vmatpush1.bf16.msra.mxu0 0
        %1235 = vmatprep.mubr.bf16.mxu0 0
        %1236 = vmatmul.mubr.bf16.gmra.mrb[0].mxu0 %v1201
        %v1237 = vpop.f32.mrb[0].mxu0
        %v1238 = vadd.f32 0.0, %v1237
        %v1239 = vpop.f32.mrb[0].mxu0
        %v1240 = vpop.f32.mrb[0].mxu0
        %v1241 = vpop.f32.mrb[0].mxu0
        %1242 = vdwg.mxu0
        %v1243 = vld [vmem:[%s445] sm:$0xf]
        %s1244 = scalar_lea.vmem %s5, 32
        %v1245 = vld [vmem:[%s1244] sm:$0xf]
        %v1246 = vld [vmem:[%s1244 + $0x4] sm:$0xf]
        %v1247 = vld [vmem:[%s1244 + $0x8] sm:$0xf]
        %v1248 = vld [vmem:[%s1244 + $0xc] sm:$0xf]
        %v1253 = vunpack.c.l.b16 %v1245
        %v1254 = vunpack.c.l.b16 %v1246
        %v1255 = vunpack.c.l.b16 %v1247
        %v1256 = vunpack.c.l.b16 %v1248
        %v1257 = vpack.c.b16 %v1254, %v1253
        %v1258 = vpack.c.b16 %v1256, %v1255
        %v1262 = vsel %vm530, %v1243, 0
        %1264 = vmatprep.subr.bf16.mxu0 0
        %1265 = vmatpush1.bf16.msra.mxu0 %v1257
        %1266 = vmatprep.subr.bf16.mxu0 0
        %1267 = vmatpush1.bf16.msra.mxu0 %v1258
        %1268 = vmatprep.subr.bf16.mxu0 0
        %1269 = vmatpush1.bf16.msra.mxu0 0
        %1270 = vmatprep.subr.bf16.mxu0 0
        %1271 = vmatpush1.bf16.msra.mxu0 0
        %1272 = vmatprep.subr.bf16.mxu0 0
        %1273 = vmatpush1.bf16.msra.mxu0 0
        %1274 = vmatprep.subr.bf16.mxu0 0
        %1275 = vmatpush1.bf16.msra.mxu0 0
        %1276 = vmatprep.subr.bf16.mxu0 0
        %1277 = vmatpush1.bf16.msra.mxu0 0
        %1278 = vmatprep.subr.bf16.mxu0 0
        %1279 = vmatpush1.bf16.msra.mxu0 0
        %1280 = vmatprep.subr.bf16.mxu0 0
        %1281 = vmatpush1.bf16.msra.mxu0 0
        %1282 = vmatprep.subr.bf16.mxu0 0
        %1283 = vmatpush1.bf16.msra.mxu0 0
        %1284 = vmatprep.subr.bf16.mxu0 0
        %1285 = vmatpush1.bf16.msra.mxu0 0
        %1286 = vmatprep.subr.bf16.mxu0 0
        %1287 = vmatpush1.bf16.msra.mxu0 0
        %1288 = vmatprep.subr.bf16.mxu0 0
        %1289 = vmatpush1.bf16.msra.mxu0 0
        %1290 = vmatprep.subr.bf16.mxu0 0
        %1291 = vmatpush1.bf16.msra.mxu0 0
        %1292 = vmatprep.subr.bf16.mxu0 0
        %1293 = vmatpush1.bf16.msra.mxu0 0
        %1294 = vmatprep.subr.bf16.mxu0 0
        %1295 = vmatpush1.bf16.msra.mxu0 0
        %1296 = vmatprep.mubr.bf16.mxu0 0
        %1297 = vmatmul.mubr.bf16.gmra.mrb[0].mxu0 %v1262
        %v1298 = vpop.f32.mrb[0].mxu0
        %v1299 = vadd.f32 0.0, %v1298
        %v1300 = vpop.f32.mrb[0].mxu0
        %v1301 = vpop.f32.mrb[0].mxu0
        %v1302 = vpop.f32.mrb[0].mxu0
        %1303 = vdwg.mxu0
        %v1304 = vpack.c.bf16 %v1177, %v1177
        %v1305 = vpack.c.bf16 %v1238, %v1238
        %v1306 = vpack.c.bf16 %v1299, %v1299
        %v1308 = vsel %vm578, %v1304, 0
        %v1311 = vsel %vm578, %v1305, 0
        %1313 = vmatprep.subr.bf16.mxu0 0
        %1314 = vmatpush1.bf16.xpose.msra.mxu0 %v1311
        %1315 = vmatprep.subr.bf16.mxu0 0
        %1316 = vmatpush1.bf16.xpose.msra.mxu0 0
        %1317 = vmatprep.subr.bf16.mxu0 0
        %1318 = vmatpush1.bf16.xpose.msra.mxu0 0
        %1319 = vmatprep.subr.bf16.mxu0 0
        %1320 = vmatpush1.bf16.xpose.msra.mxu0 0
        %1321 = vmatprep.subr.bf16.mxu0 0
        %1322 = vmatpush1.bf16.xpose.msra.mxu0 0
        %1323 = vmatprep.subr.bf16.mxu0 0
        %1324 = vmatpush1.bf16.xpose.msra.mxu0 0
        %1325 = vmatprep.subr.bf16.mxu0 0
        %1326 = vmatpush1.bf16.xpose.msra.mxu0 0
        %1327 = vmatprep.subr.bf16.mxu0 0
        %1328 = vmatpush1.bf16.xpose.msra.mxu0 0
        %1329 = vmatprep.subr.bf16.mxu0 0
        %1330 = vmatpush1.bf16.xpose.msra.mxu0 0
        %1331 = vmatprep.subr.bf16.mxu0 0
        %1332 = vmatpush1.bf16.xpose.msra.mxu0 0
        %1333 = vmatprep.subr.bf16.mxu0 0
        %1334 = vmatpush1.bf16.xpose.msra.mxu0 0
        %1335 = vmatprep.subr.bf16.mxu0 0
        %1336 = vmatpush1.bf16.xpose.msra.mxu0 0
        %1337 = vmatprep.subr.bf16.mxu0 0
        %1338 = vmatpush1.bf16.xpose.msra.mxu0 0
        %1339 = vmatprep.subr.bf16.mxu0 0
        %1340 = vmatpush1.bf16.xpose.msra.mxu0 0
        %1341 = vmatprep.subr.bf16.mxu0 0
        %1342 = vmatpush1.bf16.xpose.msra.mxu0 0
        %1343 = vmatprep.subr.bf16.mxu0 0
        %1344 = vmatpush1.bf16.xpose.msra.mxu0 0
        %1345 = vmatprep.mubr.bf16.mxu0 0
        %1346 = vmatmul.mubr.bf16.gmra.mrb[0].mxu0 %v1308
        %v1347 = vpop.f32.mrb[0].mxu0
        %v1348 = vadd.f32 0.0, %v1347
        %v1349 = vpop.f32.mrb[0].mxu0
        %v1350 = vpop.f32.mrb[0].mxu0
        %v1351 = vpop.f32.mrb[0].mxu0
        %1352 = vdwg.mxu0
        %v1353 = vsel %vm578, %v1348, -inf
        %1354 = vmax.xlane.f32.xlu0 %v1353
        %v1355 = vpop.xlane.xlu0 %1354
        %v1356 = vsub.f32 %v1348, %v1355
        %v1357 = vmul.f32 %v1356, 1.442695
        %v1358 = vpow.pop %v1357
        %v1359 = vsel %vm578, %v1358, 0.0
        %1360 = vadd.xlane.f32.xlu0 %v1359
        %v1361 = vpop.xlane.xlu0 %1360
        %v1362 = vrcp.pop %v1361
        %v1363 = vmul.f32 %v1358, %v1362
        %v1364 = vpack.c.bf16 %v1363, %v1363
        %v1366 = vsel %vm578, %v1364, 0
        %v1369 = vsel %vm642, %v1306, 0
        %1371 = vmatprep.subr.bf16.mxu0 0
        %1372 = vmatpush1.bf16.msra.mxu0 %v1369
        %1373 = vmatprep.subr.bf16.mxu0 0
        %1374 = vmatpush1.bf16.msra.mxu0 0
        %1375 = vmatprep.subr.bf16.mxu0 0
        %1376 = vmatpush1.bf16.msra.mxu0 0
        %1377 = vmatprep.subr.bf16.mxu0 0
        %1378 = vmatpush1.bf16.msra.mxu0 0
        %1379 = vmatprep.subr.bf16.mxu0 0
        %1380 = vmatpush1.bf16.msra.mxu0 0
        %1381 = vmatprep.subr.bf16.mxu0 0
        %1382 = vmatpush1.bf16.msra.mxu0 0
        %1383 = vmatprep.subr.bf16.mxu0 0
        %1384 = vmatpush1.bf16.msra.mxu0 0
        %1385 = vmatprep.subr.bf16.mxu0 0
        %1386 = vmatpush1.bf16.msra.mxu0 0
        %1387 = vmatprep.subr.bf16.mxu0 0
        %1388 = vmatpush1.bf16.msra.mxu0 0
        %1389 = vmatprep.subr.bf16.mxu0 0
        %1390 = vmatpush1.bf16.msra.mxu0 0
        %1391 = vmatprep.subr.bf16.mxu0 0
        %1392 = vmatpush1.bf16.msra.mxu0 0
        %1393 = vmatprep.subr.bf16.mxu0 0
        %1394 = vmatpush1.bf16.msra.mxu0 0
        %1395 = vmatprep.subr.bf16.mxu0 0
        %1396 = vmatpush1.bf16.msra.mxu0 0
        %1397 = vmatprep.subr.bf16.mxu0 0
        %1398 = vmatpush1.bf16.msra.mxu0 0
        %1399 = vmatprep.subr.bf16.mxu0 0
        %1400 = vmatpush1.bf16.msra.mxu0 0
        %1401 = vmatprep.subr.bf16.mxu0 0
        %1402 = vmatpush1.bf16.msra.mxu0 0
        %1403 = vmatprep.mubr.bf16.mxu0 0
        %1404 = vmatmul.mubr.bf16.gmra.mrb[0].mxu0 %v1366
        %v1405 = vpop.f32.mrb[0].mxu0
        %v1406 = vadd.f32 0.0, %v1405
        %v1407 = vpop.f32.mrb[0].mxu0
        %v1408 = vpop.f32.mrb[0].mxu0
        %v1409 = vpop.f32.mrb[0].mxu0
        %1410 = vdwg.mxu0
        %1412 = vrot.lane.b32.xlu0 %v1304, 120
        %v1413 = vpop.permute.xlu0 %1412
        %1415 = vrot.lane.b32.xlu0 %v1305, 120
        %v1416 = vpop.permute.xlu0 %1415
        %v1418 = vsel %vm578, %v1413, 0
        %v1421 = vsel %vm578, %v1416, 0
        %1423 = vmatprep.subr.bf16.mxu0 0
        %1424 = vmatpush1.bf16.xpose.msra.mxu0 %v1421
        %1425 = vmatprep.subr.bf16.mxu0 0
        %1426 = vmatpush1.bf16.xpose.msra.mxu0 0
        %1427 = vmatprep.subr.bf16.mxu0 0
        %1428 = vmatpush1.bf16.xpose.msra.mxu0 0
        %1429 = vmatprep.subr.bf16.mxu0 0
        %1430 = vmatpush1.bf16.xpose.msra.mxu0 0
        %1431 = vmatprep.subr.bf16.mxu0 0
        %1432 = vmatpush1.bf16.xpose.msra.mxu0 0
        %1433 = vmatprep.subr.bf16.mxu0 0
        %1434 = vmatpush1.bf16.xpose.msra.mxu0 0
        %1435 = vmatprep.subr.bf16.mxu0 0
        %1436 = vmatpush1.bf16.xpose.msra.mxu0 0
        %1437 = vmatprep.subr.bf16.mxu0 0
        %1438 = vmatpush1.bf16.xpose.msra.mxu0 0
        %1439 = vmatprep.subr.bf16.mxu0 0
        %1440 = vmatpush1.bf16.xpose.msra.mxu0 0
        %1441 = vmatprep.subr.bf16.mxu0 0
        %1442 = vmatpush1.bf16.xpose.msra.mxu0 0
        %1443 = vmatprep.subr.bf16.mxu0 0
        %1444 = vmatpush1.bf16.xpose.msra.mxu0 0
        %1445 = vmatprep.subr.bf16.mxu0 0
        %1446 = vmatpush1.bf16.xpose.msra.mxu0 0
        %1447 = vmatprep.subr.bf16.mxu0 0
        %1448 = vmatpush1.bf16.xpose.msra.mxu0 0
        %1449 = vmatprep.subr.bf16.mxu0 0
        %1450 = vmatpush1.bf16.xpose.msra.mxu0 0
        %1451 = vmatprep.subr.bf16.mxu0 0
        %1452 = vmatpush1.bf16.xpose.msra.mxu0 0
        %1453 = vmatprep.subr.bf16.mxu0 0
        %1454 = vmatpush1.bf16.xpose.msra.mxu0 0
        %1455 = vmatprep.mubr.bf16.mxu0 0
        %1456 = vmatmul.mubr.bf16.gmra.mrb[0].mxu0 %v1418
        %v1457 = vpop.f32.mrb[0].mxu0
        %v1458 = vadd.f32 0.0, %v1457
        %v1459 = vpop.f32.mrb[0].mxu0
        %v1460 = vpop.f32.mrb[0].mxu0
        %v1461 = vpop.f32.mrb[0].mxu0
        %1462 = vdwg.mxu0
        %v1463 = vsel %vm578, %v1458, -inf
        %1464 = vmax.xlane.f32.xlu0 %v1463
        %v1465 = vpop.xlane.xlu0 %1464
        %v1466 = vsub.f32 %v1458, %v1465
        %v1467 = vmul.f32 %v1466, 1.442695
        %v1468 = vpow.pop %v1467
        %v1469 = vsel %vm578, %v1468, 0.0
        %1470 = vadd.xlane.f32.xlu0 %v1469
        %v1471 = vpop.xlane.xlu0 %1470
        %v1472 = vrcp.pop %v1471
        %v1473 = vmul.f32 %v1468, %v1472
        %v1474 = vpack.c.bf16 %v1473, %v1473
        %1476 = vrot.lane.b32.xlu0 %v1306, 120
        %v1477 = vpop.permute.xlu0 %1476
        %v1479 = vsel %vm578, %v1474, 0
        %v1482 = vsel %vm642, %v1477, 0
        %1484 = vmatprep.subr.bf16.mxu0 0
        %1485 = vmatpush1.bf16.msra.mxu0 %v1482
        %1486 = vmatprep.subr.bf16.mxu0 0
        %1487 = vmatpush1.bf16.msra.mxu0 0
        %1488 = vmatprep.subr.bf16.mxu0 0
        %1489 = vmatpush1.bf16.msra.mxu0 0
        %1490 = vmatprep.subr.bf16.mxu0 0
        %1491 = vmatpush1.bf16.msra.mxu0 0
        %1492 = vmatprep.subr.bf16.mxu0 0
        %1493 = vmatpush1.bf16.msra.mxu0 0
        %1494 = vmatprep.subr.bf16.mxu0 0
        %1495 = vmatpush1.bf16.msra.mxu0 0
        %1496 = vmatprep.subr.bf16.mxu0 0
        %1497 = vmatpush1.bf16.msra.mxu0 0
        %1498 = vmatprep.subr.bf16.mxu0 0
        %1499 = vmatpush1.bf16.msra.mxu0 0
        %1500 = vmatprep.subr.bf16.mxu0 0
        %1501 = vmatpush1.bf16.msra.mxu0 0
        %1502 = vmatprep.subr.bf16.mxu0 0
        %1503 = vmatpush1.bf16.msra.mxu0 0
        %1504 = vmatprep.subr.bf16.mxu0 0
        %1505 = vmatpush1.bf16.msra.mxu0 0
        %1506 = vmatprep.subr.bf16.mxu0 0
        %1507 = vmatpush1.bf16.msra.mxu0 0
        %1508 = vmatprep.subr.bf16.mxu0 0
        %1509 = vmatpush1.bf16.msra.mxu0 0
        %1510 = vmatprep.subr.bf16.mxu0 0
        %1511 = vmatpush1.bf16.msra.mxu0 0
        %1512 = vmatprep.subr.bf16.mxu0 0
        %1513 = vmatpush1.bf16.msra.mxu0 0
        %1514 = vmatprep.subr.bf16.mxu0 0
        %1515 = vmatpush1.bf16.msra.mxu0 0
        %1516 = vmatprep.mubr.bf16.mxu0 0
        %1517 = vmatmul.mubr.bf16.gmra.mrb[0].mxu0 %v1479
        %v1518 = vpop.f32.mrb[0].mxu0
        %v1519 = vadd.f32 0.0, %v1518
        %v1520 = vpop.f32.mrb[0].mxu0
        %v1521 = vpop.f32.mrb[0].mxu0
        %v1522 = vpop.f32.mrb[0].mxu0
        %1523 = vdwg.mxu0
        %1524 = vrot.lane.b32.xlu0 %v1304, 112
        %v1525 = vpop.permute.xlu0 %1524
        %1526 = vrot.lane.b32.xlu0 %v1305, 112
        %v1527 = vpop.permute.xlu0 %1526
        %v1529 = vsel %vm578, %v1525, 0
        %v1532 = vsel %vm578, %v1527, 0
        %1534 = vmatprep.subr.bf16.mxu0 0
        %1535 = vmatpush1.bf16.xpose.msra.mxu0 %v1532
        %1536 = vmatprep.subr.bf16.mxu0 0
        %1537 = vmatpush1.bf16.xpose.msra.mxu0 0
        %1538 = vmatprep.subr.bf16.mxu0 0
        %1539 = vmatpush1.bf16.xpose.msra.mxu0 0
        %1540 = vmatprep.subr.bf16.mxu0 0
        %1541 = vmatpush1.bf16.xpose.msra.mxu0 0
        %1542 = vmatprep.subr.bf16.mxu0 0
        %1543 = vmatpush1.bf16.xpose.msra.mxu0 0
        %1544 = vmatprep.subr.bf16.mxu0 0
        %1545 = vmatpush1.bf16.xpose.msra.mxu0 0
        %1546 = vmatprep.subr.bf16.mxu0 0
        %1547 = vmatpush1.bf16.xpose.msra.mxu0 0
        %1548 = vmatprep.subr.bf16.mxu0 0
        %1549 = vmatpush1.bf16.xpose.msra.mxu0 0
        %1550 = vmatprep.subr.bf16.mxu0 0
        %1551 = vmatpush1.bf16.xpose.msra.mxu0 0
        %1552 = vmatprep.subr.bf16.mxu0 0
        %1553 = vmatpush1.bf16.xpose.msra.mxu0 0
        %1554 = vmatprep.subr.bf16.mxu0 0
        %1555 = vmatpush1.bf16.xpose.msra.mxu0 0
        %1556 = vmatprep.subr.bf16.mxu0 0
        %1557 = vmatpush1.bf16.xpose.msra.mxu0 0
        %1558 = vmatprep.subr.bf16.mxu0 0
        %1559 = vmatpush1.bf16.xpose.msra.mxu0 0
        %1560 = vmatprep.subr.bf16.mxu0 0
        %1561 = vmatpush1.bf16.xpose.msra.mxu0 0
        %1562 = vmatprep.subr.bf16.mxu0 0
        %1563 = vmatpush1.bf16.xpose.msra.mxu0 0
        %1564 = vmatprep.subr.bf16.mxu0 0
        %1565 = vmatpush1.bf16.xpose.msra.mxu0 0
        %1566 = vmatprep.mubr.bf16.mxu0 0
        %1567 = vmatmul.mubr.bf16.gmra.mrb[0].mxu0 %v1529
        %v1568 = vpop.f32.mrb[0].mxu0
        %v1569 = vadd.f32 0.0, %v1568
        %v1570 = vpop.f32.mrb[0].mxu0
        %v1571 = vpop.f32.mrb[0].mxu0
        %v1572 = vpop.f32.mrb[0].mxu0
        %1573 = vdwg.mxu0
        %v1574 = vsel %vm578, %v1569, -inf
        %1575 = vmax.xlane.f32.xlu0 %v1574
        %v1576 = vpop.xlane.xlu0 %1575
        %v1577 = vsub.f32 %v1569, %v1576
        %v1578 = vmul.f32 %v1577, 1.442695
        %v1579 = vpow.pop %v1578
        %v1580 = vsel %vm578, %v1579, 0.0
        %1581 = vadd.xlane.f32.xlu0 %v1580
        %v1582 = vpop.xlane.xlu0 %1581
        %v1583 = vrcp.pop %v1582
        %v1584 = vmul.f32 %v1579, %v1583
        %v1585 = vpack.c.bf16 %v1584, %v1584
        %1586 = vrot.lane.b32.xlu0 %v1306, 112
        %v1587 = vpop.permute.xlu0 %1586
        %v1589 = vsel %vm578, %v1585, 0
        %v1592 = vsel %vm642, %v1587, 0
        %1594 = vmatprep.subr.bf16.mxu0 0
        %1595 = vmatpush1.bf16.msra.mxu0 %v1592
        %1596 = vmatprep.subr.bf16.mxu0 0
        %1597 = vmatpush1.bf16.msra.mxu0 0
        %1598 = vmatprep.subr.bf16.mxu0 0
        %1599 = vmatpush1.bf16.msra.mxu0 0
        %1600 = vmatprep.subr.bf16.mxu0 0
        %1601 = vmatpush1.bf16.msra.mxu0 0
        %1602 = vmatprep.subr.bf16.mxu0 0
        %1603 = vmatpush1.bf16.msra.mxu0 0
        %1604 = vmatprep.subr.bf16.mxu0 0
        %1605 = vmatpush1.bf16.msra.mxu0 0
        %1606 = vmatprep.subr.bf16.mxu0 0
        %1607 = vmatpush1.bf16.msra.mxu0 0
        %1608 = vmatprep.subr.bf16.mxu0 0
        %1609 = vmatpush1.bf16.msra.mxu0 0
        %1610 = vmatprep.subr.bf16.mxu0 0
        %1611 = vmatpush1.bf16.msra.mxu0 0
        %1612 = vmatprep.subr.bf16.mxu0 0
        %1613 = vmatpush1.bf16.msra.mxu0 0
        %1614 = vmatprep.subr.bf16.mxu0 0
        %1615 = vmatpush1.bf16.msra.mxu0 0
        %1616 = vmatprep.subr.bf16.mxu0 0
        %1617 = vmatpush1.bf16.msra.mxu0 0
        %1618 = vmatprep.subr.bf16.mxu0 0
        %1619 = vmatpush1.bf16.msra.mxu0 0
        %1620 = vmatprep.subr.bf16.mxu0 0
        %1621 = vmatpush1.bf16.msra.mxu0 0
        %1622 = vmatprep.subr.bf16.mxu0 0
        %1623 = vmatpush1.bf16.msra.mxu0 0
        %1624 = vmatprep.subr.bf16.mxu0 0
        %1625 = vmatpush1.bf16.msra.mxu0 0
        %1626 = vmatprep.mubr.bf16.mxu0 0
        %1627 = vmatmul.mubr.bf16.gmra.mrb[0].mxu0 %v1589
        %v1628 = vpop.f32.mrb[0].mxu0
        %v1629 = vadd.f32 0.0, %v1628
        %v1630 = vpop.f32.mrb[0].mxu0
        %v1631 = vpop.f32.mrb[0].mxu0
        %v1632 = vpop.f32.mrb[0].mxu0
        %1633 = vdwg.mxu0
        %1634 = vrot.lane.b32.xlu0 %v1304, 104
        %v1635 = vpop.permute.xlu0 %1634
        %1636 = vrot.lane.b32.xlu0 %v1305, 104
        %v1637 = vpop.permute.xlu0 %1636
        %v1639 = vsel %vm578, %v1635, 0
        %v1642 = vsel %vm578, %v1637, 0
        %1644 = vmatprep.subr.bf16.mxu0 0
        %1645 = vmatpush1.bf16.xpose.msra.mxu0 %v1642
        %1646 = vmatprep.subr.bf16.mxu0 0
        %1647 = vmatpush1.bf16.xpose.msra.mxu0 0
        %1648 = vmatprep.subr.bf16.mxu0 0
        %1649 = vmatpush1.bf16.xpose.msra.mxu0 0
        %1650 = vmatprep.subr.bf16.mxu0 0
        %1651 = vmatpush1.bf16.xpose.msra.mxu0 0
        %1652 = vmatprep.subr.bf16.mxu0 0
        %1653 = vmatpush1.bf16.xpose.msra.mxu0 0
        %1654 = vmatprep.subr.bf16.mxu0 0
        %1655 = vmatpush1.bf16.xpose.msra.mxu0 0
        %1656 = vmatprep.subr.bf16.mxu0 0
        %1657 = vmatpush1.bf16.xpose.msra.mxu0 0
        %1658 = vmatprep.subr.bf16.mxu0 0
        %1659 = vmatpush1.bf16.xpose.msra.mxu0 0
        %1660 = vmatprep.subr.bf16.mxu0 0
        %1661 = vmatpush1.bf16.xpose.msra.mxu0 0
        %1662 = vmatprep.subr.bf16.mxu0 0
        %1663 = vmatpush1.bf16.xpose.msra.mxu0 0
        %1664 = vmatprep.subr.bf16.mxu0 0
        %1665 = vmatpush1.bf16.xpose.msra.mxu0 0
        %1666 = vmatprep.subr.bf16.mxu0 0
        %1667 = vmatpush1.bf16.xpose.msra.mxu0 0
        %1668 = vmatprep.subr.bf16.mxu0 0
        %1669 = vmatpush1.bf16.xpose.msra.mxu0 0
        %1670 = vmatprep.subr.bf16.mxu0 0
        %1671 = vmatpush1.bf16.xpose.msra.mxu0 0
        %1672 = vmatprep.subr.bf16.mxu0 0
        %1673 = vmatpush1.bf16.xpose.msra.mxu0 0
        %1674 = vmatprep.subr.bf16.mxu0 0
        %1675 = vmatpush1.bf16.xpose.msra.mxu0 0
        %1676 = vmatprep.mubr.bf16.mxu0 0
        %1677 = vmatmul.mubr.bf16.gmra.mrb[0].mxu0 %v1639
        %v1678 = vpop.f32.mrb[0].mxu0
        %v1679 = vadd.f32 0.0, %v1678
        %v1680 = vpop.f32.mrb[0].mxu0
        %v1681 = vpop.f32.mrb[0].mxu0
        %v1682 = vpop.f32.mrb[0].mxu0
        %1683 = vdwg.mxu0
        %v1684 = vsel %vm578, %v1679, -inf
        %1685 = vmax.xlane.f32.xlu0 %v1684
        %v1686 = vpop.xlane.xlu0 %1685
        %v1687 = vsub.f32 %v1679, %v1686
        %v1688 = vmul.f32 %v1687, 1.442695
        %v1689 = vpow.pop %v1688
        %v1690 = vsel %vm578, %v1689, 0.0
        %1691 = vadd.xlane.f32.xlu0 %v1690
        %v1692 = vpop.xlane.xlu0 %1691
        %v1693 = vrcp.pop %v1692
        %v1694 = vmul.f32 %v1689, %v1693
        %v1695 = vpack.c.bf16 %v1694, %v1694
        %1696 = vrot.lane.b32.xlu0 %v1306, 104
        %v1697 = vpop.permute.xlu0 %1696
        %v1699 = vsel %vm578, %v1695, 0
        %v1702 = vsel %vm642, %v1697, 0
        %1704 = vmatprep.subr.bf16.mxu0 0
        %1705 = vmatpush1.bf16.msra.mxu0 %v1702
        %1706 = vmatprep.subr.bf16.mxu0 0
        %1707 = vmatpush1.bf16.msra.mxu0 0
        %1708 = vmatprep.subr.bf16.mxu0 0
        %1709 = vmatpush1.bf16.msra.mxu0 0
        %1710 = vmatprep.subr.bf16.mxu0 0
        %1711 = vmatpush1.bf16.msra.mxu0 0
        %1712 = vmatprep.subr.bf16.mxu0 0
        %1713 = vmatpush1.bf16.msra.mxu0 0
        %1714 = vmatprep.subr.bf16.mxu0 0
        %1715 = vmatpush1.bf16.msra.mxu0 0
        %1716 = vmatprep.subr.bf16.mxu0 0
        %1717 = vmatpush1.bf16.msra.mxu0 0
        %1718 = vmatprep.subr.bf16.mxu0 0
        %1719 = vmatpush1.bf16.msra.mxu0 0
        %1720 = vmatprep.subr.bf16.mxu0 0
        %1721 = vmatpush1.bf16.msra.mxu0 0
        %1722 = vmatprep.subr.bf16.mxu0 0
        %1723 = vmatpush1.bf16.msra.mxu0 0
        %1724 = vmatprep.subr.bf16.mxu0 0
        %1725 = vmatpush1.bf16.msra.mxu0 0
        %1726 = vmatprep.subr.bf16.mxu0 0
        %1727 = vmatpush1.bf16.msra.mxu0 0
        %1728 = vmatprep.subr.bf16.mxu0 0
        %1729 = vmatpush1.bf16.msra.mxu0 0
        %1730 = vmatprep.subr.bf16.mxu0 0
        %1731 = vmatpush1.bf16.msra.mxu0 0
        %1732 = vmatprep.subr.bf16.mxu0 0
        %1733 = vmatpush1.bf16.msra.mxu0 0
        %1734 = vmatprep.subr.bf16.mxu0 0
        %1735 = vmatpush1.bf16.msra.mxu0 0
        %1736 = vmatprep.mubr.bf16.mxu0 0
        %1737 = vmatmul.mubr.bf16.gmra.mrb[0].mxu0 %v1699
        %v1738 = vpop.f32.mrb[0].mxu0
        %v1739 = vadd.f32 0.0, %v1738
        %v1740 = vpop.f32.mrb[0].mxu0
        %v1741 = vpop.f32.mrb[0].mxu0
        %v1742 = vpop.f32.mrb[0].mxu0
        %1743 = vdwg.mxu0
        %1745 = vrot.lane.b32.xlu0 %v1519, 8
        %v1746 = vpop.permute.xlu0 %1745
        %1749 = vrot.lane.b32.xlu0 %v1629, 16
        %v1750 = vpop.permute.xlu0 %1749
        %1753 = vrot.lane.b32.xlu0 %v1739, 24
        %v1754 = vpop.permute.xlu0 %1753
        %v1756 = vsel %vm578, %v1406, %v1746
        %v1757 = vsel %vm1029, %v1756, %v1750
        %v1758 = vsel %vm1031, %v1757, %v1754
        %v1759 = vpack.c.bf16 %v1758, %v1758
        %v1760 = vld [vmem:[#allocation8] sm:$0xf]
        %v1761 = vld [vmem:[#allocation8 + $0x4] sm:$0xf]
        %v1762 = vld [vmem:[#allocation8 + $0x8] sm:$0xf]
        %v1763 = vld [vmem:[#allocation8 + $0xc] sm:$0xf]
        %v1764 = vlaneseq
        %v1765 = vshrl.u32 %v1764, 7
        %v1766 = vsub.s32 3, %v1765
        %v1767 = vrot.slane %v505, %v1766
        %v1772 = vunpack.c.l.b16 %v1760
        %v1773 = vunpack.c.l.b16 %v1761
        %v1774 = vunpack.c.l.b16 %v1762
        %v1775 = vunpack.c.l.b16 %v1763
        %v1776 = vpack.c.b16 %v1773, %v1772
        %v1777 = vpack.c.b16 %v1775, %v1774
        %v1781 = vsel %vm530, %v1759, 0
        %1783 = vmatprep.subr.bf16.mxu0 0
        %1784 = vmatpush1.bf16.msra.mxu0 %v1776
        %1785 = vmatprep.subr.bf16.mxu0 0
        %1786 = vmatpush1.bf16.msra.mxu0 %v1777
        %1787 = vmatprep.subr.bf16.mxu0 0
        %1788 = vmatpush1.bf16.msra.mxu0 0
        %1789 = vmatprep.subr.bf16.mxu0 0
        %1790 = vmatpush1.bf16.msra.mxu0 0
        %1791 = vmatprep.subr.bf16.mxu0 0
        %1792 = vmatpush1.bf16.msra.mxu0 0
        %1793 = vmatprep.subr.bf16.mxu0 0
        %1794 = vmatpush1.bf16.msra.mxu0 0
        %1795 = vmatprep.subr.bf16.mxu0 0
        %1796 = vmatpush1.bf16.msra.mxu0 0
        %1797 = vmatprep.subr.bf16.mxu0 0
        %1798 = vmatpush1.bf16.msra.mxu0 0
        %1799 = vmatprep.subr.bf16.mxu0 0
        %1800 = vmatpush1.bf16.msra.mxu0 0
        %1801 = vmatprep.subr.bf16.mxu0 0
        %1802 = vmatpush1.bf16.msra.mxu0 0
        %1803 = vmatprep.subr.bf16.mxu0 0
        %1804 = vmatpush1.bf16.msra.mxu0 0
        %1805 = vmatprep.subr.bf16.mxu0 0
        %1806 = vmatpush1.bf16.msra.mxu0 0
        %1807 = vmatprep.subr.bf16.mxu0 0
        %1808 = vmatpush1.bf16.msra.mxu0 0
        %1809 = vmatprep.subr.bf16.mxu0 0
        %1810 = vmatpush1.bf16.msra.mxu0 0
        %1811 = vmatprep.subr.bf16.mxu0 0
        %1812 = vmatpush1.bf16.msra.mxu0 0
        %1813 = vmatprep.subr.bf16.mxu0 0
        %1814 = vmatpush1.bf16.msra.mxu0 0
        %1815 = vmatprep.mubr.bf16.mxu0 0
        %1816 = vmatmul.mubr.bf16.gmra.mrb[0].mxu0 %v1781
        %v1817 = vpop.f32.mrb[0].mxu0
        %v1818 = vadd.f32 %v1767, %v1817
        %v1819 = vpop.f32.mrb[0].mxu0
        %v1820 = vpop.f32.mrb[0].mxu0
        %v1821 = vpop.f32.mrb[0].mxu0
        %1822 = vdwg.mxu0
        %v1823 = vadd.f32 %v1121, %v1818
        %v1824 = vsel %vm530, %v1823, 0.0
        %1825 = vadd.xlane.f32.xlu0 %v1824
        %v1826 = vpop.xlane.xlu0 %1825
        %v1827 = vmul.f32 %v1826, %v1101
        %v1828 = vsub.f32 %v1823, %v1827
        %v1829 = vmul.f32 %v1828, %v1828
        %v1830 = vsel %vm530, %v1829, 0.0
        %1831 = vadd.xlane.f32.xlu0 %v1830
        %v1832 = vpop.xlane.xlu0 %1831
        %v1833 = vmul.f32 %v1832, %v1101
        %v1834 = vadd.f32 %v1833, 1e-05
        %v1835 = vrsqrt.pop %v1834
        %v1836 = vmul.f32 %v1828, %v1835
        %v1837 = vlaneseq
        %v1838 = vshrl.u32 %v1837, 7
        %v1839 = vsub.s32 4, %v1838
        %v1840 = vrot.slane %v505, %v1839
        %v1841 = vmul.f32 %v1836, %v1840
        %v1842 = vlaneseq
        %v1843 = vshrl.u32 %v1842, 7
        %v1844 = vsub.s32 5, %v1843
        %v1845 = vrot.slane %v505, %v1844
        %v1846 = vadd.f32 %v1841, %v1845
        %v1847 = vpack.c.bf16 %v1846, %v1846
        %v1848 = vld [vmem:[#allocation10] sm:$0xf]
        %v1849 = vld [vmem:[#allocation10 + $0x4] sm:$0xf]
        %v1850 = vld [vmem:[#allocation10 + $0x8] sm:$0xf]
        %v1851 = vld [vmem:[#allocation10 + $0xc] sm:$0xf]
        %v1853 = vlaneseq
        %v1854 = vshrl.u32 %v1853, 7
        %v1855 = vsub.s32 0, %v1854
        %v1856 = vrot.slane %v507, %v1855
        %v1862 = vunpack.c.l.b16 %v1848
        %v1863 = vunpack.c.l.b16 %v1849
        %v1864 = vunpack.c.l.b16 %v1850
        %v1865 = vunpack.c.l.b16 %v1851
        %v1866 = vpack.c.b16 %v1863, %v1862
        %v1867 = vpack.c.b16 %v1865, %v1864
        %v1871 = vsel %vm530, %v1847, 0
        %1873 = vmatprep.subr.bf16.mxu0 0
        %1874 = vmatpush1.bf16.msra.mxu0 %v1866
        %1875 = vmatprep.subr.bf16.mxu0 0
        %1876 = vmatpush1.bf16.msra.mxu0 %v1867
        %1877 = vmatprep.subr.bf16.mxu0 0
        %1878 = vmatpush1.bf16.msra.mxu0 0
        %1879 = vmatprep.subr.bf16.mxu0 0
        %1880 = vmatpush1.bf16.msra.mxu0 0
        %1881 = vmatprep.subr.bf16.mxu0 0
        %1882 = vmatpush1.bf16.msra.mxu0 0
        %1883 = vmatprep.subr.bf16.mxu0 0
        %1884 = vmatpush1.bf16.msra.mxu0 0
        %1885 = vmatprep.subr.bf16.mxu0 0
        %1886 = vmatpush1.bf16.msra.mxu0 0
        %1887 = vmatprep.subr.bf16.mxu0 0
        %1888 = vmatpush1.bf16.msra.mxu0 0
        %1889 = vmatprep.subr.bf16.mxu0 0
        %1890 = vmatpush1.bf16.msra.mxu0 0
        %1891 = vmatprep.subr.bf16.mxu0 0
        %1892 = vmatpush1.bf16.msra.mxu0 0
        %1893 = vmatprep.subr.bf16.mxu0 0
        %1894 = vmatpush1.bf16.msra.mxu0 0
        %1895 = vmatprep.subr.bf16.mxu0 0
        %1896 = vmatpush1.bf16.msra.mxu0 0
        %1897 = vmatprep.subr.bf16.mxu0 0
        %1898 = vmatpush1.bf16.msra.mxu0 0
        %1899 = vmatprep.subr.bf16.mxu0 0
        %1900 = vmatpush1.bf16.msra.mxu0 0
        %1901 = vmatprep.subr.bf16.mxu0 0
        %1902 = vmatpush1.bf16.msra.mxu0 0
        %1903 = vmatprep.subr.bf16.mxu0 0
        %1904 = vmatpush1.bf16.msra.mxu0 0
        %1905 = vmatprep.mubr.bf16.mxu0 0
        %1906 = vmatmul.mubr.bf16.gmra.mrb[0].mxu0 %v1871
        %v1907 = vpop.f32.mrb[0].mxu0
        %v1908 = vadd.f32 %v1856, %v1907
        %v1909 = vpop.f32.mrb[0].mxu0
        %v1910 = vpop.f32.mrb[0].mxu0
        %v1911 = vpop.f32.mrb[0].mxu0
        %1912 = vdwg.mxu0
        %v1913 = vmax.f32 %v1908, 0.0
        %v1914 = vpack.c.bf16 %v1913, %v1913
        %v1915 = vld [vmem:[%s8] sm:$0xf]
        %v1916 = vld [vmem:[%s8 + $0x4] sm:$0xf]
        %v1917 = vld [vmem:[%s8 + $0x8] sm:$0xf]
        %v1918 = vld [vmem:[%s8 + $0xc] sm:$0xf]
        %v1919 = vld [vmem:[%s8 + $0x10] sm:$0xf]
        %v1920 = vld [vmem:[%s8 + $0x14] sm:$0xf]
        %v1921 = vld [vmem:[%s8 + $0x18] sm:$0xf]
        %v1922 = vld [vmem:[%s8 + $0x1c] sm:$0xf]
        %v1923 = vld [vmem:[%s8 + $0x20] sm:$0xf]
        %v1924 = vld [vmem:[%s8 + $0x24] sm:$0xf]
        %v1925 = vld [vmem:[%s8 + $0x28] sm:$0xf]
        %v1926 = vld [vmem:[%s8 + $0x2c] sm:$0xf]
        %v1927 = vld [vmem:[%s8 + $0x30] sm:$0xf]
        %v1928 = vld [vmem:[%s8 + $0x34] sm:$0xf]
        %v1929 = vld [vmem:[%s8 + $0x38] sm:$0xf]
        %v1930 = vld [vmem:[%s8 + $0x3c] sm:$0xf]
        %v1931 = vlaneseq
        %v1932 = vshrl.u32 %v1931, 7
        %v1933 = vsub.s32 6, %v1932
        %v1934 = vrot.slane %v505, %v1933
        %v1951 = vunpack.c.l.b16 %v1915
        %v1952 = vunpack.c.l.b16 %v1916
        %v1953 = vunpack.c.l.b16 %v1917
        %v1954 = vunpack.c.l.b16 %v1918
        %v1955 = vunpack.c.l.b16 %v1919
        %v1956 = vunpack.c.l.b16 %v1920
        %v1957 = vunpack.c.l.b16 %v1921
        %v1958 = vunpack.c.l.b16 %v1922
        %v1959 = vunpack.c.l.b16 %v1923
        %v1960 = vunpack.c.l.b16 %v1924
        %v1961 = vunpack.c.l.b16 %v1925
        %v1962 = vunpack.c.l.b16 %v1926
        %v1963 = vunpack.c.l.b16 %v1927
        %v1964 = vunpack.c.l.b16 %v1928
        %v1965 = vunpack.c.l.b16 %v1929
        %v1966 = vunpack.c.l.b16 %v1930
        %v1967 = vpack.c.b16 %v1952, %v1951
        %v1968 = vpack.c.b16 %v1954, %v1953
        %v1969 = vpack.c.b16 %v1956, %v1955
        %v1970 = vpack.c.b16 %v1958, %v1957
        %v1971 = vpack.c.b16 %v1960, %v1959
        %v1972 = vpack.c.b16 %v1962, %v1961
        %v1973 = vpack.c.b16 %v1964, %v1963
        %v1974 = vpack.c.b16 %v1966, %v1965
        %1983 = vmatprep.subr.bf16.mxu0 0
        %1984 = vmatpush1.bf16.msra.mxu0 %v1967
        %1985 = vmatprep.subr.bf16.mxu0 0
        %1986 = vmatpush1.bf16.msra.mxu0 %v1968
        %1987 = vmatprep.subr.bf16.mxu0 0
        %1988 = vmatpush1.bf16.msra.mxu0 %v1969
        %1989 = vmatprep.subr.bf16.mxu0 0
        %1990 = vmatpush1.bf16.msra.mxu0 %v1970
        %1991 = vmatprep.subr.bf16.mxu0 0
        %1992 = vmatpush1.bf16.msra.mxu0 %v1971
        %1993 = vmatprep.subr.bf16.mxu0 0
        %1994 = vmatpush1.bf16.msra.mxu0 %v1972
        %1995 = vmatprep.subr.bf16.mxu0 0
        %1996 = vmatpush1.bf16.msra.mxu0 %v1973
        %1997 = vmatprep.subr.bf16.mxu0 0
        %1998 = vmatpush1.bf16.msra.mxu0 %v1974
        %1999 = vmatprep.subr.bf16.mxu0 0
        %2000 = vmatpush1.bf16.msra.mxu0 0
        %2001 = vmatprep.subr.bf16.mxu0 0
        %2002 = vmatpush1.bf16.msra.mxu0 0
        %2003 = vmatprep.subr.bf16.mxu0 0
        %2004 = vmatpush1.bf16.msra.mxu0 0
        %2005 = vmatprep.subr.bf16.mxu0 0
        %2006 = vmatpush1.bf16.msra.mxu0 0
        %2007 = vmatprep.subr.bf16.mxu0 0
        %2008 = vmatpush1.bf16.msra.mxu0 0
        %2009 = vmatprep.subr.bf16.mxu0 0
        %2010 = vmatpush1.bf16.msra.mxu0 0
        %2011 = vmatprep.subr.bf16.mxu0 0
        %2012 = vmatpush1.bf16.msra.mxu0 0
        %2013 = vmatprep.subr.bf16.mxu0 0
        %2014 = vmatpush1.bf16.msra.mxu0 0
        %2015 = vmatprep.mubr.bf16.mxu0 0
        %2016 = vmatmul.mubr.bf16.gmra.mrb[0].mxu0 %v1914
        %v2017 = vpop.f32.mrb[0].mxu0
        %v2018 = vadd.f32 %v1934, %v2017
        %v2019 = vpop.f32.mrb[0].mxu0
        %v2020 = vpop.f32.mrb[0].mxu0
        %v2021 = vpop.f32.mrb[0].mxu0
        %2022 = vdwg.mxu0
        %v2023 = vadd.f32 %v1846, %v2018
        %v2024 = vsel %vm530, %v2023, 0.0
        %2025 = vadd.xlane.f32.xlu0 %v2024
        %v2026 = vpop.xlane.xlu0 %2025
        %v2027 = vmul.f32 %v2026, %v1101
        %v2028 = vsub.f32 %v2023, %v2027
        %v2029 = vmul.f32 %v2028, %v2028
        %v2030 = vsel %vm530, %v2029, 0.0
        %2031 = vadd.xlane.f32.xlu0 %v2030
        %v2032 = vpop.xlane.xlu0 %2031
        %v2033 = vmul.f32 %v2032, %v1101
        %v2034 = vadd.f32 %v2033, 1e-05
        %v2035 = vrsqrt.pop %v2034
        %v2036 = vmul.f32 %v2028, %v2035
        %v2037 = vlaneseq
        %v2038 = vshrl.u32 %v2037, 7
        %v2039 = vsub.s32 7, %v2038
        %v2040 = vrot.slane %v505, %v2039
        %v2041 = vmul.f32 %v2036, %v2040
        %v2042 = vlaneseq
        %v2043 = vshrl.u32 %v2042, 7
        %v2044 = vsub.s32 0, %v2043
        %v2045 = vrot.slane %v506, %v2044
        %v2046 = vadd.f32 %v2041, %v2045
        %2047 = vst.msk [vmem:[%s501] sm:$0xff] %vm530, %v2046
        %s2048 = sand.u32 %s286, 1
        %s2049 = scalar_lea.sflag [#allocation4], %s2048
        %s2050 = sand.u32 %s286, 1
        %s2051 = smul.addr %s2050, 8
        %s2052 = scalar_lea.vmem [#allocation11], %s2051
        // Predicated region
        $region85: #{tpu_custom_call.1} parent=63 // pred_check
          %p2053 = pneg %p296
        $region86: #{tpu_custom_call.1} parent=63 // pred_check_branch
          %2055 = sbr.rel (%p2053) target = $region88
        $region87: #{tpu_custom_call.1} parent=63 // pred_region
          %s2057 = ssub.s32 128, 128
          %2058 = vsyncadd %s2049, %s2057
          %s2059 = smul.addr %s32, 128
          %s2060 = scalar_lea.hbm %s11, %s2059
          %s2062 = sshll.u32 %s2052, 4
          %s2063 = int_to_ptr.vmem [resolvable:$true] %s2062
          %2065 = dma.vmem_to_hbm [thread:$0]  %s2063, 128, %s2060, %s2049
        $region88: #{tpu_custom_call.1} parent=63 // pred_fallthru
          _
      $region64: #{tpu_custom_call.1} parent=5 // pred_fallthru
        _
      %p2066 = scmp.le.s32.totalorder 2, %s27
      // Predicated region
      $region89: #{tpu_custom_call.1} parent=5 // pred_check
        %p2067 = pneg %p2066
      $region90: #{tpu_custom_call.1} parent=5 // pred_check_branch
        %2069 = sbr.rel (%p2067) target = $region92
      $region91: #{tpu_custom_call.1} parent=5 // pred_region
        %s2070 = ssub.s32 %s27, 2
        // Predicated region
        $region93: #{tpu_custom_call.1} parent=91 // pred_check
          %p2071 = pneg %p302
        $region94: #{tpu_custom_call.1} parent=91 // pred_check_branch
          %2073 = sbr.rel (%p2071) target = $region96
        $region95: #{tpu_custom_call.1} parent=91 // pred_region
          %s2074 = sand.u32 %s287, 1
          %s2075 = scalar_lea.sflag [#allocation4], %s2074
          %s2076 = sand.u32 %s287, 1
          %s2077 = smul.addr %s2076, 8
          %s2078 = scalar_lea.vmem [#allocation11], %s2077
          %2079 = dma.done %s2075, 128
        $region96: #{tpu_custom_call.1} parent=91 // pred_fallthru
          _
      $region92: #{tpu_custom_call.1} parent=5 // pred_fallthru
        _
    $region6: #{tpu_custom_call.1} parent=1 // loop_footer
      %s31 = sadd.s32 1, %s27
    $region7: #{tpu_custom_call.1} parent=1 // loop_footer_branch
      %26 = sbr.rel target = $region3
    $region8: #{tpu_custom_call.1} parent=1 // loop_exit
      _
    %2080 = vsyncpa [#allocation3], 1
    %s2081 = scalar_lea.sflag [#allocation3], 1
    %2082 = vsyncpa %s2081, 1
    %2083 = vsyncpa [#allocation6], 1
    %s2084 = scalar_lea.sflag [#allocation6], 1
    %2085 = vsyncpa %s2084, 1
    %2086 = vsyncpa [#allocation9], 1
    %2087 = vsyncpa [#allocation4], 1
    %s2088 = scalar_lea.sflag [#allocation4], 1
    %2089 = vsyncpa %s2088, 1

// kernel: tpu_custom_call.1
$region0: #{tpu_custom_call.1}
  #allocation0 [shape = 'u32[]', space=smem, size = 0x4, offset = 0x4, fixed_abs, tag = 'smem constant byte address 0x4 - core index']
  #allocation1 [shape = 'u32[144,128]{1,0:T(1,128)}', space=vmem, size = 0x12000, scoped, tag = 'internal scratch']
  %s0 = inlined_call_operand.hbm [shape: bf16[16,32], index: 0, kind: input, shape index: {}]
  %s1 = inlined_call_operand.hbm [shape: bf16[16,32], index: 1, kind: input, shape index: {}]
  %s2 = inlined_call_operand.hbm [shape: bf16[16,32], index: 2, kind: input, shape index: {}]
  %s3 = inlined_call_operand.vmem [shape: bf16[32,96], index: 3, kind: input, shape index: {}]
  %s4 = inlined_call_operand.vmem [shape: bf16[32,32], index: 4, kind: input, shape index: {}]
  %s5 = inlined_call_operand.vmem [shape: bf16[3,32,32], index: 5, kind: input, shape index: {}]
  %s6 = inlined_call_operand.hbm [shape: bf16[32,32], index: 6, kind: input, shape index: {}]
  %s7 = inlined_call_operand.hbm [shape: bf16[32,128], index: 7, kind: input, shape index: {}]
  %s8 = inlined_call_operand.vmem [shape: bf16[128,32], index: 8, kind: input, shape index: {}]
  %s9 = inlined_call_operand.vmem [shape: f32[1,128], index: 9, kind: input, shape index: {}]
  %s10 = inlined_call_operand.vmem [shape: f32[9,32], index: 10, kind: input, shape index: {}]
  %s11 = inlined_call_operand.hbm [shape: f32[16,32], index: 11, kind: output, shape index: {}]
  %s12 = sld [smem:[#allocation0]]
  $region97: #{tpu_custom_call.1} parent=0
    _
  %s14 = ssub.s32 1, %s12
  %s15 = scalar_select 0, %s14, %s12
  $region1: #{tpu_custom_call.1} parent=0
    #allocation2 [shape = 'u8[4096]{0}', space=vmem, size = 0x1000, scoped, tag = 'input window, operand 0']
    #allocation3 [shape = 's32[2]{0}', space=sflag, size = 0x8, scoped, tag = 'scoped memory for tpu_custom_call.1']
    #allocation4 [shape = 's32[2]{0}', space=sflag, size = 0x8, scoped, tag = 'scoped memory for tpu_custom_call.1']
    #allocation5 [shape = 'u8[4096]{0}', space=vmem, size = 0x1000, scoped, tag = 'input window, operand 1']
    #allocation6 [shape = 's32[2]{0}', space=sflag, size = 0x8, scoped, tag = 'scoped memory for tpu_custom_call.1']
    #allocation7 [shape = 'u8[4096]{0}', space=vmem, size = 0x1000, scoped, tag = 'input window, operand 2']
    #allocation8 [shape = 'u8[8192]{0}', space=vmem, size = 0x2000, scoped, tag = 'input window, operand 6, single buffered']
    #allocation9 [shape = 's32[1]{0}', space=sflag, size = 0x4, scoped, tag = 'scoped memory for tpu_custom_call.1']
    #allocation10 [shape = 'u8[8192]{0}', space=vmem, size = 0x2000, scoped, tag = 'input window, operand 7, single buffered']
    #allocation11 [shape = 'u8[8192]{0}', space=vmem, size = 0x2000, scoped, tag = 'output window, operand 0']
    %16 = vsyncpa [#allocation3], 0
    %s17 = scalar_lea.sflag [#allocation3], 1
    %18 = vsyncpa %s17, 0
    %19 = vsyncpa [#allocation6], 0
    %s20 = scalar_lea.sflag [#allocation6], 1
    %21 = vsyncpa %s20, 0
    %22 = vsyncpa [#allocation9], 0
    %23 = vsyncpa [#allocation4], 0
    %s24 = scalar_lea.sflag [#allocation4], 1
    %25 = vsyncpa %s24, 0
    loop: start=0, step=1, limit=4
    $region2: #{tpu_custom_call.1} parent=1 // loop_pre_header
      _
    $region3: #{tpu_custom_call.1} parent=1 // loop_header
      %s27 = sphi 0, %s31
      %p28 = scmp.ge.s32.totalorder %s27, 4
      %s37 = sphi 0, %s39
      %s40 = sphi 0, %s37
      %s41 = sphi 0, %s40
      %s57 = sphi 0, %s41
      %s63 = sphi 0, %s65
      %s66 = sphi 0, %s63
      %s67 = sphi 0, %s66
      %s83 = sphi 0, %s67
      %s89 = sphi 0, %s91
      %s92 = sphi 0, %s89
      %s93 = sphi 0, %s92
      %s109 = sphi 0, %s93
      %s113 = sphi 0, %s113
      %s115 = sphi 0, %s113
      %s116 = sphi 0, %s115
      %s130 = sphi 0, %s116
      %s134 = sphi 0, %s134
      %s136 = sphi 0, %s134
      %s137 = sphi 0, %s136
      %s151 = sphi 0, %s137
      %s155 = sphi 0, %s155
      %s157 = sphi 0, %s155
      %s158 = sphi 0, %s157
      %s172 = sphi 0, %s158
      %s176 = sphi 0, %s176
      %s178 = sphi 0, %s176
      %s179 = sphi 0, %s178
      %s193 = sphi 0, %s179
      %s197 = sphi 0, %s197
      %s199 = sphi 0, %s197
      %s200 = sphi 0, %s199
      %s214 = sphi 0, %s200
      %s218 = sphi 0, %s218
      %s220 = sphi 0, %s218
      %s221 = sphi 0, %s220
      %s235 = sphi 0, %s221
      %s239 = sphi 0, %s239
      %s241 = sphi 0, %s239
      %s242 = sphi 0, %s241
      %s256 = sphi 0, %s242
      %s260 = sphi 0, %s260
      %s262 = sphi 0, %s260
      %s263 = sphi 0, %s262
      %s277 = sphi 0, %s263
      %s283 = sphi 0, %s285
      %s286 = sphi 0, %s283
      %s287 = sphi 0, %s286
      %s303 = sphi 0, %s287
    $region4: #{tpu_custom_call.1} parent=1 // loop_header_branch
      %30 = sbr.rel (%p28) target = $region8
    $region5: #{tpu_custom_call.1} parent=1 // loop_body
      %s32 = ssub.s32 %s27, 1
      %s33 = ssub.s32 %s27, 2
      %s34 = sadd.s32 %s27, 1
      %s35 = ssub.s32 %s27, %s34
      %p36 = scmp.eq.s32.totalorder %s35, 0
      %s38 = sadd.s32 %s37, 1
      %s39 = scalar_select %p36, %s37, %s38
      %p42 = pneg %p36
      %p43 = scmp.eq.s32.totalorder %s27, 1
      %p44 = por %p42, %p43
      %p45 = scmp.ne.s32.totalorder %s37, %s40
      %p46 = scmp.eq.s32.totalorder %s27, 0
      %p47 = por %p45, %p46
      %p48 = scmp.ne.s32.totalorder %s37, %s40
      %p49 = scmp.eq.s32.totalorder %s32, 1
      %p50 = por %p48, %p49
      %p51 = scmp.ne.s32.totalorder %s40, %s41
      %p52 = scmp.eq.s32.totalorder %s32, 0
      %p53 = por %p51, %p52
      %p54 = scmp.ne.s32.totalorder %s40, %s41
      %p55 = scmp.eq.s32.totalorder %s33, 1
      %p56 = por %p54, %p55
      %p58 = scmp.ne.s32.totalorder %s41, %s57
      %p59 = scmp.eq.s32.totalorder %s33, 0
      %p60 = por %p58, %p59
      %s61 = ssub.s32 %s27, %s34
      %p62 = scmp.eq.s32.totalorder %s61, 0
      %s64 = sadd.s32 %s63, 1
      %s65 = scalar_select %p62, %s63, %s64
      %p68 = pneg %p62
      %p69 = scmp.eq.s32.totalorder %s27, 1
      %p70 = por %p68, %p69
      %p71 = scmp.ne.s32.totalorder %s63, %s66
      %p72 = scmp.eq.s32.totalorder %s27, 0
      %p73 = por %p71, %p72
      %p74 = scmp.ne.s32.totalorder %s63, %s66
      %p75 = scmp.eq.s32.totalorder %s32, 1
      %p76 = por %p74, %p75
      %p77 = scmp.ne.s32.totalorder %s66, %s67
      %p78 = scmp.eq.s32.totalorder %s32, 0
      %p79 = por %p77, %p78
      %p80 = scmp.ne.s32.totalorder %s66, %s67
      %p81 = scmp.eq.s32.totalorder %s33, 1
      %p82 = por %p80, %p81
      %p84 = scmp.ne.s32.totalorder %s67, %s83
      %p85 = scmp.eq.s32.totalorder %s33, 0
      %p86 = por %p84, %p85
      %s87 = ssub.s32 %s27, %s34
      %p88 = scmp.eq.s32.totalorder %s87, 0
      %s90 = sadd.s32 %s89, 1
      %s91 = scalar_select %p88, %s89, %s90
      %p94 = pneg %p88
      %p95 = scmp.eq.s32.totalorder %s27, 1
      %p96 = por %p94, %p95
      %p97 = scmp.ne.s32.totalorder %s89, %s92
      %p98 = scmp.eq.s32.totalorder %s27, 0
      %p99 = por %p97, %p98
      %p100 = scmp.ne.s32.totalorder %s89, %s92
      %p101 = scmp.eq.s32.totalorder %s32, 1
      %p102 = por %p100, %p101
      %p103 = scmp.ne.s32.totalorder %s92, %s93
      %p104 = scmp.eq.s32.totalorder %s32, 0
      %p105 = por %p103, %p104
      %p106 = scmp.ne.s32.totalorder %s92, %s93
      %p107 = scmp.eq.s32.totalorder %s33, 1
      %p108 = por %p106, %p107
      %p110 = scmp.ne.s32.totalorder %s93, %s109
      %p111 = scmp.eq.s32.totalorder %s33, 0
      %p112 = por %p110, %p111
      %s114 = sadd.s32 %s113, 1
      %p117 = scmp.eq.s32.totalorder %s27, 1
      %p118 = scmp.ne.s32.totalorder %s113, %s115
      %p119 = scmp.eq.s32.totalorder %s27, 0
      %p120 = por %p118, %p119
      %p121 = scmp.ne.s32.totalorder %s113, %s115
      %p122 = scmp.eq.s32.totalorder %s32, 1
      %p123 = por %p121, %p122
      %p124 = scmp.ne.s32.totalorder %s115, %s116
      %p125 = scmp.eq.s32.totalorder %s32, 0
      %p126 = por %p124, %p125
      %p127 = scmp.ne.s32.totalorder %s115, %s116
      %p128 = scmp.eq.s32.totalorder %s33, 1
      %p129 = por %p127, %p128
      %p131 = scmp.ne.s32.totalorder %s116, %s130
      %p132 = scmp.eq.s32.totalorder %s33, 0
      %p133 = por %p131, %p132
      %s135 = sadd.s32 %s134, 1
      %p138 = scmp.eq.s32.totalorder %s27, 1
      %p139 = scmp.ne.s32.totalorder %s134, %s136
      %p140 = scmp.eq.s32.totalorder %s27, 0
      %p141 = por %p139, %p140
      %p142 = scmp.ne.s32.totalorder %s134, %s136
      %p143 = scmp.eq.s32.totalorder %s32, 1
      %p144 = por %p142, %p143
      %p145 = scmp.ne.s32.totalorder %s136, %s137
      %p146 = scmp.eq.s32.totalorder %s32, 0
      %p147 = por %p145, %p146
      %p148 = scmp.ne.s32.totalorder %s136, %s137
      %p149 = scmp.eq.s32.totalorder %s33, 1
      %p150 = por %p148, %p149
      %p152 = scmp.ne.s32.totalorder %s137, %s151
      %p153 = scmp.eq.s32.totalorder %s33, 0
      %p154 = por %p152, %p153
      %s156 = sadd.s32 %s155, 1
      %p159 = scmp.eq.s32.totalorder %s27, 1
      %p160 = scmp.ne.s32.totalorder %s155, %s157
      %p161 = scmp.eq.s32.totalorder %s27, 0
      %p162 = por %p160, %p161
      %p163 = scmp.ne.s32.totalorder %s155, %s157
      %p164 = scmp.eq.s32.totalorder %s32, 1
      %p165 = por %p163, %p164
      %p166 = scmp.ne.s32.totalorder %s157, %s158
      %p167 = scmp.eq.s32.totalorder %s32, 0
      %p168 = por %p166, %p167
      %p169 = scmp.ne.s32.totalorder %s157, %s158
      %p170 = scmp.eq.s32.totalorder %s33, 1
      %p171 = por %p169, %p170
      %p173 = scmp.ne.s32.totalorder %s158, %s172
      %p174 = scmp.eq.s32.totalorder %s33, 0
      %p175 = por %p173, %p174
      %s177 = sadd.s32 %s176, 1
      %p180 = scmp.eq.s32.totalorder %s27, 1
      %p181 = scmp.ne.s32.totalorder %s176, %s178
      %p182 = scmp.eq.s32.totalorder %s27, 0
      %p183 = por %p181, %p182
      %p184 = scmp.ne.s32.totalorder %s176, %s178
      %p185 = scmp.eq.s32.totalorder %s32, 1
      %p186 = por %p184, %p185
      %p187 = scmp.ne.s32.totalorder %s178, %s179
      %p188 = scmp.eq.s32.totalorder %s32, 0
      %p189 = por %p187, %p188
      %p190 = scmp.ne.s32.totalorder %s178, %s179
      %p191 = scmp.eq.s32.totalorder %s33, 1
      %p192 = por %p190, %p191
      %p194 = scmp.ne.s32.totalorder %s179, %s193
      %p195 = scmp.eq.s32.totalorder %s33, 0
      %p196 = por %p194, %p195
      %s198 = sadd.s32 %s197, 1
      %p201 = scmp.eq.s32.totalorder %s27, 1
      %p202 = scmp.ne.s32.totalorder %s197, %s199
      %p203 = scmp.eq.s32.totalorder %s27, 0
      %p204 = por %p202, %p203
      %p205 = scmp.ne.s32.totalorder %s197, %s199
      %p206 = scmp.eq.s32.totalorder %s32, 1
      %p207 = por %p205, %p206
      %p208 = scmp.ne.s32.totalorder %s199, %s200
      %p209 = scmp.eq.s32.totalorder %s32, 0
      %p210 = por %p208, %p209
      %p211 = scmp.ne.s32.totalorder %s199, %s200
      %p212 = scmp.eq.s32.totalorder %s33, 1
      %p213 = por %p211, %p212
      %p215 = scmp.ne.s32.totalorder %s200, %s214
      %p216 = scmp.eq.s32.totalorder %s33, 0
      %p217 = por %p215, %p216
      %s219 = sadd.s32 %s218, 1
      %p222 = scmp.eq.s32.totalorder %s27, 1
      %p223 = scmp.ne.s32.totalorder %s218, %s220
      %p224 = scmp.eq.s32.totalorder %s27, 0
      %p225 = por %p223, %p224
      %p226 = scmp.ne.s32.totalorder %s218, %s220
      %p227 = scmp.eq.s32.totalorder %s32, 1
      %p228 = por %p226, %p227
      %p229 = scmp.ne.s32.totalorder %s220, %s221
      %p230 = scmp.eq.s32.totalorder %s32, 0
      %p231 = por %p229, %p230
      %p232 = scmp.ne.s32.totalorder %s220, %s221
      %p233 = scmp.eq.s32.totalorder %s33, 1
      %p234 = por %p232, %p233
      %p236 = scmp.ne.s32.totalorder %s221, %s235
      %p237 = scmp.eq.s32.totalorder %s33, 0
      %p238 = por %p236, %p237
      %s240 = sadd.s32 %s239, 1
      %p243 = scmp.eq.s32.totalorder %s27, 1
      %p244 = scmp.ne.s32.totalorder %s239, %s241
      %p245 = scmp.eq.s32.totalorder %s27, 0
      %p246 = por %p244, %p245
      %p247 = scmp.ne.s32.totalorder %s239, %s241
      %p248 = scmp.eq.s32.totalorder %s32, 1
      %p249 = por %p247, %p248
      %p250 = scmp.ne.s32.totalorder %s241, %s242
      %p251 = scmp.eq.s32.totalorder %s32, 0
      %p252 = por %p250, %p251
      %p253 = scmp.ne.s32.totalorder %s241, %s242
      %p254 = scmp.eq.s32.totalorder %s33, 1
      %p255 = por %p253, %p254
      %p257 = scmp.ne.s32.totalorder %s242, %s256
      %p258 = scmp.eq.s32.totalorder %s33, 0
      %p259 = por %p257, %p258
      %s261 = sadd.s32 %s260, 1
      %p264 = scmp.eq.s32.totalorder %s27, 1
      %p265 = scmp.ne.s32.totalorder %s260, %s262
      %p266 = scmp.eq.s32.totalorder %s27, 0
      %p267 = por %p265, %p266
      %p268 = scmp.ne.s32.totalorder %s260, %s262
      %p269 = scmp.eq.s32.totalorder %s32, 1
      %p270 = por %p268, %p269
      %p271 = scmp.ne.s32.totalorder %s262, %s263
      %p272 = scmp.eq.s32.totalorder %s32, 0
      %p273 = por %p271, %p272
      %p274 = scmp.ne.s32.totalorder %s262, %s263
      %p275 = scmp.eq.s32.totalorder %s33, 1
      %p276 = por %p274, %p275
      %p278 = scmp.ne.s32.totalorder %s263, %s277
      %p279 = scmp.eq.s32.totalorder %s33, 0
      %p280 = por %p278, %p279
      %s281 = ssub.s32 %s27, %s34
      %p282 = scmp.eq.s32.totalorder %s281, 0
      %s284 = sadd.s32 %s283, 1
      %s285 = scalar_select %p282, %s283, %s284
      %p288 = pneg %p282
      %p289 = scmp.eq.s32.totalorder %s27, 1
      %p290 = por %p288, %p289
      %p291 = scmp.ne.s32.totalorder %s283, %s286
      %p292 = scmp.eq.s32.totalorder %s27, 0
      %p293 = por %p291, %p292
      %p294 = scmp.ne.s32.totalorder %s283, %s286
      %p295 = scmp.eq.s32.totalorder %s32, 1
      %p296 = por %p294, %p295
      %p297 = scmp.ne.s32.totalorder %s286, %s287
      %p298 = scmp.eq.s32.totalorder %s32, 0
      %p299 = por %p297, %p298
      %p300 = scmp.ne.s32.totalorder %s286, %s287
      %p301 = scmp.eq.s32.totalorder %s33, 1
      %p302 = por %p300, %p301
      %p304 = scmp.ne.s32.totalorder %s287, %s303
      %p305 = scmp.eq.s32.totalorder %s33, 0
      %p306 = por %p304, %p305
      %p307 = scmp.le.s32.totalorder 1, %s27
      %p308 = scmp.lt.s32.totalorder %s27, 3
      %p309 = pnand %p307, %p308
      %p310 = pneg %p309
      // Predicated region
      $region9: #{tpu_custom_call.1} parent=5 // pred_check
        _
      $region10: #{tpu_custom_call.1} parent=5 // pred_check_branch
        %312 = sbr.rel (%p309) target = $region12
      $region11: #{tpu_custom_call.1} parent=5 // pred_region
        %s313 = ssub.s32 %s27, 1
        // Predicated region
        $region13: #{tpu_custom_call.1} parent=11 // pred_check
          %p314 = pneg %p126
        $region14: #{tpu_custom_call.1} parent=11 // pred_check_branch
          %316 = sbr.rel (%p314) target = $region16
        $region15: #{tpu_custom_call.1} parent=11 // pred_region
          _
        $region16: #{tpu_custom_call.1} parent=11 // pred_fallthru
          _
        // Predicated region
        $region17: #{tpu_custom_call.1} parent=11 // pred_check
          %p317 = pneg %p147
        $region18: #{tpu_custom_call.1} parent=11 // pred_check_branch
          %319 = sbr.rel (%p317) target = $region20
        $region19: #{tpu_custom_call.1} parent=11 // pred_region
          _
        $region20: #{tpu_custom_call.1} parent=11 // pred_fallthru
          _
        // Predicated region
        $region21: #{tpu_custom_call.1} parent=11 // pred_check
          %p320 = pneg %p168
        $region22: #{tpu_custom_call.1} parent=11 // pred_check_branch
          %322 = sbr.rel (%p320) target = $region24
        $region23: #{tpu_custom_call.1} parent=11 // pred_region
          _
        $region24: #{tpu_custom_call.1} parent=11 // pred_fallthru
          _
        // Predicated region
        $region25: #{tpu_custom_call.1} parent=11 // pred_check
          %p323 = pneg %p189
        $region26: #{tpu_custom_call.1} parent=11 // pred_check_branch
          %325 = sbr.rel (%p323) target = $region28
        $region27: #{tpu_custom_call.1} parent=11 // pred_region
          %s327 = ssub.s32 256, 256
          %328 = vsyncadd [#allocation9], %s327
          %s329 = sshll.u32 [#allocation8], 4
          %s330 = int_to_ptr.vmem [resolvable:$true] %s329
          %335 = dma.hbm_to_vmem [thread:$0]  %s6, 256, %s330, [#allocation9], 64, 64, 4
        $region28: #{tpu_custom_call.1} parent=11 // pred_fallthru
          _
        // Predicated region
        $region29: #{tpu_custom_call.1} parent=11 // pred_check
          %p336 = pneg %p210
        $region30: #{tpu_custom_call.1} parent=11 // pred_check_branch
          %338 = sbr.rel (%p336) target = $region32
        $region31: #{tpu_custom_call.1} parent=11 // pred_region
          %s340 = ssub.s32 256, 256
          %341 = vsyncadd [#allocation9], %s340
          %s342 = sshll.u32 [#allocation10], 4
          %s343 = int_to_ptr.vmem [resolvable:$true] %s342
          %348 = dma.hbm_to_vmem [thread:$0]  %s7, 256, %s343, [#allocation9], 64, 64, 4
        $region32: #{tpu_custom_call.1} parent=11 // pred_fallthru
          _
        // Predicated region
        $region33: #{tpu_custom_call.1} parent=11 // pred_check
          %p349 = pneg %p231
        $region34: #{tpu_custom_call.1} parent=11 // pred_check_branch
          %351 = sbr.rel (%p349) target = $region36
        $region35: #{tpu_custom_call.1} parent=11 // pred_region
          _
        $region36: #{tpu_custom_call.1} parent=11 // pred_fallthru
          _
        // Predicated region
        $region37: #{tpu_custom_call.1} parent=11 // pred_check
          %p352 = pneg %p252
        $region38: #{tpu_custom_call.1} parent=11 // pred_check_branch
          %354 = sbr.rel (%p352) target = $region40
        $region39: #{tpu_custom_call.1} parent=11 // pred_region
          _
        $region40: #{tpu_custom_call.1} parent=11 // pred_fallthru
          _
        // Predicated region
        $region41: #{tpu_custom_call.1} parent=11 // pred_check
          %p355 = pneg %p273
        $region42: #{tpu_custom_call.1} parent=11 // pred_check_branch
          %357 = sbr.rel (%p355) target = $region44
        $region43: #{tpu_custom_call.1} parent=11 // pred_region
          _
        $region44: #{tpu_custom_call.1} parent=11 // pred_fallthru
          _
      $region12: #{tpu_custom_call.1} parent=5 // pred_fallthru
        _
      %p358 = scmp.lt.s32.totalorder %s27, 2
      // Predicated region
      $region45: #{tpu_custom_call.1} parent=5 // pred_check
        %p359 = pneg %p358
      $region46: #{tpu_custom_call.1} parent=5 // pred_check_branch
        %361 = sbr.rel (%p359) target = $region48
      $region47: #{tpu_custom_call.1} parent=5 // pred_region
        // Predicated region
        $region49: #{tpu_custom_call.1} parent=47 // pred_check
          %p362 = pneg %p47
        $region50: #{tpu_custom_call.1} parent=47 // pred_check_branch
          %364 = sbr.rel (%p362) target = $region52
        $region51: #{tpu_custom_call.1} parent=47 // pred_region
          %s365 = sand.u32 %s37, 1
          %s366 = scalar_lea.sflag [#allocation3], %s365
          %s367 = sand.u32 %s37, 1
          %s368 = smul.addr %s367, 4
          %s369 = scalar_lea.vmem [#allocation2], %s368
          %s371 = ssub.s32 64, 64
          %372 = vsyncadd %s366, %s371
          %s373 = smul.addr %s27, 64
          %s374 = scalar_lea.hbm %s0, %s373
          %s376 = sshll.u32 %s369, 4
          %s377 = int_to_ptr.vmem [resolvable:$true] %s376
          %379 = dma.hbm_to_vmem [thread:$0]  %s374, 64, %s377, %s366
        $region52: #{tpu_custom_call.1} parent=47 // pred_fallthru
          _
        // Predicated region
        $region53: #{tpu_custom_call.1} parent=47 // pred_check
          %p380 = pneg %p73
        $region54: #{tpu_custom_call.1} parent=47 // pred_check_branch
          %382 = sbr.rel (%p380) target = $region56
        $region55: #{tpu_custom_call.1} parent=47 // pred_region
          %s383 = sand.u32 %s27, 1
          %s384 = scalar_lea.sflag [#allocation6], %s383
          %s385 = sand.u32 %s63, 1
          %s386 = smul.addr %s385, 4
          %s387 = scalar_lea.vmem [#allocation5], %s386
          %s389 = ssub.s32 64, 64
          %390 = vsyncadd %s384, %s389
          %s391 = smul.addr %s27, 64
          %s392 = scalar_lea.hbm %s1, %s391
          %s394 = sshll.u32 %s387, 4
          %s395 = int_to_ptr.vmem [resolvable:$true] %s394
          %397 = dma.hbm_to_vmem [thread:$0]  %s392, 64, %s395, %s384
        $region56: #{tpu_custom_call.1} parent=47 // pred_fallthru
          _
        // Predicated region
        $region57: #{tpu_custom_call.1} parent=47 // pred_check
          %p398 = pneg %p99
        $region58: #{tpu_custom_call.1} parent=47 // pred_check_branch
          %400 = sbr.rel (%p398) target = $region60
        $region59: #{tpu_custom_call.1} parent=47 // pred_region
          %s401 = sand.u32 %s27, 1
          %s402 = scalar_lea.sflag [#allocation6], %s401
          %s403 = sand.u32 %s89, 1
          %s404 = smul.addr %s403, 4
          %s405 = scalar_lea.vmem [#allocation7], %s404
          %s407 = ssub.s32 64, 64
          %408 = vsyncadd %s402, %s407
          %s409 = smul.addr %s27, 64
          %s410 = scalar_lea.hbm %s2, %s409
          %s412 = sshll.u32 %s405, 4
          %s413 = int_to_ptr.vmem [resolvable:$true] %s412
          %415 = dma.hbm_to_vmem [thread:$0]  %s410, 64, %s413, %s402
        $region60: #{tpu_custom_call.1} parent=47 // pred_fallthru
          _
      $region48: #{tpu_custom_call.1} parent=5 // pred_fallthru
        _
      %p416 = scmp.le.s32.totalorder 1, %s27
      %p417 = scmp.lt.s32.totalorder %s27, 3
      %p418 = pnand %p416, %p417
      %p419 = pneg %p418
      // Predicated region
      $region61: #{tpu_custom_call.1} parent=5 // pred_check
        _
      $region62: #{tpu_custom_call.1} parent=5 // pred_check_branch
        %421 = sbr.rel (%p418) target = $region64
      $region63: #{tpu_custom_call.1} parent=5 // pred_region
        %s422 = ssub.s32 %s27, 1
        %s423 = sand.u32 %s40, 1
        %s424 = scalar_lea.sflag [#allocation3], %s423
        %s425 = sand.u32 %s40, 1
        %s426 = smul.addr %s425, 4
        %s427 = scalar_lea.vmem [#allocation2], %s426
        // Predicated region
        $region65: #{tpu_custom_call.1} parent=63 // pred_check
          %p428 = pneg %p53
        $region66: #{tpu_custom_call.1} parent=63 // pred_check_branch
          %430 = sbr.rel (%p428) target = $region68
        $region67: #{tpu_custom_call.1} parent=63 // pred_region
          %431 = dma.done %s424, 64
        $region68: #{tpu_custom_call.1} parent=63 // pred_fallthru
          _
        %s432 = sand.u32 %s32, 1
        %s433 = scalar_lea.sflag [#allocation6], %s432
        %s434 = sand.u32 %s66, 1
        %s435 = smul.addr %s434, 4
        %s436 = scalar_lea.vmem [#allocation5], %s435
        // Predicated region
        $region69: #{tpu_custom_call.1} parent=63 // pred_check
          %p437 = pneg %p79
        $region70: #{tpu_custom_call.1} parent=63 // pred_check_branch
          %439 = sbr.rel (%p437) target = $region72
        $region71: #{tpu_custom_call.1} parent=63 // pred_region
          %440 = dma.done %s433, 64
        $region72: #{tpu_custom_call.1} parent=63 // pred_fallthru
          _
        %s441 = sand.u32 %s32, 1
        %s442 = scalar_lea.sflag [#allocation6], %s441
        %s443 = sand.u32 %s92, 1
        %s444 = smul.addr %s443, 4
        %s445 = scalar_lea.vmem [#allocation7], %s444
        // Predicated region
        $region73: #{tpu_custom_call.1} parent=63 // pred_check
          %p446 = pneg %p105
        $region74: #{tpu_custom_call.1} parent=63 // pred_check_branch
          %448 = sbr.rel (%p446) target = $region76
        $region75: #{tpu_custom_call.1} parent=63 // pred_region
          %449 = dma.done %s442, 64
        $region76: #{tpu_custom_call.1} parent=63 // pred_fallthru
          _
        // Predicated region
        $region77: #{tpu_custom_call.1} parent=63 // pred_check
          %p450 = pneg %p189
        $region78: #{tpu_custom_call.1} parent=63 // pred_check_branch
          %452 = sbr.rel (%p450) target = $region80
        $region79: #{tpu_custom_call.1} parent=63 // pred_region
          %453 = dma.done [#allocation9], 256
        $region80: #{tpu_custom_call.1} parent=63 // pred_fallthru
          _
        // Predicated region
        $region81: #{tpu_custom_call.1} parent=63 // pred_check
          %p454 = pneg %p210
        $region82: #{tpu_custom_call.1} parent=63 // pred_check_branch
          %456 = sbr.rel (%p454) target = $region84
        $region83: #{tpu_custom_call.1} parent=63 // pred_region
          %457 = dma.done [#allocation9], 256
        $region84: #{tpu_custom_call.1} parent=63 // pred_fallthru
          _
        %s458 = sand.u32 %s40, 1
        %s459 = scalar_lea.sflag [#allocation3], %s458
        %s460 = sand.u32 %s40, 1
        %s461 = smul.addr %s460, 4
        %s462 = scalar_lea.vmem [#allocation2], %s461
        %p463 = pneg %p53
        %p464 = pneg %p50
        %s465 = sand.u32 %s32, 1
        %s466 = scalar_lea.sflag [#allocation6], %s465
        %s467 = sand.u32 %s66, 1
        %s468 = smul.addr %s467, 4
        %s469 = scalar_lea.vmem [#allocation5], %s468
        %p470 = pneg %p79
        %p471 = pneg %p76
        %s472 = sand.u32 %s32, 1
        %s473 = scalar_lea.sflag [#allocation6], %s472
        %s474 = sand.u32 %s92, 1
        %s475 = smul.addr %s474, 4
        %s476 = scalar_lea.vmem [#allocation7], %s475
        %p477 = pneg %p105
        %p478 = pneg %p102
        %p479 = pneg %p126
        %p480 = pneg %p123
        %p481 = pneg %p147
        %p482 = pneg %p144
        %p483 = pneg %p168
        %p484 = pneg %p165
        %p485 = pneg %p189
        %p486 = pneg %p186
        %p487 = pneg %p210
        %p488 = pneg %p207
        %p489 = pneg %p231
        %p490 = pneg %p228
        %p491 = pneg %p252
        %p492 = pneg %p249
        %p493 = pneg %p273
        %p494 = pneg %p270
        %p495 = pneg %p299
        %p496 = pneg %p296
        %s497 = sand.u32 %s286, 1
        %s498 = scalar_lea.sflag [#allocation4], %s497
        %s499 = sand.u32 %s286, 1
        %s500 = smul.addr %s499, 8
        %s501 = scalar_lea.vmem [#allocation11], %s500
        %v503 = vld [vmem:[%s427] sm:$0xf]
        %v504 = vunpack.c.l.bf16 %v503
        %v505 = vld [vmem:[%s10] sm:$0xff]
        %v506 = vld [vmem:[%s10 + $0x8] sm:$0x1]
        %v507 = vld [vmem:[%s9] sm:$0x1]
        %v508 = vlaneseq
        %v509 = vshrl.u32 %v508, 7
        %v510 = vlaneseq
        %v511 = vand.u32 %v510, 127
        %vm512 = vcmp.ge.s32.totalorder %v509, %v511
        %v513 = vsel %vm512, 0.0, -1e+30
        %v514 = vld [vmem:[%s3] sm:$0xf]
        %v515 = vld [vmem:[%s3 + $0x4] sm:$0xf]
        %v516 = vld [vmem:[%s3 + $0x8] sm:$0xf]
        %v517 = vld [vmem:[%s3 + $0xc] sm:$0xf]
        %v522 = vunpack.c.l.b16 %v514
        %v523 = vunpack.c.l.b16 %v515
        %v524 = vunpack.c.l.b16 %v516
        %v525 = vunpack.c.l.b16 %v517
        %v526 = vpack.c.b16 %v523, %v522
        %v527 = vpack.c.b16 %v525, %v524
        %vm530 = vcmask 261120
        %v532 = vsel %vm530, %v503, 0
        %534 = vmatprep.subr.bf16.mxu0 0
        %535 = vmatpush1.bf16.msra.mxu0 %v526
        %536 = vmatprep.subr.bf16.mxu0 0
        %537 = vmatpush1.bf16.msra.mxu0 %v527
        %538 = vmatprep.subr.bf16.mxu0 0
        %539 = vmatpush1.bf16.msra.mxu0 0
        %540 = vmatprep.subr.bf16.mxu0 0
        %541 = vmatpush1.bf16.msra.mxu0 0
        %542 = vmatprep.subr.bf16.mxu0 0
        %543 = vmatpush1.bf16.msra.mxu0 0
        %544 = vmatprep.subr.bf16.mxu0 0
        %545 = vmatpush1.bf16.msra.mxu0 0
        %546 = vmatprep.subr.bf16.mxu0 0
        %547 = vmatpush1.bf16.msra.mxu0 0
        %548 = vmatprep.subr.bf16.mxu0 0
        %549 = vmatpush1.bf16.msra.mxu0 0
        %550 = vmatprep.subr.bf16.mxu0 0
        %551 = vmatpush1.bf16.msra.mxu0 0
        %552 = vmatprep.subr.bf16.mxu0 0
        %553 = vmatpush1.bf16.msra.mxu0 0
        %554 = vmatprep.subr.bf16.mxu0 0
        %555 = vmatpush1.bf16.msra.mxu0 0
        %556 = vmatprep.subr.bf16.mxu0 0
        %557 = vmatpush1.bf16.msra.mxu0 0
        %558 = vmatprep.subr.bf16.mxu0 0
        %559 = vmatpush1.bf16.msra.mxu0 0
        %560 = vmatprep.subr.bf16.mxu0 0
        %561 = vmatpush1.bf16.msra.mxu0 0
        %562 = vmatprep.subr.bf16.mxu0 0
        %563 = vmatpush1.bf16.msra.mxu0 0
        %564 = vmatprep.subr.bf16.mxu0 0
        %565 = vmatpush1.bf16.msra.mxu0 0
        %566 = vmatprep.mubr.bf16.mxu0 0
        %567 = vmatmul.mubr.bf16.gmra.mrb[0].mxu0 %v532
        %v568 = vpop.f32.mrb[0].mxu0
        %v569 = vadd.f32 0.0, %v568
        %v570 = vpop.f32.mrb[0].mxu0
        %v571 = vpop.f32.mrb[0].mxu0
        %v572 = vpop.f32.mrb[0].mxu0
        %573 = vdwg.mxu0
        %v574 = vpack.c.bf16 %v569, %v569
        %576 = vrot.lane.b32.xlu0 %v574, 96
        %v577 = vpop.permute.xlu0 %576
        %vm578 = vcmask 64512
        %v580 = vsel %vm578, %v574, 0
        %v583 = vsel %vm578, %v577, 0
        %585 = vmatprep.subr.bf16.mxu0 0
        %586 = vmatpush1.bf16.xpose.msra.mxu0 %v583
        %587 = vmatprep.subr.bf16.mxu0 0
        %588 = vmatpush1.bf16.xpose.msra.mxu0 0
        %589 = vmatprep.subr.bf16.mxu0 0
        %590 = vmatpush1.bf16.xpose.msra.mxu0 0
        %591 = vmatprep.subr.bf16.mxu0 0
        %592 = vmatpush1.bf16.xpose.msra.mxu0 0
        %593 = vmatprep.subr.bf16.mxu0 0
        %594 = vmatpush1.bf16.xpose.msra.mxu0 0
        %595 = vmatprep.subr.bf16.mxu0 0
        %596 = vmatpush1.bf16.xpose.msra.mxu0 0
        %597 = vmatprep.subr.bf16.mxu0 0
        %598 = vmatpush1.bf16.xpose.msra.mxu0 0
        %599 = vmatprep.subr.bf16.mxu0 0
        %600 = vmatpush1.bf16.xpose.msra.mxu0 0
        %601 = vmatprep.subr.bf16.mxu0 0
        %602 = vmatpush1.bf16.xpose.msra.mxu0 0
        %603 = vmatprep.subr.bf16.mxu0 0
        %604 = vmatpush1.bf16.xpose.msra.mxu0 0
        %605 = vmatprep.subr.bf16.mxu0 0
        %606 = vmatpush1.bf16.xpose.msra.mxu0 0
        %607 = vmatprep.subr.bf16.mxu0 0
        %608 = vmatpush1.bf16.xpose.msra.mxu0 0
        %609 = vmatprep.subr.bf16.mxu0 0
        %610 = vmatpush1.bf16.xpose.msra.mxu0 0
        %611 = vmatprep.subr.bf16.mxu0 0
        %612 = vmatpush1.bf16.xpose.msra.mxu0 0
        %613 = vmatprep.subr.bf16.mxu0 0
        %614 = vmatpush1.bf16.xpose.msra.mxu0 0
        %615 = vmatprep.subr.bf16.mxu0 0
        %616 = vmatpush1.bf16.xpose.msra.mxu0 0
        %617 = vmatprep.mubr.bf16.mxu0 0
        %618 = vmatmul.mubr.bf16.gmra.mrb[0].mxu0 %v580
        %v619 = vpop.f32.mrb[0].mxu0
        %v620 = vadd.f32 %v513, %v619
        %v621 = vpop.f32.mrb[0].mxu0
        %v622 = vpop.f32.mrb[0].mxu0
        %v623 = vpop.f32.mrb[0].mxu0
        %624 = vdwg.mxu0
        %v625 = vsel %vm578, %v620, -inf
        %626 = vmax.xlane.f32.xlu0 %v625
        %v627 = vpop.xlane.xlu0 %626
        %v628 = vsub.f32 %v620, %v627
        %v629 = vmul.f32 %v628, 1.442695
        %v630 = vpow.pop %v629
        %v631 = vsel %vm578, %v630, 0.0
        %632 = vadd.xlane.f32.xlu0 %v631
        %v633 = vpop.xlane.xlu0 %632
        %v634 = vrcp.pop %v633
        %v635 = vmul.f32 %v630, %v634
        %v636 = vpack.c.bf16 %v635, %v635
        %637 = vrot.lane.b32.xlu0 %v574, 64
        %v638 = vpop.permute.xlu0 %637
        %v640 = vsel %vm578, %v636, 0
        %vm642 = vcmask 1043456
        %v644 = vsel %vm642, %v638, 0
        %646 = vmatprep.subr.bf16.mxu0 0
        %647 = vmatpush1.bf16.msra.mxu0 %v644
        %648 = vmatprep.subr.bf16.mxu0 0
        %649 = vmatpush1.bf16.msra.mxu0 0
        %650 = vmatprep.subr.bf16.mxu0 0
        %651 = vmatpush1.bf16.msra.mxu0 0
        %652 = vmatprep.subr.bf16.mxu0 0
        %653 = vmatpush1.bf16.msra.mxu0 0
        %654 = vmatprep.subr.bf16.mxu0 0
        %655 = vmatpush1.bf16.msra.mxu0 0
        %656 = vmatprep.subr.bf16.mxu0 0
        %657 = vmatpush1.bf16.msra.mxu0 0
        %658 = vmatprep.subr.bf16.mxu0 0
        %659 = vmatpush1.bf16.msra.mxu0 0
        %660 = vmatprep.subr.bf16.mxu0 0
        %661 = vmatpush1.bf16.msra.mxu0 0
        %662 = vmatprep.subr.bf16.mxu0 0
        %663 = vmatpush1.bf16.msra.mxu0 0
        %664 = vmatprep.subr.bf16.mxu0 0
        %665 = vmatpush1.bf16.msra.mxu0 0
        %666 = vmatprep.subr.bf16.mxu0 0
        %667 = vmatpush1.bf16.msra.mxu0 0
        %668 = vmatprep.subr.bf16.mxu0 0
        %669 = vmatpush1.bf16.msra.mxu0 0
        %670 = vmatprep.subr.bf16.mxu0 0
        %671 = vmatpush1.bf16.msra.mxu0 0
        %672 = vmatprep.subr.bf16.mxu0 0
        %673 = vmatpush1.bf16.msra.mxu0 0
        %674 = vmatprep.subr.bf16.mxu0 0
        %675 = vmatpush1.bf16.msra.mxu0 0
        %676 = vmatprep.subr.bf16.mxu0 0
        %677 = vmatpush1.bf16.msra.mxu0 0
        %678 = vmatprep.mubr.bf16.mxu0 0
        %679 = vmatmul.mubr.bf16.gmra.mrb[0].mxu0 %v640
        %v680 = vpop.f32.mrb[0].mxu0
        %v681 = vadd.f32 0.0, %v680
        %v682 = vpop.f32.mrb[0].mxu0
        %v683 = vpop.f32.mrb[0].mxu0
        %v684 = vpop.f32.mrb[0].mxu0
        %685 = vdwg.mxu0
        %686 = vrot.lane.b32.xlu0 %v574, 120
        %v687 = vpop.permute.xlu0 %686
        %688 = vrot.lane.b32.xlu0 %v574, 88
        %v689 = vpop.permute.xlu0 %688
        %v691 = vsel %vm578, %v687, 0
        %v694 = vsel %vm578, %v689, 0
        %696 = vmatprep.subr.bf16.mxu0 0
        %697 = vmatpush1.bf16.xpose.msra.mxu0 %v694
        %698 = vmatprep.subr.bf16.mxu0 0
        %699 = vmatpush1.bf16.xpose.msra.mxu0 0
        %700 = vmatprep.subr.bf16.mxu0 0
        %701 = vmatpush1.bf16.xpose.msra.mxu0 0
        %702 = vmatprep.subr.bf16.mxu0 0
        %703 = vmatpush1.bf16.xpose.msra.mxu0 0
        %704 = vmatprep.subr.bf16.mxu0 0
        %705 = vmatpush1.bf16.xpose.msra.mxu0 0
        %706 = vmatprep.subr.bf16.mxu0 0
        %707 = vmatpush1.bf16.xpose.msra.mxu0 0
        %708 = vmatprep.subr.bf16.mxu0 0
        %709 = vmatpush1.bf16.xpose.msra.mxu0 0
        %710 = vmatprep.subr.bf16.mxu0 0
        %711 = vmatpush1.bf16.xpose.msra.mxu0 0
        %712 = vmatprep.subr.bf16.mxu0 0
        %713 = vmatpush1.bf16.xpose.msra.mxu0 0
        %714 = vmatprep.subr.bf16.mxu0 0
        %715 = vmatpush1.bf16.xpose.msra.mxu0 0
        %716 = vmatprep.subr.bf16.mxu0 0
        %717 = vmatpush1.bf16.xpose.msra.mxu0 0
        %718 = vmatprep.subr.bf16.mxu0 0
        %719 = vmatpush1.bf16.xpose.msra.mxu0 0
        %720 = vmatprep.subr.bf16.mxu0 0
        %721 = vmatpush1.bf16.xpose.msra.mxu0 0
        %722 = vmatprep.subr.bf16.mxu0 0
        %723 = vmatpush1.bf16.xpose.msra.mxu0 0
        %724 = vmatprep.subr.bf16.mxu0 0
        %725 = vmatpush1.bf16.xpose.msra.mxu0 0
        %726 = vmatprep.subr.bf16.mxu0 0
        %727 = vmatpush1.bf16.xpose.msra.mxu0 0
        %728 = vmatprep.mubr.bf16.mxu0 0
        %729 = vmatmul.mubr.bf16.gmra.mrb[0].mxu0 %v691
        %v730 = vpop.f32.mrb[0].mxu0
        %v731 = vadd.f32 %v513, %v730
        %v732 = vpop.f32.mrb[0].mxu0
        %v733 = vpop.f32.mrb[0].mxu0
        %v734 = vpop.f32.mrb[0].mxu0
        %735 = vdwg.mxu0
        %v736 = vsel %vm578, %v731, -inf
        %737 = vmax.xlane.f32.xlu0 %v736
        %v738 = vpop.xlane.xlu0 %737
        %v739 = vsub.f32 %v731, %v738
        %v740 = vmul.f32 %v739, 1.442695
        %v741 = vpow.pop %v740
        %v742 = vsel %vm578, %v741, 0.0
        %743 = vadd.xlane.f32.xlu0 %v742
        %v744 = vpop.xlane.xlu0 %743
        %v745 = vrcp.pop %v744
        %v746 = vmul.f32 %v741, %v745
        %v747 = vpack.c.bf16 %v746, %v746
        %748 = vrot.lane.b32.xlu0 %v574, 56
        %v749 = vpop.permute.xlu0 %748
        %v751 = vsel %vm578, %v747, 0
        %v754 = vsel %vm642, %v749, 0
        %756 = vmatprep.subr.bf16.mxu0 0
        %757 = vmatpush1.bf16.msra.mxu0 %v754
        %758 = vmatprep.subr.bf16.mxu0 0
        %759 = vmatpush1.bf16.msra.mxu0 0
        %760 = vmatprep.subr.bf16.mxu0 0
        %761 = vmatpush1.bf16.msra.mxu0 0
        %762 = vmatprep.subr.bf16.mxu0 0
        %763 = vmatpush1.bf16.msra.mxu0 0
        %764 = vmatprep.subr.bf16.mxu0 0
        %765 = vmatpush1.bf16.msra.mxu0 0
        %766 = vmatprep.subr.bf16.mxu0 0
        %767 = vmatpush1.bf16.msra.mxu0 0
        %768 = vmatprep.subr.bf16.mxu0 0
        %769 = vmatpush1.bf16.msra.mxu0 0
        %770 = vmatprep.subr.bf16.mxu0 0
        %771 = vmatpush1.bf16.msra.mxu0 0
        %772 = vmatprep.subr.bf16.mxu0 0
        %773 = vmatpush1.bf16.msra.mxu0 0
        %774 = vmatprep.subr.bf16.mxu0 0
        %775 = vmatpush1.bf16.msra.mxu0 0
        %776 = vmatprep.subr.bf16.mxu0 0
        %777 = vmatpush1.bf16.msra.mxu0 0
        %778 = vmatprep.subr.bf16.mxu0 0
        %779 = vmatpush1.bf16.msra.mxu0 0
        %780 = vmatprep.subr.bf16.mxu0 0
        %781 = vmatpush1.bf16.msra.mxu0 0
        %782 = vmatprep.subr.bf16.mxu0 0
        %783 = vmatpush1.bf16.msra.mxu0 0
        %784 = vmatprep.subr.bf16.mxu0 0
        %785 = vmatpush1.bf16.msra.mxu0 0
        %786 = vmatprep.subr.bf16.mxu0 0
        %787 = vmatpush1.bf16.msra.mxu0 0
        %788 = vmatprep.mubr.bf16.mxu0 0
        %789 = vmatmul.mubr.bf16.gmra.mrb[0].mxu0 %v751
        %v790 = vpop.f32.mrb[0].mxu0
        %v791 = vadd.f32 0.0, %v790
        %v792 = vpop.f32.mrb[0].mxu0
        %v793 = vpop.f32.mrb[0].mxu0
        %v794 = vpop.f32.mrb[0].mxu0
        %795 = vdwg.mxu0
        %796 = vrot.lane.b32.xlu0 %v574, 112
        %v797 = vpop.permute.xlu0 %796
        %798 = vrot.lane.b32.xlu0 %v574, 80
        %v799 = vpop.permute.xlu0 %798
        %v801 = vsel %vm578, %v797, 0
        %v804 = vsel %vm578, %v799, 0
        %806 = vmatprep.subr.bf16.mxu0 0
        %807 = vmatpush1.bf16.xpose.msra.mxu0 %v804
        %808 = vmatprep.subr.bf16.mxu0 0
        %809 = vmatpush1.bf16.xpose.msra.mxu0 0
        %810 = vmatprep.subr.bf16.mxu0 0
        %811 = vmatpush1.bf16.xpose.msra.mxu0 0
        %812 = vmatprep.subr.bf16.mxu0 0
        %813 = vmatpush1.bf16.xpose.msra.mxu0 0
        %814 = vmatprep.subr.bf16.mxu0 0
        %815 = vmatpush1.bf16.xpose.msra.mxu0 0
        %816 = vmatprep.subr.bf16.mxu0 0
        %817 = vmatpush1.bf16.xpose.msra.mxu0 0
        %818 = vmatprep.subr.bf16.mxu0 0
        %819 = vmatpush1.bf16.xpose.msra.mxu0 0
        %820 = vmatprep.subr.bf16.mxu0 0
        %821 = vmatpush1.bf16.xpose.msra.mxu0 0
        %822 = vmatprep.subr.bf16.mxu0 0
        %823 = vmatpush1.bf16.xpose.msra.mxu0 0
        %824 = vmatprep.subr.bf16.mxu0 0
        %825 = vmatpush1.bf16.xpose.msra.mxu0 0
        %826 = vmatprep.subr.bf16.mxu0 0
        %827 = vmatpush1.bf16.xpose.msra.mxu0 0
        %828 = vmatprep.subr.bf16.mxu0 0
        %829 = vmatpush1.bf16.xpose.msra.mxu0 0
        %830 = vmatprep.subr.bf16.mxu0 0
        %831 = vmatpush1.bf16.xpose.msra.mxu0 0
        %832 = vmatprep.subr.bf16.mxu0 0
        %833 = vmatpush1.bf16.xpose.msra.mxu0 0
        %834 = vmatprep.subr.bf16.mxu0 0
        %835 = vmatpush1.bf16.xpose.msra.mxu0 0
        %836 = vmatprep.subr.bf16.mxu0 0
        %837 = vmatpush1.bf16.xpose.msra.mxu0 0
        %838 = vmatprep.mubr.bf16.mxu0 0
        %839 = vmatmul.mubr.bf16.gmra.mrb[0].mxu0 %v801
        %v840 = vpop.f32.mrb[0].mxu0
        %v841 = vadd.f32 %v513, %v840
        %v842 = vpop.f32.mrb[0].mxu0
        %v843 = vpop.f32.mrb[0].mxu0
        %v844 = vpop.f32.mrb[0].mxu0
        %845 = vdwg.mxu0
        %v846 = vsel %vm578, %v841, -inf
        %847 = vmax.xlane.f32.xlu0 %v846
        %v848 = vpop.xlane.xlu0 %847
        %v849 = vsub.f32 %v841, %v848
        %v850 = vmul.f32 %v849, 1.442695
        %v851 = vpow.pop %v850
        %v852 = vsel %vm578, %v851, 0.0
        %853 = vadd.xlane.f32.xlu0 %v852
        %v854 = vpop.xlane.xlu0 %853
        %v855 = vrcp.pop %v854
        %v856 = vmul.f32 %v851, %v855
        %v857 = vpack.c.bf16 %v856, %v856
        %858 = vrot.lane.b32.xlu0 %v574, 48
        %v859 = vpop.permute.xlu0 %858
        %v861 = vsel %vm578, %v857, 0
        %v864 = vsel %vm642, %v859, 0
        %866 = vmatprep.subr.bf16.mxu0 0
        %867 = vmatpush1.bf16.msra.mxu0 %v864
        %868 = vmatprep.subr.bf16.mxu0 0
        %869 = vmatpush1.bf16.msra.mxu0 0
        %870 = vmatprep.subr.bf16.mxu0 0
        %871 = vmatpush1.bf16.msra.mxu0 0
        %872 = vmatprep.subr.bf16.mxu0 0
        %873 = vmatpush1.bf16.msra.mxu0 0
        %874 = vmatprep.subr.bf16.mxu0 0
        %875 = vmatpush1.bf16.msra.mxu0 0
        %876 = vmatprep.subr.bf16.mxu0 0
        %877 = vmatpush1.bf16.msra.mxu0 0
        %878 = vmatprep.subr.bf16.mxu0 0
        %879 = vmatpush1.bf16.msra.mxu0 0
        %880 = vmatprep.subr.bf16.mxu0 0
        %881 = vmatpush1.bf16.msra.mxu0 0
        %882 = vmatprep.subr.bf16.mxu0 0
        %883 = vmatpush1.bf16.msra.mxu0 0
        %884 = vmatprep.subr.bf16.mxu0 0
        %885 = vmatpush1.bf16.msra.mxu0 0
        %886 = vmatprep.subr.bf16.mxu0 0
        %887 = vmatpush1.bf16.msra.mxu0 0
        %888 = vmatprep.subr.bf16.mxu0 0
        %889 = vmatpush1.bf16.msra.mxu0 0
        %890 = vmatprep.subr.bf16.mxu0 0
        %891 = vmatpush1.bf16.msra.mxu0 0
        %892 = vmatprep.subr.bf16.mxu0 0
        %893 = vmatpush1.bf16.msra.mxu0 0
        %894 = vmatprep.subr.bf16.mxu0 0
        %895 = vmatpush1.bf16.msra.mxu0 0
        %896 = vmatprep.subr.bf16.mxu0 0
        %897 = vmatpush1.bf16.msra.mxu0 0
        %898 = vmatprep.mubr.bf16.mxu0 0
        %899 = vmatmul.mubr.bf16.gmra.mrb[0].mxu0 %v861
        %v900 = vpop.f32.mrb[0].mxu0
        %v901 = vadd.f32 0.0, %v900
        %v902 = vpop.f32.mrb[0].mxu0
        %v903 = vpop.f32.mrb[0].mxu0
        %v904 = vpop.f32.mrb[0].mxu0
        %905 = vdwg.mxu0
        %906 = vrot.lane.b32.xlu0 %v574, 104
        %v907 = vpop.permute.xlu0 %906
        %908 = vrot.lane.b32.xlu0 %v574, 72
        %v909 = vpop.permute.xlu0 %908
        %v911 = vsel %vm578, %v907, 0
        %v914 = vsel %vm578, %v909, 0
        %916 = vmatprep.subr.bf16.mxu0 0
        %917 = vmatpush1.bf16.xpose.msra.mxu0 %v914
        %918 = vmatprep.subr.bf16.mxu0 0
        %919 = vmatpush1.bf16.xpose.msra.mxu0 0
        %920 = vmatprep.subr.bf16.mxu0 0
        %921 = vmatpush1.bf16.xpose.msra.mxu0 0
        %922 = vmatprep.subr.bf16.mxu0 0
        %923 = vmatpush1.bf16.xpose.msra.mxu0 0
        %924 = vmatprep.subr.bf16.mxu0 0
        %925 = vmatpush1.bf16.xpose.msra.mxu0 0
        %926 = vmatprep.subr.bf16.mxu0 0
        %927 = vmatpush1.bf16.xpose.msra.mxu0 0
        %928 = vmatprep.subr.bf16.mxu0 0
        %929 = vmatpush1.bf16.xpose.msra.mxu0 0
        %930 = vmatprep.subr.bf16.mxu0 0
        %931 = vmatpush1.bf16.xpose.msra.mxu0 0
        %932 = vmatprep.subr.bf16.mxu0 0
        %933 = vmatpush1.bf16.xpose.msra.mxu0 0
        %934 = vmatprep.subr.bf16.mxu0 0
        %935 = vmatpush1.bf16.xpose.msra.mxu0 0
        %936 = vmatprep.subr.bf16.mxu0 0
        %937 = vmatpush1.bf16.xpose.msra.mxu0 0
        %938 = vmatprep.subr.bf16.mxu0 0
        %939 = vmatpush1.bf16.xpose.msra.mxu0 0
        %940 = vmatprep.subr.bf16.mxu0 0
        %941 = vmatpush1.bf16.xpose.msra.mxu0 0
        %942 = vmatprep.subr.bf16.mxu0 0
        %943 = vmatpush1.bf16.xpose.msra.mxu0 0
        %944 = vmatprep.subr.bf16.mxu0 0
        %945 = vmatpush1.bf16.xpose.msra.mxu0 0
        %946 = vmatprep.subr.bf16.mxu0 0
        %947 = vmatpush1.bf16.xpose.msra.mxu0 0
        %948 = vmatprep.mubr.bf16.mxu0 0
        %949 = vmatmul.mubr.bf16.gmra.mrb[0].mxu0 %v911
        %v950 = vpop.f32.mrb[0].mxu0
        %v951 = vadd.f32 %v513, %v950
        %v952 = vpop.f32.mrb[0].mxu0
        %v953 = vpop.f32.mrb[0].mxu0
        %v954 = vpop.f32.mrb[0].mxu0
        %955 = vdwg.mxu0
        %v956 = vsel %vm578, %v951, -inf
        %957 = vmax.xlane.f32.xlu0 %v956
        %v958 = vpop.xlane.xlu0 %957
        %v959 = vsub.f32 %v951, %v958
        %v960 = vmul.f32 %v959, 1.442695
        %v961 = vpow.pop %v960
        %v962 = vsel %vm578, %v961, 0.0
        %963 = vadd.xlane.f32.xlu0 %v962
        %v964 = vpop.xlane.xlu0 %963
        %v965 = vrcp.pop %v964
        %v966 = vmul.f32 %v961, %v965
        %v967 = vpack.c.bf16 %v966, %v966
        %968 = vrot.lane.b32.xlu0 %v574, 40
        %v969 = vpop.permute.xlu0 %968
        %v971 = vsel %vm578, %v967, 0
        %v974 = vsel %vm642, %v969, 0
        %976 = vmatprep.subr.bf16.mxu0 0
        %977 = vmatpush1.bf16.msra.mxu0 %v974
        %978 = vmatprep.subr.bf16.mxu0 0
        %979 = vmatpush1.bf16.msra.mxu0 0
        %980 = vmatprep.subr.bf16.mxu0 0
        %981 = vmatpush1.bf16.msra.mxu0 0
        %982 = vmatprep.subr.bf16.mxu0 0
        %983 = vmatpush1.bf16.msra.mxu0 0
        %984 = vmatprep.subr.bf16.mxu0 0
        %985 = vmatpush1.bf16.msra.mxu0 0
        %986 = vmatprep.subr.bf16.mxu0 0
        %987 = vmatpush1.bf16.msra.mxu0 0
        %988 = vmatprep.subr.bf16.mxu0 0
        %989 = vmatpush1.bf16.msra.mxu0 0
        %990 = vmatprep.subr.bf16.mxu0 0
        %991 = vmatpush1.bf16.msra.mxu0 0
        %992 = vmatprep.subr.bf16.mxu0 0
        %993 = vmatpush1.bf16.msra.mxu0 0
        %994 = vmatprep.subr.bf16.mxu0 0
        %995 = vmatpush1.bf16.msra.mxu0 0
        %996 = vmatprep.subr.bf16.mxu0 0
        %997 = vmatpush1.bf16.msra.mxu0 0
        %998 = vmatprep.subr.bf16.mxu0 0
        %999 = vmatpush1.bf16.msra.mxu0 0
        %1000 = vmatprep.subr.bf16.mxu0 0
        %1001 = vmatpush1.bf16.msra.mxu0 0
        %1002 = vmatprep.subr.bf16.mxu0 0
        %1003 = vmatpush1.bf16.msra.mxu0 0
        %1004 = vmatprep.subr.bf16.mxu0 0
        %1005 = vmatpush1.bf16.msra.mxu0 0
        %1006 = vmatprep.subr.bf16.mxu0 0
        %1007 = vmatpush1.bf16.msra.mxu0 0
        %1008 = vmatprep.mubr.bf16.mxu0 0
        %1009 = vmatmul.mubr.bf16.gmra.mrb[0].mxu0 %v971
        %v1010 = vpop.f32.mrb[0].mxu0
        %v1011 = vadd.f32 0.0, %v1010
        %v1012 = vpop.f32.mrb[0].mxu0
        %v1013 = vpop.f32.mrb[0].mxu0
        %v1014 = vpop.f32.mrb[0].mxu0
        %1015 = vdwg.mxu0
        %1017 = vrot.lane.b32.xlu0 %v791, 8
        %v1018 = vpop.permute.xlu0 %1017
        %1021 = vrot.lane.b32.xlu0 %v901, 16
        %v1022 = vpop.permute.xlu0 %1021
        %1025 = vrot.lane.b32.xlu0 %v1011, 24
        %v1026 = vpop.permute.xlu0 %1025
        %v1028 = vsel %vm578, %v681, %v1018
        %vm1029 = vcmask 130048
        %v1030 = vsel %vm1029, %v1028, %v1022
        %vm1031 = vcmask 195584
        %v1032 = vsel %vm1031, %v1030, %v1026
        %v1033 = vpack.c.bf16 %v1032, %v1032
        %v1034 = vld [vmem:[%s4] sm:$0xf]
        %v1035 = vld [vmem:[%s4 + $0x4] sm:$0xf]
        %v1036 = vld [vmem:[%s4 + $0x8] sm:$0xf]
        %v1037 = vld [vmem:[%s4 + $0xc] sm:$0xf]
        %v1038 = vlaneseq
        %v1039 = vshrl.u32 %v1038, 7
        %v1040 = vsub.s32 0, %v1039
        %v1041 = vrot.slane %v505, %v1040
        %v1046 = vunpack.c.l.b16 %v1034
        %v1047 = vunpack.c.l.b16 %v1035
        %v1048 = vunpack.c.l.b16 %v1036
        %v1049 = vunpack.c.l.b16 %v1037
        %v1050 = vpack.c.b16 %v1047, %v1046
        %v1051 = vpack.c.b16 %v1049, %v1048
        %v1055 = vsel %vm530, %v1033, 0
        %1057 = vmatprep.subr.bf16.mxu0 0
        %1058 = vmatpush1.bf16.msra.mxu0 %v1050
        %1059 = vmatprep.subr.bf16.mxu0 0
        %1060 = vmatpush1.bf16.msra.mxu0 %v1051
        %1061 = vmatprep.subr.bf16.mxu0 0
        %1062 = vmatpush1.bf16.msra.mxu0 0
        %1063 = vmatprep.subr.bf16.mxu0 0
        %1064 = vmatpush1.bf16.msra.mxu0 0
        %1065 = vmatprep.subr.bf16.mxu0 0
        %1066 = vmatpush1.bf16.msra.mxu0 0
        %1067 = vmatprep.subr.bf16.mxu0 0
        %1068 = vmatpush1.bf16.msra.mxu0 0
        %1069 = vmatprep.subr.bf16.mxu0 0
        %1070 = vmatpush1.bf16.msra.mxu0 0
        %1071 = vmatprep.subr.bf16.mxu0 0
        %1072 = vmatpush1.bf16.msra.mxu0 0
        %1073 = vmatprep.subr.bf16.mxu0 0
        %1074 = vmatpush1.bf16.msra.mxu0 0
        %1075 = vmatprep.subr.bf16.mxu0 0
        %1076 = vmatpush1.bf16.msra.mxu0 0
        %1077 = vmatprep.subr.bf16.mxu0 0
        %1078 = vmatpush1.bf16.msra.mxu0 0
        %1079 = vmatprep.subr.bf16.mxu0 0
        %1080 = vmatpush1.bf16.msra.mxu0 0
        %1081 = vmatprep.subr.bf16.mxu0 0
        %1082 = vmatpush1.bf16.msra.mxu0 0
        %1083 = vmatprep.subr.bf16.mxu0 0
        %1084 = vmatpush1.bf16.msra.mxu0 0
        %1085 = vmatprep.subr.bf16.mxu0 0
        %1086 = vmatpush1.bf16.msra.mxu0 0
        %1087 = vmatprep.subr.bf16.mxu0 0
        %1088 = vmatpush1.bf16.msra.mxu0 0
        %1089 = vmatprep.mubr.bf16.mxu0 0
        %1090 = vmatmul.mubr.bf16.gmra.mrb[0].mxu0 %v1055
        %v1091 = vpop.f32.mrb[0].mxu0
        %v1092 = vadd.f32 %v1041, %v1091
        %v1093 = vpop.f32.mrb[0].mxu0
        %v1094 = vpop.f32.mrb[0].mxu0
        %v1095 = vpop.f32.mrb[0].mxu0
        %1096 = vdwg.mxu0
        %v1097 = vadd.f32 %v504, %v1092
        %v1098 = vsel %vm530, %v1097, 0.0
        %1099 = vadd.xlane.f32.xlu0 %v1098
        %v1100 = vpop.xlane.xlu0 %1099
        %v1101 = vrcp.pop 32.0
        %v1102 = vmul.f32 %v1100, %v1101
        %v1103 = vsub.f32 %v1097, %v1102
        %v1104 = vmul.f32 %v1103, %v1103
        %v1105 = vsel %vm530, %v1104, 0.0
        %1106 = vadd.xlane.f32.xlu0 %v1105
        %v1107 = vpop.xlane.xlu0 %1106
        %v1108 = vmul.f32 %v1107, %v1101
        %v1109 = vadd.f32 %v1108, 1e-05
        %v1110 = vrsqrt.pop %v1109
        %v1111 = vmul.f32 %v1103, %v1110
        %v1112 = vlaneseq
        %v1113 = vshrl.u32 %v1112, 7
        %v1114 = vsub.s32 1, %v1113
        %v1115 = vrot.slane %v505, %v1114
        %v1116 = vmul.f32 %v1111, %v1115
        %v1117 = vlaneseq
        %v1118 = vshrl.u32 %v1117, 7
        %v1119 = vsub.s32 2, %v1118
        %v1120 = vrot.slane %v505, %v1119
        %v1121 = vadd.f32 %v1116, %v1120
        %v1122 = vpack.c.bf16 %v1121, %v1121
        %v1123 = vld [vmem:[%s5] sm:$0xf]
        %v1124 = vld [vmem:[%s5 + $0x4] sm:$0xf]
        %v1125 = vld [vmem:[%s5 + $0x8] sm:$0xf]
        %v1126 = vld [vmem:[%s5 + $0xc] sm:$0xf]
        %v1131 = vunpack.c.l.b16 %v1123
        %v1132 = vunpack.c.l.b16 %v1124
        %v1133 = vunpack.c.l.b16 %v1125
        %v1134 = vunpack.c.l.b16 %v1126
        %v1135 = vpack.c.b16 %v1132, %v1131
        %v1136 = vpack.c.b16 %v1134, %v1133
        %v1140 = vsel %vm530, %v1122, 0
        %1142 = vmatprep.subr.bf16.mxu0 0
        %1143 = vmatpush1.bf16.msra.mxu0 %v1135
        %1144 = vmatprep.subr.bf16.mxu0 0
        %1145 = vmatpush1.bf16.msra.mxu0 %v1136
        %1146 = vmatprep.subr.bf16.mxu0 0
        %1147 = vmatpush1.bf16.msra.mxu0 0
        %1148 = vmatprep.subr.bf16.mxu0 0
        %1149 = vmatpush1.bf16.msra.mxu0 0
        %1150 = vmatprep.subr.bf16.mxu0 0
        %1151 = vmatpush1.bf16.msra.mxu0 0
        %1152 = vmatprep.subr.bf16.mxu0 0
        %1153 = vmatpush1.bf16.msra.mxu0 0
        %1154 = vmatprep.subr.bf16.mxu0 0
        %1155 = vmatpush1.bf16.msra.mxu0 0
        %1156 = vmatprep.subr.bf16.mxu0 0
        %1157 = vmatpush1.bf16.msra.mxu0 0
        %1158 = vmatprep.subr.bf16.mxu0 0
        %1159 = vmatpush1.bf16.msra.mxu0 0
        %1160 = vmatprep.subr.bf16.mxu0 0
        %1161 = vmatpush1.bf16.msra.mxu0 0
        %1162 = vmatprep.subr.bf16.mxu0 0
        %1163 = vmatpush1.bf16.msra.mxu0 0
        %1164 = vmatprep.subr.bf16.mxu0 0
        %1165 = vmatpush1.bf16.msra.mxu0 0
        %1166 = vmatprep.subr.bf16.mxu0 0
        %1167 = vmatpush1.bf16.msra.mxu0 0
        %1168 = vmatprep.subr.bf16.mxu0 0
        %1169 = vmatpush1.bf16.msra.mxu0 0
        %1170 = vmatprep.subr.bf16.mxu0 0
        %1171 = vmatpush1.bf16.msra.mxu0 0
        %1172 = vmatprep.subr.bf16.mxu0 0
        %1173 = vmatpush1.bf16.msra.mxu0 0
        %1174 = vmatprep.mubr.bf16.mxu0 0
        %1175 = vmatmul.mubr.bf16.gmra.mrb[0].mxu0 %v1140
        %v1176 = vpop.f32.mrb[0].mxu0
        %v1177 = vadd.f32 0.0, %v1176
        %v1178 = vpop.f32.mrb[0].mxu0
        %v1179 = vpop.f32.mrb[0].mxu0
        %v1180 = vpop.f32.mrb[0].mxu0
        %1181 = vdwg.mxu0
        %v1182 = vld [vmem:[%s436] sm:$0xf]
        %s1183 = scalar_lea.vmem %s5, 16
        %v1184 = vld [vmem:[%s1183] sm:$0xf]
        %v1185 = vld [vmem:[%s1183 + $0x4] sm:$0xf]
        %v1186 = vld [vmem:[%s1183 + $0x8] sm:$0xf]
        %v1187 = vld [vmem:[%s1183 + $0xc] sm:$0xf]
        %v1192 = vunpack.c.l.b16 %v1184
        %v1193 = vunpack.c.l.b16 %v1185
        %v1194 = vunpack.c.l.b16 %v1186
        %v1195 = vunpack.c.l.b16 %v1187
        %v1196 = vpack.c.b16 %v1193, %v1192
        %v1197 = vpack.c.b16 %v1195, %v1194
        %v1201 = vsel %vm530, %v1182, 0
        %1203 = vmatprep.subr.bf16.mxu0 0
        %1204 = vmatpush1.bf16.msra.mxu0 %v1196
        %1205 = vmatprep.subr.bf16.mxu0 0
        %1206 = vmatpush1.bf16.msra.mxu0 %v1197
        %1207 = vmatprep.subr.bf16.mxu0 0
        %1208 = vmatpush1.bf16.msra.mxu0 0
        %1209 = vmatprep.subr.bf16.mxu0 0
        %1210 = vmatpush1.bf16.msra.mxu0 0
        %1211 = vmatprep.subr.bf16.mxu0 0
        %1212 = vmatpush1.bf16.msra.mxu0 0
        %1213 = vmatprep.subr.bf16.mxu0 0
        %1214 = vmatpush1.bf16.msra.mxu0 0
        %1215 = vmatprep.subr.bf16.mxu0 0
        %1216 = vmatpush1.bf16.msra.mxu0 0
        %1217 = vmatprep.subr.bf16.mxu0 0
        %1218 = vmatpush1.bf16.msra.mxu0 0
        %1219 = vmatprep.subr.bf16.mxu0 0
        %1220 = vmatpush1.bf16.msra.mxu0 0
        %1221 = vmatprep.subr.bf16.mxu0 0
        %1222 = vmatpush1.bf16.msra.mxu0 0
        %1223 = vmatprep.subr.bf16.mxu0 0
        %1224 = vmatpush1.bf16.msra.mxu0 0
        %1225 = vmatprep.subr.bf16.mxu0 0
        %1226 = vmatpush1.bf16.msra.mxu0 0
        %1227 = vmatprep.subr.bf16.mxu0 0
        %1228 = vmatpush1.bf16.msra.mxu0 0
        %1229 = vmatprep.subr.bf16.mxu0 0
        %1230 = vmatpush1.bf16.msra.mxu0 0
        %1231 = vmatprep.subr.bf16.mxu0 0
        %1232 = vmatpush1.bf16.msra.mxu0 0
        %1233 = vmatprep.subr.bf16.mxu0 0
        %1234 = vmatpush1.bf16.msra.mxu0 0
        %1235 = vmatprep.mubr.bf16.mxu0 0
        %1236 = vmatmul.mubr.bf16.gmra.mrb[0].mxu0 %v1201
        %v1237 = vpop.f32.mrb[0].mxu0
        %v1238 = vadd.f32 0.0, %v1237
        %v1239 = vpop.f32.mrb[0].mxu0
        %v1240 = vpop.f32.mrb[0].mxu0
        %v1241 = vpop.f32.mrb[0].mxu0
        %1242 = vdwg.mxu0
        %v1243 = vld [vmem:[%s445] sm:$0xf]
        %s1244 = scalar_lea.vmem %s5, 32
        %v1245 = vld [vmem:[%s1244] sm:$0xf]
        %v1246 = vld [vmem:[%s1244 + $0x4] sm:$0xf]
        %v1247 = vld [vmem:[%s1244 + $0x8] sm:$0xf]
        %v1248 = vld [vmem:[%s1244 + $0xc] sm:$0xf]
        %v1253 = vunpack.c.l.b16 %v1245
        %v1254 = vunpack.c.l.b16 %v1246
        %v1255 = vunpack.c.l.b16 %v1247
        %v1256 = vunpack.c.l.b16 %v1248
        %v1257 = vpack.c.b16 %v1254, %v1253
        %v1258 = vpack.c.b16 %v1256, %v1255
        %v1262 = vsel %vm530, %v1243, 0
        %1264 = vmatprep.subr.bf16.mxu0 0
        %1265 = vmatpush1.bf16.msra.mxu0 %v1257
        %1266 = vmatprep.subr.bf16.mxu0 0
        %1267 = vmatpush1.bf16.msra.mxu0 %v1258
        %1268 = vmatprep.subr.bf16.mxu0 0
        %1269 = vmatpush1.bf16.msra.mxu0 0
        %1270 = vmatprep.subr.bf16.mxu0 0
        %1271 = vmatpush1.bf16.msra.mxu0 0
        %1272 = vmatprep.subr.bf16.mxu0 0
        %1273 = vmatpush1.bf16.msra.mxu0 0
        %1274 = vmatprep.subr.bf16.mxu0 0
        %1275 = vmatpush1.bf16.msra.mxu0 0
        %1276 = vmatprep.subr.bf16.mxu0 0
        %1277 = vmatpush1.bf16.msra.mxu0 0
        %1278 = vmatprep.subr.bf16.mxu0 0
        %1279 = vmatpush1.bf16.msra.mxu0 0
        %1280 = vmatprep.subr.bf16.mxu0 0
        %1281 = vmatpush1.bf16.msra.mxu0 0
        %1282 = vmatprep.subr.bf16.mxu0 0
        %1283 = vmatpush1.bf16.msra.mxu0 0
        %1284 = vmatprep.subr.bf16.mxu0 0
        %1285 = vmatpush1.bf16.msra.mxu0 0
        %1286 = vmatprep.subr.bf16.mxu0 0
        %1287 = vmatpush1.bf16.msra.mxu0 0
        %1288 = vmatprep.subr.bf16.mxu0 0
        %1289 = vmatpush1.bf16.msra.mxu0 0
        %1290 = vmatprep.subr.bf16.mxu0 0
        %1291 = vmatpush1.bf16.msra.mxu0 0
        %1292 = vmatprep.subr.bf16.mxu0 0
        %1293 = vmatpush1.bf16.msra.mxu0 0
        %1294 = vmatprep.subr.bf16.mxu0 0
        %1295 = vmatpush1.bf16.msra.mxu0 0
        %1296 = vmatprep.mubr.bf16.mxu0 0
        %1297 = vmatmul.mubr.bf16.gmra.mrb[0].mxu0 %v1262
        %v1298 = vpop.f32.mrb[0].mxu0
        %v1299 = vadd.f32 0.0, %v1298
        %v1300 = vpop.f32.mrb[0].mxu0
        %v1301 = vpop.f32.mrb[0].mxu0
        %v1302 = vpop.f32.mrb[0].mxu0
        %1303 = vdwg.mxu0
        %v1304 = vpack.c.bf16 %v1177, %v1177
        %v1305 = vpack.c.bf16 %v1238, %v1238
        %v1306 = vpack.c.bf16 %v1299, %v1299
        %v1308 = vsel %vm578, %v1304, 0
        %v1311 = vsel %vm578, %v1305, 0
        %1313 = vmatprep.subr.bf16.mxu0 0
        %1314 = vmatpush1.bf16.xpose.msra.mxu0 %v1311
        %1315 = vmatprep.subr.bf16.mxu0 0
        %1316 = vmatpush1.bf16.xpose.msra.mxu0 0
        %1317 = vmatprep.subr.bf16.mxu0 0
        %1318 = vmatpush1.bf16.xpose.msra.mxu0 0
        %1319 = vmatprep.subr.bf16.mxu0 0
        %1320 = vmatpush1.bf16.xpose.msra.mxu0 0
        %1321 = vmatprep.subr.bf16.mxu0 0
        %1322 = vmatpush1.bf16.xpose.msra.mxu0 0
        %1323 = vmatprep.subr.bf16.mxu0 0
        %1324 = vmatpush1.bf16.xpose.msra.mxu0 0
        %1325 = vmatprep.subr.bf16.mxu0 0
        %1326 = vmatpush1.bf16.xpose.msra.mxu0 0
        %1327 = vmatprep.subr.bf16.mxu0 0
        %1328 = vmatpush1.bf16.xpose.msra.mxu0 0
        %1329 = vmatprep.subr.bf16.mxu0 0
        %1330 = vmatpush1.bf16.xpose.msra.mxu0 0
        %1331 = vmatprep.subr.bf16.mxu0 0
        %1332 = vmatpush1.bf16.xpose.msra.mxu0 0
        %1333 = vmatprep.subr.bf16.mxu0 0
        %1334 = vmatpush1.bf16.xpose.msra.mxu0 0
        %1335 = vmatprep.subr.bf16.mxu0 0
        %1336 = vmatpush1.bf16.xpose.msra.mxu0 0
        %1337 = vmatprep.subr.bf16.mxu0 0
        %1338 = vmatpush1.bf16.xpose.msra.mxu0 0
        %1339 = vmatprep.subr.bf16.mxu0 0
        %1340 = vmatpush1.bf16.xpose.msra.mxu0 0
        %1341 = vmatprep.subr.bf16.mxu0 0
        %1342 = vmatpush1.bf16.xpose.msra.mxu0 0
        %1343 = vmatprep.subr.bf16.mxu0 0
        %1344 = vmatpush1.bf16.xpose.msra.mxu0 0
        %1345 = vmatprep.mubr.bf16.mxu0 0
        %1346 = vmatmul.mubr.bf16.gmra.mrb[0].mxu0 %v1308
        %v1347 = vpop.f32.mrb[0].mxu0
        %v1348 = vadd.f32 0.0, %v1347
        %v1349 = vpop.f32.mrb[0].mxu0
        %v1350 = vpop.f32.mrb[0].mxu0
        %v1351 = vpop.f32.mrb[0].mxu0
        %1352 = vdwg.mxu0
        %v1353 = vsel %vm578, %v1348, -inf
        %1354 = vmax.xlane.f32.xlu0 %v1353
        %v1355 = vpop.xlane.xlu0 %1354
        %v1356 = vsub.f32 %v1348, %v1355
        %v1357 = vmul.f32 %v1356, 1.442695
        %v1358 = vpow.pop %v1357
        %v1359 = vsel %vm578, %v1358, 0.0
        %1360 = vadd.xlane.f32.xlu0 %v1359
        %v1361 = vpop.xlane.xlu0 %1360
        %v1362 = vrcp.pop %v1361
        %v1363 = vmul.f32 %v1358, %v1362
        %v1364 = vpack.c.bf16 %v1363, %v1363
        %v1366 = vsel %vm578, %v1364, 0
        %v1369 = vsel %vm642, %v1306, 0
        %1371 = vmatprep.subr.bf16.mxu0 0
        %1372 = vmatpush1.bf16.msra.mxu0 %v1369
        %1373 = vmatprep.subr.bf16.mxu0 0
        %1374 = vmatpush1.bf16.msra.mxu0 0
        %1375 = vmatprep.subr.bf16.mxu0 0
        %1376 = vmatpush1.bf16.msra.mxu0 0
        %1377 = vmatprep.subr.bf16.mxu0 0
        %1378 = vmatpush1.bf16.msra.mxu0 0
        %1379 = vmatprep.subr.bf16.mxu0 0
        %1380 = vmatpush1.bf16.msra.mxu0 0
        %1381 = vmatprep.subr.bf16.mxu0 0
        %1382 = vmatpush1.bf16.msra.mxu0 0
        %1383 = vmatprep.subr.bf16.mxu0 0
        %1384 = vmatpush1.bf16.msra.mxu0 0
        %1385 = vmatprep.subr.bf16.mxu0 0
        %1386 = vmatpush1.bf16.msra.mxu0 0
        %1387 = vmatprep.subr.bf16.mxu0 0
        %1388 = vmatpush1.bf16.msra.mxu0 0
        %1389 = vmatprep.subr.bf16.mxu0 0
        %1390 = vmatpush1.bf16.msra.mxu0 0
        %1391 = vmatprep.subr.bf16.mxu0 0
        %1392 = vmatpush1.bf16.msra.mxu0 0
        %1393 = vmatprep.subr.bf16.mxu0 0
        %1394 = vmatpush1.bf16.msra.mxu0 0
        %1395 = vmatprep.subr.bf16.mxu0 0
        %1396 = vmatpush1.bf16.msra.mxu0 0
        %1397 = vmatprep.subr.bf16.mxu0 0
        %1398 = vmatpush1.bf16.msra.mxu0 0
        %1399 = vmatprep.subr.bf16.mxu0 0
        %1400 = vmatpush1.bf16.msra.mxu0 0
        %1401 = vmatprep.subr.bf16.mxu0 0
        %1402 = vmatpush1.bf16.msra.mxu0 0
        %1403 = vmatprep.mubr.bf16.mxu0 0
        %1404 = vmatmul.mubr.bf16.gmra.mrb[0].mxu0 %v1366
        %v1405 = vpop.f32.mrb[0].mxu0
        %v1406 = vadd.f32 0.0, %v1405
        %v1407 = vpop.f32.mrb[0].mxu0
        %v1408 = vpop.f32.mrb[0].mxu0
        %v1409 = vpop.f32.mrb[0].mxu0
        %1410 = vdwg.mxu0
        %1412 = vrot.lane.b32.xlu0 %v1304, 120
        %v1413 = vpop.permute.xlu0 %1412
        %1415 = vrot.lane.b32.xlu0 %v1305, 120
        %v1416 = vpop.permute.xlu0 %1415
        %v1418 = vsel %vm578, %v1413, 0
        %v1421 = vsel %vm578, %v1416, 0
        %1423 = vmatprep.subr.bf16.mxu0 0
        %1424 = vmatpush1.bf16.xpose.msra.mxu0 %v1421
        %1425 = vmatprep.subr.bf16.mxu0 0
        %1426 = vmatpush1.bf16.xpose.msra.mxu0 0
        %1427 = vmatprep.subr.bf16.mxu0 0
        %1428 = vmatpush1.bf16.xpose.msra.mxu0 0
        %1429 = vmatprep.subr.bf16.mxu0 0
        %1430 = vmatpush1.bf16.xpose.msra.mxu0 0
        %1431 = vmatprep.subr.bf16.mxu0 0
        %1432 = vmatpush1.bf16.xpose.msra.mxu0 0
        %1433 = vmatprep.subr.bf16.mxu0 0
        %1434 = vmatpush1.bf16.xpose.msra.mxu0 0
        %1435 = vmatprep.subr.bf16.mxu0 0
        %1436 = vmatpush1.bf16.xpose.msra.mxu0 0
        %1437 = vmatprep.subr.bf16.mxu0 0
        %1438 = vmatpush1.bf16.xpose.msra.mxu0 0
        %1439 = vmatprep.subr.bf16.mxu0 0
        %1440 = vmatpush1.bf16.xpose.msra.mxu0 0
        %1441 = vmatprep.subr.bf16.mxu0 0
        %1442 = vmatpush1.bf16.xpose.msra.mxu0 0
        %1443 = vmatprep.subr.bf16.mxu0 0
        %1444 = vmatpush1.bf16.xpose.msra.mxu0 0
        %1445 = vmatprep.subr.bf16.mxu0 0
        %1446 = vmatpush1.bf16.xpose.msra.mxu0 0
        %1447 = vmatprep.subr.bf16.mxu0 0
        %1448 = vmatpush1.bf16.xpose.msra.mxu0 0
        %1449 = vmatprep.subr.bf16.mxu0 0
        %1450 = vmatpush1.bf16.xpose.msra.mxu0 0
        %1451 = vmatprep.subr.bf16.mxu0 0
        %1452 = vmatpush1.bf16.xpose.msra.mxu0 0
        %1453 = vmatprep.subr.bf16.mxu0 0
        %1454 = vmatpush1.bf16.xpose.msra.mxu0 0
        %1455 = vmatprep.mubr.bf16.mxu0 0
        %1456 = vmatmul.mubr.bf16.gmra.mrb[0].mxu0 %v1418
        %v1457 = vpop.f32.mrb[0].mxu0
        %v1458 = vadd.f32 0.0, %v1457
        %v1459 = vpop.f32.mrb[0].mxu0
        %v1460 = vpop.f32.mrb[0].mxu0
        %v1461 = vpop.f32.mrb[0].mxu0
        %1462 = vdwg.mxu0
        %v1463 = vsel %vm578, %v1458, -inf
        %1464 = vmax.xlane.f32.xlu0 %v1463
        %v1465 = vpop.xlane.xlu0 %1464
        %v1466 = vsub.f32 %v1458, %v1465
        %v1467 = vmul.f32 %v1466, 1.442695
        %v1468 = vpow.pop %v1467
        %v1469 = vsel %vm578, %v1468, 0.0
        %1470 = vadd.xlane.f32.xlu0 %v1469
        %v1471 = vpop.xlane.xlu0 %1470
        %v1472 = vrcp.pop %v1471
        %v1473 = vmul.f32 %v1468, %v1472
        %v1474 = vpack.c.bf16 %v1473, %v1473
        %1476 = vrot.lane.b32.xlu0 %v1306, 120
        %v1477 = vpop.permute.xlu0 %1476
        %v1479 = vsel %vm578, %v1474, 0
        %v1482 = vsel %vm642, %v1477, 0
        %1484 = vmatprep.subr.bf16.mxu0 0
        %1485 = vmatpush1.bf16.msra.mxu0 %v1482
        %1486 = vmatprep.subr.bf16.mxu0 0
        %1487 = vmatpush1.bf16.msra.mxu0 0
        %1488 = vmatprep.subr.bf16.mxu0 0
        %1489 = vmatpush1.bf16.msra.mxu0 0
        %1490 = vmatprep.subr.bf16.mxu0 0
        %1491 = vmatpush1.bf16.msra.mxu0 0
        %1492 = vmatprep.subr.bf16.mxu0 0
        %1493 = vmatpush1.bf16.msra.mxu0 0
        %1494 = vmatprep.subr.bf16.mxu0 0
        %1495 = vmatpush1.bf16.msra.mxu0 0
        %1496 = vmatprep.subr.bf16.mxu0 0
        %1497 = vmatpush1.bf16.msra.mxu0 0
        %1498 = vmatprep.subr.bf16.mxu0 0
        %1499 = vmatpush1.bf16.msra.mxu0 0
        %1500 = vmatprep.subr.bf16.mxu0 0
        %1501 = vmatpush1.bf16.msra.mxu0 0
        %1502 = vmatprep.subr.bf16.mxu0 0
        %1503 = vmatpush1.bf16.msra.mxu0 0
        %1504 = vmatprep.subr.bf16.mxu0 0
        %1505 = vmatpush1.bf16.msra.mxu0 0
        %1506 = vmatprep.subr.bf16.mxu0 0
        %1507 = vmatpush1.bf16.msra.mxu0 0
        %1508 = vmatprep.subr.bf16.mxu0 0
        %1509 = vmatpush1.bf16.msra.mxu0 0
        %1510 = vmatprep.subr.bf16.mxu0 0
        %1511 = vmatpush1.bf16.msra.mxu0 0
        %1512 = vmatprep.subr.bf16.mxu0 0
        %1513 = vmatpush1.bf16.msra.mxu0 0
        %1514 = vmatprep.subr.bf16.mxu0 0
        %1515 = vmatpush1.bf16.msra.mxu0 0
        %1516 = vmatprep.mubr.bf16.mxu0 0
        %1517 = vmatmul.mubr.bf16.gmra.mrb[0].mxu0 %v1479
        %v1518 = vpop.f32.mrb[0].mxu0
        %v1519 = vadd.f32 0.0, %v1518
        %v1520 = vpop.f32.mrb[0].mxu0
        %v1521 = vpop.f32.mrb[0].mxu0
        %v1522 = vpop.f32.mrb[0].mxu0
        %1523 = vdwg.mxu0
        %1524 = vrot.lane.b32.xlu0 %v1304, 112
        %v1525 = vpop.permute.xlu0 %1524
        %1526 = vrot.lane.b32.xlu0 %v1305, 112
        %v1527 = vpop.permute.xlu0 %1526
        %v1529 = vsel %vm578, %v1525, 0
        %v1532 = vsel %vm578, %v1527, 0
        %1534 = vmatprep.subr.bf16.mxu0 0
        %1535 = vmatpush1.bf16.xpose.msra.mxu0 %v1532
        %1536 = vmatprep.subr.bf16.mxu0 0
        %1537 = vmatpush1.bf16.xpose.msra.mxu0 0
        %1538 = vmatprep.subr.bf16.mxu0 0
        %1539 = vmatpush1.bf16.xpose.msra.mxu0 0
        %1540 = vmatprep.subr.bf16.mxu0 0
        %1541 = vmatpush1.bf16.xpose.msra.mxu0 0
        %1542 = vmatprep.subr.bf16.mxu0 0
        %1543 = vmatpush1.bf16.xpose.msra.mxu0 0
        %1544 = vmatprep.subr.bf16.mxu0 0
        %1545 = vmatpush1.bf16.xpose.msra.mxu0 0
        %1546 = vmatprep.subr.bf16.mxu0 0
        %1547 = vmatpush1.bf16.xpose.msra.mxu0 0
        %1548 = vmatprep.subr.bf16.mxu0 0
        %1549 = vmatpush1.bf16.xpose.msra.mxu0 0
        %1550 = vmatprep.subr.bf16.mxu0 0
        %1551 = vmatpush1.bf16.xpose.msra.mxu0 0
        %1552 = vmatprep.subr.bf16.mxu0 0
        %1553 = vmatpush1.bf16.xpose.msra.mxu0 0
        %1554 = vmatprep.subr.bf16.mxu0 0
        %1555 = vmatpush1.bf16.xpose.msra.mxu0 0
        %1556 = vmatprep.subr.bf16.mxu0 0
        %1557 = vmatpush1.bf16.xpose.msra.mxu0 0
        %1558 = vmatprep.subr.bf16.mxu0 0
        %1559 = vmatpush1.bf16.xpose.msra.mxu0 0
        %1560 = vmatprep.subr.bf16.mxu0 0
        %1561 = vmatpush1.bf16.xpose.msra.mxu0 0
        %1562 = vmatprep.subr.bf16.mxu0 0
        %1563 = vmatpush1.bf16.xpose.msra.mxu0 0
        %1564 = vmatprep.subr.bf16.mxu0 0
        %1565 = vmatpush1.bf16.xpose.msra.mxu0 0
        %1566 = vmatprep.mubr.bf16.mxu0 0
        %1567 = vmatmul.mubr.bf16.gmra.mrb[0].mxu0 %v1529
        %v1568 = vpop.f32.mrb[0].mxu0
        %v1569 = vadd.f32 0.0, %v1568
        %v1570 = vpop.f32.mrb[0].mxu0
        %v1571 = vpop.f32.mrb[0].mxu0
        %v1572 = vpop.f32.mrb[0].mxu0
        %1573 = vdwg.mxu0
        %v1574 = vsel %vm578, %v1569, -inf
        %1575 = vmax.xlane.f32.xlu0 %v1574
        %v1576 = vpop.xlane.xlu0 %1575
        %v1577 = vsub.f32 %v1569, %v1576
        %v1578 = vmul.f32 %v1577, 1.442695
        %v1579 = vpow.pop %v1578
        %v1580 = vsel %vm578, %v1579, 0.0
        %1581 = vadd.xlane.f32.xlu0 %v1580
        %v1582 = vpop.xlane.xlu0 %1581
        %v1583 = vrcp.pop %v1582
        %v1584 = vmul.f32 %v1579, %v1583
        %v1585 = vpack.c.bf16 %v1584, %v1584
        %1586 = vrot.lane.b32.xlu0 %v1306, 112
        %v1587 = vpop.permute.xlu0 %1586
        %v1589 = vsel %vm578, %v1585, 0
        %v1592 = vsel %vm642, %v1587, 0
        %1594 = vmatprep.subr.bf16.mxu0 0
        %1595 = vmatpush1.bf16.msra.mxu0 %v1592
        %1596 = vmatprep.subr.bf16.mxu0 0
        %1597 = vmatpush1.bf16.msra.mxu0 0
        %1598 = vmatprep.subr.bf16.mxu0 0
        %1599 = vmatpush1.bf16.msra.mxu0 0
        %1600 = vmatprep.subr.bf16.mxu0 0
        %1601 = vmatpush1.bf16.msra.mxu0 0
        %1602 = vmatprep.subr.bf16.mxu0 0
        %1603 = vmatpush1.bf16.msra.mxu0 0
        %1604 = vmatprep.subr.bf16.mxu0 0
        %1605 = vmatpush1.bf16.msra.mxu0 0
        %1606 = vmatprep.subr.bf16.mxu0 0
        %1607 = vmatpush1.bf16.msra.mxu0 0
        %1608 = vmatprep.subr.bf16.mxu0 0
        %1609 = vmatpush1.bf16.msra.mxu0 0
        %1610 = vmatprep.subr.bf16.mxu0 0
        %1611 = vmatpush1.bf16.msra.mxu0 0
        %1612 = vmatprep.subr.bf16.mxu0 0
        %1613 = vmatpush1.bf16.msra.mxu0 0
        %1614 = vmatprep.subr.bf16.mxu0 0
        %1615 = vmatpush1.bf16.msra.mxu0 0
        %1616 = vmatprep.subr.bf16.mxu0 0
        %1617 = vmatpush1.bf16.msra.mxu0 0
        %1618 = vmatprep.subr.bf16.mxu0 0
        %1619 = vmatpush1.bf16.msra.mxu0 0
        %1620 = vmatprep.subr.bf16.mxu0 0
        %1621 = vmatpush1.bf16.msra.mxu0 0
        %1622 = vmatprep.subr.bf16.mxu0 0
        %1623 = vmatpush1.bf16.msra.mxu0 0
        %1624 = vmatprep.subr.bf16.mxu0 0
        %1625 = vmatpush1.bf16.msra.mxu0 0
        %1626 = vmatprep.mubr.bf16.mxu0 0
        %1627 = vmatmul.mubr.bf16.gmra.mrb[0].mxu0 %v1589
        %v1628 = vpop.f32.mrb[0].mxu0
        %v1629 = vadd.f32 0.0, %v1628
        %v1630 = vpop.f32.mrb[0].mxu0
        %v1631 = vpop.f32.mrb[0].mxu0
        %v1632 = vpop.f32.mrb[0].mxu0
        %1633 = vdwg.mxu0
        %1634 = vrot.lane.b32.xlu0 %v1304, 104
        %v1635 = vpop.permute.xlu0 %1634
        %1636 = vrot.lane.b32.xlu0 %v1305, 104
        %v1637 = vpop.permute.xlu0 %1636
        %v1639 = vsel %vm578, %v1635, 0
        %v1642 = vsel %vm578, %v1637, 0
        %1644 = vmatprep.subr.bf16.mxu0 0
        %1645 = vmatpush1.bf16.xpose.msra.mxu0 %v1642
        %1646 = vmatprep.subr.bf16.mxu0 0
        %1647 = vmatpush1.bf16.xpose.msra.mxu0 0
        %1648 = vmatprep.subr.bf16.mxu0 0
        %1649 = vmatpush1.bf16.xpose.msra.mxu0 0
        %1650 = vmatprep.subr.bf16.mxu0 0
        %1651 = vmatpush1.bf16.xpose.msra.mxu0 0
        %1652 = vmatprep.subr.bf16.mxu0 0
        %1653 = vmatpush1.bf16.xpose.msra.mxu0 0
        %1654 = vmatprep.subr.bf16.mxu0 0
        %1655 = vmatpush1.bf16.xpose.msra.mxu0 0
        %1656 = vmatprep.subr.bf16.mxu0 0
        %1657 = vmatpush1.bf16.xpose.msra.mxu0 0
        %1658 = vmatprep.subr.bf16.mxu0 0
        %1659 = vmatpush1.bf16.xpose.msra.mxu0 0
        %1660 = vmatprep.subr.bf16.mxu0 0
        %1661 = vmatpush1.bf16.xpose.msra.mxu0 0
        %1662 = vmatprep.subr.bf16.mxu0 0
        %1663 = vmatpush1.bf16.xpose.msra.mxu0 0
        %1664 = vmatprep.subr.bf16.mxu0 0
        %1665 = vmatpush1.bf16.xpose.msra.mxu0 0
        %1666 = vmatprep.subr.bf16.mxu0 0
        %1667 = vmatpush1.bf16.xpose.msra.mxu0 0
        %1668 = vmatprep.subr.bf16.mxu0 0
        %1669 = vmatpush1.bf16.xpose.msra.mxu0 0
        %1670 = vmatprep.subr.bf16.mxu0 0
        %1671 = vmatpush1.bf16.xpose.msra.mxu0 0
        %1672 = vmatprep.subr.bf16.mxu0 0
        %1673 = vmatpush1.bf16.xpose.msra.mxu0 0
        %1674 = vmatprep.subr.bf16.mxu0 0
        %1675 = vmatpush1.bf16.xpose.msra.mxu0 0
        %1676 = vmatprep.mubr.bf16.mxu0 0
        %1677 = vmatmul.mubr.bf16.gmra.mrb[0].mxu0 %v1639
        %v1678 = vpop.f32.mrb[0].mxu0
        %v1679 = vadd.f32 0.0, %v1678
        %v1680 = vpop.f32.mrb[0].mxu0
        %v1681 = vpop.f32.mrb[0].mxu0
        %v1682 = vpop.f32.mrb[0].mxu0
        %1683 = vdwg.mxu0
        %v1684 = vsel %vm578, %v1679, -inf
        %1685 = vmax.xlane.f32.xlu0 %v1684
        %v1686 = vpop.xlane.xlu0 %1685
        %v1687 = vsub.f32 %v1679, %v1686
        %v1688 = vmul.f32 %v1687, 1.442695
        %v1689 = vpow.pop %v1688
        %v1690 = vsel %vm578, %v1689, 0.0
        %1691 = vadd.xlane.f32.xlu0 %v1690
        %v1692 = vpop.xlane.xlu0 %1691
        %v1693 = vrcp.pop %v1692
        %v1694 = vmul.f32 %v1689, %v1693
        %v1695 = vpack.c.bf16 %v1694, %v1694
        %1696 = vrot.lane.b32.xlu0 %v1306, 104
        %v1697 = vpop.permute.xlu0 %1696
        %v1699 = vsel %vm578, %v1695, 0
        %v1702 = vsel %vm642, %v1697, 0
        %1704 = vmatprep.subr.bf16.mxu0 0
        %1705 = vmatpush1.bf16.msra.mxu0 %v1702
        %1706 = vmatprep.subr.bf16.mxu0 0
        %1707 = vmatpush1.bf16.msra.mxu0 0
        %1708 = vmatprep.subr.bf16.mxu0 0
        %1709 = vmatpush1.bf16.msra.mxu0 0
        %1710 = vmatprep.subr.bf16.mxu0 0
        %1711 = vmatpush1.bf16.msra.mxu0 0
        %1712 = vmatprep.subr.bf16.mxu0 0
        %1713 = vmatpush1.bf16.msra.mxu0 0
        %1714 = vmatprep.subr.bf16.mxu0 0
        %1715 = vmatpush1.bf16.msra.mxu0 0
        %1716 = vmatprep.subr.bf16.mxu0 0
        %1717 = vmatpush1.bf16.msra.mxu0 0
        %1718 = vmatprep.subr.bf16.mxu0 0
        %1719 = vmatpush1.bf16.msra.mxu0 0
        %1720 = vmatprep.subr.bf16.mxu0 0
        %1721 = vmatpush1.bf16.msra.mxu0 0
        %1722 = vmatprep.subr.bf16.mxu0 0
        %1723 = vmatpush1.bf16.msra.mxu0 0
        %1724 = vmatprep.subr.bf16.mxu0 0
        %1725 = vmatpush1.bf16.msra.mxu0 0
        %1726 = vmatprep.subr.bf16.mxu0 0
        %1727 = vmatpush1.bf16.msra.mxu0 0
        %1728 = vmatprep.subr.bf16.mxu0 0
        %1729 = vmatpush1.bf16.msra.mxu0 0
        %1730 = vmatprep.subr.bf16.mxu0 0
        %1731 = vmatpush1.bf16.msra.mxu0 0
        %1732 = vmatprep.subr.bf16.mxu0 0
        %1733 = vmatpush1.bf16.msra.mxu0 0
        %1734 = vmatprep.subr.bf16.mxu0 0
        %1735 = vmatpush1.bf16.msra.mxu0 0
        %1736 = vmatprep.mubr.bf16.mxu0 0
        %1737 = vmatmul.mubr.bf16.gmra.mrb[0].mxu0 %v1699
        %v1738 = vpop.f32.mrb[0].mxu0
        %v1739 = vadd.f32 0.0, %v1738
        %v1740 = vpop.f32.mrb[0].mxu0
        %v1741 = vpop.f32.mrb[0].mxu0
        %v1742 = vpop.f32.mrb[0].mxu0
        %1743 = vdwg.mxu0
        %1745 = vrot.lane.b32.xlu0 %v1519, 8
        %v1746 = vpop.permute.xlu0 %1745
        %1749 = vrot.lane.b32.xlu0 %v1629, 16
        %v1750 = vpop.permute.xlu0 %1749
        %1753 = vrot.lane.b32.xlu0 %v1739, 24
        %v1754 = vpop.permute.xlu0 %1753
        %v1756 = vsel %vm578, %v1406, %v1746
        %v1757 = vsel %vm1029, %v1756, %v1750
        %v1758 = vsel %vm1031, %v1757, %v1754
        %v1759 = vpack.c.bf16 %v1758, %v1758
        %v1760 = vld [vmem:[#allocation8] sm:$0xf]
        %v1761 = vld [vmem:[#allocation8 + $0x4] sm:$0xf]
        %v1762 = vld [vmem:[#allocation8 + $0x8] sm:$0xf]
        %v1763 = vld [vmem:[#allocation8 + $0xc] sm:$0xf]
        %v1764 = vlaneseq
        %v1765 = vshrl.u32 %v1764, 7
        %v1766 = vsub.s32 3, %v1765
        %v1767 = vrot.slane %v505, %v1766
        %v1772 = vunpack.c.l.b16 %v1760
        %v1773 = vunpack.c.l.b16 %v1761
        %v1774 = vunpack.c.l.b16 %v1762
        %v1775 = vunpack.c.l.b16 %v1763
        %v1776 = vpack.c.b16 %v1773, %v1772
        %v1777 = vpack.c.b16 %v1775, %v1774
        %v1781 = vsel %vm530, %v1759, 0
        %1783 = vmatprep.subr.bf16.mxu0 0
        %1784 = vmatpush1.bf16.msra.mxu0 %v1776
        %1785 = vmatprep.subr.bf16.mxu0 0
        %1786 = vmatpush1.bf16.msra.mxu0 %v1777
        %1787 = vmatprep.subr.bf16.mxu0 0
        %1788 = vmatpush1.bf16.msra.mxu0 0
        %1789 = vmatprep.subr.bf16.mxu0 0
        %1790 = vmatpush1.bf16.msra.mxu0 0
        %1791 = vmatprep.subr.bf16.mxu0 0
        %1792 = vmatpush1.bf16.msra.mxu0 0
        %1793 = vmatprep.subr.bf16.mxu0 0
        %1794 = vmatpush1.bf16.msra.mxu0 0
        %1795 = vmatprep.subr.bf16.mxu0 0
        %1796 = vmatpush1.bf16.msra.mxu0 0
        %1797 = vmatprep.subr.bf16.mxu0 0
        %1798 = vmatpush1.bf16.msra.mxu0 0
        %1799 = vmatprep.subr.bf16.mxu0 0
        %1800 = vmatpush1.bf16.msra.mxu0 0
        %1801 = vmatprep.subr.bf16.mxu0 0
        %1802 = vmatpush1.bf16.msra.mxu0 0
        %1803 = vmatprep.subr.bf16.mxu0 0
        %1804 = vmatpush1.bf16.msra.mxu0 0
        %1805 = vmatprep.subr.bf16.mxu0 0
        %1806 = vmatpush1.bf16.msra.mxu0 0
        %1807 = vmatprep.subr.bf16.mxu0 0
        %1808 = vmatpush1.bf16.msra.mxu0 0
        %1809 = vmatprep.subr.bf16.mxu0 0
        %1810 = vmatpush1.bf16.msra.mxu0 0
        %1811 = vmatprep.subr.bf16.mxu0 0
        %1812 = vmatpush1.bf16.msra.mxu0 0
        %1813 = vmatprep.subr.bf16.mxu0 0
        %1814 = vmatpush1.bf16.msra.mxu0 0
        %1815 = vmatprep.mubr.bf16.mxu0 0
        %1816 = vmatmul.mubr.bf16.gmra.mrb[0].mxu0 %v1781
        %v1817 = vpop.f32.mrb[0].mxu0
        %v1818 = vadd.f32 %v1767, %v1817
        %v1819 = vpop.f32.mrb[0].mxu0
        %v1820 = vpop.f32.mrb[0].mxu0
        %v1821 = vpop.f32.mrb[0].mxu0
        %1822 = vdwg.mxu0
        %v1823 = vadd.f32 %v1121, %v1818
        %v1824 = vsel %vm530, %v1823, 0.0
        %1825 = vadd.xlane.f32.xlu0 %v1824
        %v1826 = vpop.xlane.xlu0 %1825
        %v1827 = vmul.f32 %v1826, %v1101
        %v1828 = vsub.f32 %v1823, %v1827
        %v1829 = vmul.f32 %v1828, %v1828
        %v1830 = vsel %vm530, %v1829, 0.0
        %1831 = vadd.xlane.f32.xlu0 %v1830
        %v1832 = vpop.xlane.xlu0 %1831
        %v1833 = vmul.f32 %v1832, %v1101
        %v1834 = vadd.f32 %v1833, 1e-05
        %v1835 = vrsqrt.pop %v1834
        %v1836 = vmul.f32 %v1828, %v1835
        %v1837 = vlaneseq
        %v1838 = vshrl.u32 %v1837, 7
        %v1839 = vsub.s32 4, %v1838
        %v1840 = vrot.slane %v505, %v1839
        %v1841 = vmul.f32 %v1836, %v1840
        %v1842 = vlaneseq
        %v1843 = vshrl.u32 %v1842, 7
        %v1844 = vsub.s32 5, %v1843
        %v1845 = vrot.slane %v505, %v1844
        %v1846 = vadd.f32 %v1841, %v1845
        %v1847 = vpack.c.bf16 %v1846, %v1846
        %v1848 = vld [vmem:[#allocation10] sm:$0xf]
        %v1849 = vld [vmem:[#allocation10 + $0x4] sm:$0xf]
        %v1850 = vld [vmem:[#allocation10 + $0x8] sm:$0xf]
        %v1851 = vld [vmem:[#allocation10 + $0xc] sm:$0xf]
        %v1853 = vlaneseq
        %v1854 = vshrl.u32 %v1853, 7
        %v1855 = vsub.s32 0, %v1854
        %v1856 = vrot.slane %v507, %v1855
        %v1862 = vunpack.c.l.b16 %v1848
        %v1863 = vunpack.c.l.b16 %v1849
        %v1864 = vunpack.c.l.b16 %v1850
        %v1865 = vunpack.c.l.b16 %v1851
        %v1866 = vpack.c.b16 %v1863, %v1862
        %v1867 = vpack.c.b16 %v1865, %v1864
        %v1871 = vsel %vm530, %v1847, 0
        %1873 = vmatprep.subr.bf16.mxu0 0
        %1874 = vmatpush1.bf16.msra.mxu0 %v1866
        %1875 = vmatprep.subr.bf16.mxu0 0
        %1876 = vmatpush1.bf16.msra.mxu0 %v1867
        %1877 = vmatprep.subr.bf16.mxu0 0
        %1878 = vmatpush1.bf16.msra.mxu0 0
        %1879 = vmatprep.subr.bf16.mxu0 0
        %1880 = vmatpush1.bf16.msra.mxu0 0
        %1881 = vmatprep.subr.bf16.mxu0 0
        %1882 = vmatpush1.bf16.msra.mxu0 0
        %1883 = vmatprep.subr.bf16.mxu0 0
        %1884 = vmatpush1.bf16.msra.mxu0 0
        %1885 = vmatprep.subr.bf16.mxu0 0
        %1886 = vmatpush1.bf16.msra.mxu0 0
        %1887 = vmatprep.subr.bf16.mxu0 0
        %1888 = vmatpush1.bf16.msra.mxu0 0
        %1889 = vmatprep.subr.bf16.mxu0 0
        %1890 = vmatpush1.bf16.msra.mxu0 0
        %1891 = vmatprep.subr.bf16.mxu0 0
        %1892 = vmatpush1.bf16.msra.mxu0 0
        %1893 = vmatprep.subr.bf16.mxu0 0
        %1894 = vmatpush1.bf16.msra.mxu0 0
        %1895 = vmatprep.subr.bf16.mxu0 0
        %1896 = vmatpush1.bf16.msra.mxu0 0
        %1897 = vmatprep.subr.bf16.mxu0 0
        %1898 = vmatpush1.bf16.msra.mxu0 0
        %1899 = vmatprep.subr.bf16.mxu0 0
        %1900 = vmatpush1.bf16.msra.mxu0 0
        %1901 = vmatprep.subr.bf16.mxu0 0
        %1902 = vmatpush1.bf16.msra.mxu0 0
        %1903 = vmatprep.subr.bf16.mxu0 0
        %1904 = vmatpush1.bf16.msra.mxu0 0
        %1905 = vmatprep.mubr.bf16.mxu0 0
        %1906 = vmatmul.mubr.bf16.gmra.mrb[0].mxu0 %v1871
        %v1907 = vpop.f32.mrb[0].mxu0
        %v1908 = vadd.f32 %v1856, %v1907
        %v1909 = vpop.f32.mrb[0].mxu0
        %v1910 = vpop.f32.mrb[0].mxu0
        %v1911 = vpop.f32.mrb[0].mxu0
        %1912 = vdwg.mxu0
        %v1913 = vmax.f32 %v1908, 0.0
        %v1914 = vpack.c.bf16 %v1913, %v1913
        %v1915 = vld [vmem:[%s8] sm:$0xf]
        %v1916 = vld [vmem:[%s8 + $0x4] sm:$0xf]
        %v1917 = vld [vmem:[%s8 + $0x8] sm:$0xf]
        %v1918 = vld [vmem:[%s8 + $0xc] sm:$0xf]
        %v1919 = vld [vmem:[%s8 + $0x10] sm:$0xf]
        %v1920 = vld [vmem:[%s8 + $0x14] sm:$0xf]
        %v1921 = vld [vmem:[%s8 + $0x18] sm:$0xf]
        %v1922 = vld [vmem:[%s8 + $0x1c] sm:$0xf]
        %v1923 = vld [vmem:[%s8 + $0x20] sm:$0xf]
        %v1924 = vld [vmem:[%s8 + $0x24] sm:$0xf]
        %v1925 = vld [vmem:[%s8 + $0x28] sm:$0xf]
        %v1926 = vld [vmem:[%s8 + $0x2c] sm:$0xf]
        %v1927 = vld [vmem:[%s8 + $0x30] sm:$0xf]
        %v1928 = vld [vmem:[%s8 + $0x34] sm:$0xf]
        %v1929 = vld [vmem:[%s8 + $0x38] sm:$0xf]
        %v1930 = vld [vmem:[%s8 + $0x3c] sm:$0xf]
        %v1931 = vlaneseq
        %v1932 = vshrl.u32 %v1931, 7
        %v1933 = vsub.s32 6, %v1932
        %v1934 = vrot.slane %v505, %v1933
        %v1951 = vunpack.c.l.b16 %v1915
        %v1952 = vunpack.c.l.b16 %v1916
        %v1953 = vunpack.c.l.b16 %v1917
        %v1954 = vunpack.c.l.b16 %v1918
        %v1955 = vunpack.c.l.b16 %v1919
        %v1956 = vunpack.c.l.b16 %v1920
        %v1957 = vunpack.c.l.b16 %v1921
        %v1958 = vunpack.c.l.b16 %v1922
        %v1959 = vunpack.c.l.b16 %v1923
        %v1960 = vunpack.c.l.b16 %v1924
        %v1961 = vunpack.c.l.b16 %v1925
        %v1962 = vunpack.c.l.b16 %v1926
        %v1963 = vunpack.c.l.b16 %v1927
        %v1964 = vunpack.c.l.b16 %v1928
        %v1965 = vunpack.c.l.b16 %v1929
        %v1966 = vunpack.c.l.b16 %v1930
        %v1967 = vpack.c.b16 %v1952, %v1951
        %v1968 = vpack.c.b16 %v1954, %v1953
        %v1969 = vpack.c.b16 %v1956, %v1955
        %v1970 = vpack.c.b16 %v1958, %v1957
        %v1971 = vpack.c.b16 %v1960, %v1959
        %v1972 = vpack.c.b16 %v1962, %v1961
        %v1973 = vpack.c.b16 %v1964, %v1963
        %v1974 = vpack.c.b16 %v1966, %v1965
        %1983 = vmatprep.subr.bf16.mxu0 0
        %1984 = vmatpush1.bf16.msra.mxu0 %v1967
        %1985 = vmatprep.subr.bf16.mxu0 0
        %1986 = vmatpush1.bf16.msra.mxu0 %v1968
        %1987 = vmatprep.subr.bf16.mxu0 0
        %1988 = vmatpush1.bf16.msra.mxu0 %v1969
        %1989 = vmatprep.subr.bf16.mxu0 0
        %1990 = vmatpush1.bf16.msra.mxu0 %v1970
        %1991 = vmatprep.subr.bf16.mxu0 0
        %1992 = vmatpush1.bf16.msra.mxu0 %v1971
        %1993 = vmatprep.subr.bf16.mxu0 0
        %1994 = vmatpush1.bf16.msra.mxu0 %v1972
        %1995 = vmatprep.subr.bf16.mxu0 0
        %1996 = vmatpush1.bf16.msra.mxu0 %v1973
        %1997 = vmatprep.subr.bf16.mxu0 0
        %1998 = vmatpush1.bf16.msra.mxu0 %v1974
        %1999 = vmatprep.subr.bf16.mxu0 0
        %2000 = vmatpush1.bf16.msra.mxu0 0
        %2001 = vmatprep.subr.bf16.mxu0 0
        %2002 = vmatpush1.bf16.msra.mxu0 0
        %2003 = vmatprep.subr.bf16.mxu0 0
        %2004 = vmatpush1.bf16.msra.mxu0 0
        %2005 = vmatprep.subr.bf16.mxu0 0
        %2006 = vmatpush1.bf16.msra.mxu0 0
        %2007 = vmatprep.subr.bf16.mxu0 0
        %2008 = vmatpush1.bf16.msra.mxu0 0
        %2009 = vmatprep.subr.bf16.mxu0 0
        %2010 = vmatpush1.bf16.msra.mxu0 0
        %2011 = vmatprep.subr.bf16.mxu0 0
        %2012 = vmatpush1.bf16.msra.mxu0 0
        %2013 = vmatprep.subr.bf16.mxu0 0
        %2014 = vmatpush1.bf16.msra.mxu0 0
        %2015 = vmatprep.mubr.bf16.mxu0 0
        %2016 = vmatmul.mubr.bf16.gmra.mrb[0].mxu0 %v1914
        %v2017 = vpop.f32.mrb[0].mxu0
        %v2018 = vadd.f32 %v1934, %v2017
        %v2019 = vpop.f32.mrb[0].mxu0
        %v2020 = vpop.f32.mrb[0].mxu0
        %v2021 = vpop.f32.mrb[0].mxu0
        %2022 = vdwg.mxu0
        %v2023 = vadd.f32 %v1846, %v2018
        %v2024 = vsel %vm530, %v2023, 0.0
        %2025 = vadd.xlane.f32.xlu0 %v2024
        %v2026 = vpop.xlane.xlu0 %2025
        %v2027 = vmul.f32 %v2026, %v1101
        %v2028 = vsub.f32 %v2023, %v2027
        %v2029 = vmul.f32 %v2028, %v2028
        %v2030 = vsel %vm530, %v2029, 0.0
        %2031 = vadd.xlane.f32.xlu0 %v2030
        %v2032 = vpop.xlane.xlu0 %2031
        %v2033 = vmul.f32 %v2032, %v1101
        %v2034 = vadd.f32 %v2033, 1e-05
        %v2035 = vrsqrt.pop %v2034
        %v2036 = vmul.f32 %v2028, %v2035
        %v2037 = vlaneseq
        %v2038 = vshrl.u32 %v2037, 7
        %v2039 = vsub.s32 7, %v2038
        %v2040 = vrot.slane %v505, %v2039
        %v2041 = vmul.f32 %v2036, %v2040
        %v2042 = vlaneseq
        %v2043 = vshrl.u32 %v2042, 7
        %v2044 = vsub.s32 0, %v2043
        %v2045 = vrot.slane %v506, %v2044
        %v2046 = vadd.f32 %v2041, %v2045
        %2047 = vst.msk [vmem:[%s501] sm:$0xff] %vm530, %v2046
        %s2048 = sand.u32 %s286, 1
        %s2049 = scalar_lea.sflag [#allocation4], %s2048
        %s2050 = sand.u32 %s286, 1
        %s2051 = smul.addr %s2050, 8
        %s2052 = scalar_lea.vmem [#allocation11], %s2051
        // Predicated region
        $region85: #{tpu_custom_call.1} parent=63 // pred_check
          %p2053 = pneg %p296
        $region86: #{tpu_custom_call.1} parent=63 // pred_check_branch
          %2055 = sbr.rel (%p2053) target = $region88
        $region87: #{tpu_custom_call.1} parent=63 // pred_region
          %s2057 = ssub.s32 128, 128
          %2058 = vsyncadd %s2049, %s2057
          %s2059 = smul.addr %s32, 128
          %s2060 = scalar_lea.hbm %s11, %s2059
          %s2062 = sshll.u32 %s2052, 4
          %s2063 = int_to_ptr.vmem [resolvable:$true] %s2062
          %2065 = dma.vmem_to_hbm [thread:$0]  %s2063, 128, %s2060, %s2049
        $region88: #{tpu_custom_call.1} parent=63 // pred_fallthru
          _
      $region64: #{tpu_custom_call.1} parent=5 // pred_fallthru
        _
      %p2066 = scmp.le.s32.totalorder 2, %s27
      // Predicated region
      $region89: #{tpu_custom_call.1} parent=5 // pred_check
        %p2067 = pneg %p2066
      $region90: #{tpu_custom_call.1} parent=5 // pred_check_branch
        %2069 = sbr.rel (%p2067) target = $region92
      $region91: #{tpu_custom_call.1} parent=5 // pred_region
        %s2070 = ssub.s32 %s27, 2
        // Predicated region
        $region93: #{tpu_custom_call.1} parent=91 // pred_check
          %p2071 = pneg %p302
        $region94: #{tpu_custom_call.1} parent=91 // pred_check_branch
          %2073 = sbr.rel (%p2071) target = $region96
        $region95: #{tpu_custom_call.1} parent=91 // pred_region
          %s2074 = sand.u32 %s287, 1
          %s2075 = scalar_lea.sflag [#allocation4], %s2074
          %s2076 = sand.u32 %s287, 1
          %s2077 = smul.addr %s2076, 8
          %s2078 = scalar_lea.vmem [#allocation11], %s2077
          %2079 = dma.done %s2075, 128
        $region96: #{tpu_custom_call.1} parent=91 // pred_fallthru
          _
      $region92: #{tpu_custom_call.1} parent=5 // pred_fallthru
        _
    $region6: #{tpu_custom_call.1} parent=1 // loop_footer
      %s31 = sadd.s32 1, %s27
    $region7: #{tpu_custom_call.1} parent=1 // loop_footer_branch
      %26 = sbr.rel target = $region3
    $region8: #{tpu_custom_call.1} parent=1 // loop_exit
      _
    %2080 = vsyncpa [#allocation3], 1
    %s2081 = scalar_lea.sflag [#allocation3], 1
    %2082 = vsyncpa %s2081, 1
    %2083 = vsyncpa [#allocation6], 1
    %s2084 = scalar_lea.sflag [#allocation6], 1
    %2085 = vsyncpa %s2084, 1
    %2086 = vsyncpa [#allocation9], 1
    %2087 = vsyncpa [#allocation4], 1
    %s2088 = scalar_lea.sflag [#allocation4], 1
    %2089 = vsyncpa %s2088, 1

</llo_original>
